<compile_context>
chip_gen: v6e
topology: v6e:2x2x1
jax: 0.10.0
libtpu: 0.0.40
codegen_flags: <defaults>
</compile_context>

<pallas_src>
import jax
import jax.numpy as jnp
from jax.experimental import pallas as pl
from jax.experimental.pallas import tpu as pltpu

# ---------------- problem sizes (small, synthetic) ----------------
B = 2                      # number of graphs
N_PER_GRAPH = 32           # points per graph (contiguous, equal-sized)
N = B * N_PER_GRAPH        # total points
HIDDEN = 32                # hidden_channels
K = 8                      # num_neighbors (k-NN, includes self like torch_cluster.knn)
CIN = 3                    # input point dimension
CIN_PAD = 8                # zero-padded input feature dim (layout friendliness)
OUT_PAD = 128              # lane-dense padded head output width (sliced to 3 outside)


# ---------------- fused per-graph Pallas kernel ----------------
def dgcnn_kernel(x_ref,
                 wa1_ref, w2t1_ref, b1_ref,
                 wa2_ref, w2t2_ref, b2_ref,
                 wa3_ref, w2t3_ref, b3_ref,
                 l1w_ref, l1b_ref, l2w_ref, l2b_ref,
                 out_ref):
    ng = x_ref.shape[0]                                                   # points in this graph
    colf = jax.lax.broadcasted_iota(jnp.int32, (ng, ng), 1).astype(jnp.float32)

    def edge_conv(xin, wa, w2t, b):
        cin = xin.shape[1]
        # Per-row k-NN key: ||x_j||^2 - 2<x_i,x_j> (row-constant ||x_i||^2 dropped; it
        # cannot change per-row ordering). Norm row vector via a tiny matmul, no transpose.
        g = jax.lax.dot_general(xin, xin, (((1,), (1,)), ((), ())),
                                preferred_element_type=jnp.float32)       # (Ng, Ng) = X X^T
        sq_row = jax.lax.dot_general(jnp.ones((1, cin), jnp.float32), xin * xin,
                                     (((1,), (1,)), ((), ())),
                                     preferred_element_type=jnp.float32)  # (1, Ng) ||x_j||^2
        d = sq_row - 2.0 * g                                              # self is row minimum

        # Linear([x_i, x_j - x_i]) = (W1 - W2) x_i + W2 x_j + b
        a = jnp.dot(xin, wa, preferred_element_type=jnp.float32) + b      # (Ng, H)
        y = jnp.dot(xin, w2t, preferred_element_type=jnp.float32)         # (Ng, H), ONCE

        # K-NN: one lane-reduce on the carried chain per iteration (retire all row minima
        # at once); exact lowest-index single-hot built off-chain for the gather.
        dcur = d
        onehots = []
        for _ in range(K):
            dmin = jnp.min(dcur, axis=1, keepdims=True)                   # (Ng, 1) -- on chain
            is_min = dcur <= dmin
            jmin = jnp.min(jnp.where(is_min, colf, jnp.float32(ng)),
                           axis=1, keepdims=True)                         # off-chain tie-break
            onehots.append((colf == jmin).astype(jnp.float32))            # exactly one 1 / row
            dcur = jnp.where(is_min, jnp.inf, dcur)                       # carried update
        # One batched gather matmul instead of K tiny dependent ones.
        stack = jnp.concatenate(onehots, axis=0)                          # (K*Ng, Ng)
        sel = jnp.dot(stack, y, preferred_element_type=jnp.float32)       # (K*Ng, H)
        cmax = sel[0:ng, :]
        for t in range(1, K):
            cmax = jnp.maximum(cmax, sel[t * ng:(t + 1) * ng, :])         # (Ng, H)
        # max_j ReLU(a_i + y_j) == ReLU(a_i + max_j y_j); the outer F.relu is then a no-op.
        return jnp.maximum(a + cmax, 0.0)

    h = edge_conv(x_ref[...], wa1_ref[...], w2t1_ref[...], b1_ref[...])
    h = edge_conv(h, wa2_ref[...], w2t2_ref[...], b2_ref[...])
    h = edge_conv(h, wa3_ref[...], w2t3_ref[...], b3_ref[...])

    # global_mean_pool over this graph, then lin1 / ReLU / lin2 (lane-padded output).
    pooled = jnp.dot(jnp.ones((1, ng), jnp.float32), h,
                     preferred_element_type=jnp.float32) * (1.0 / ng)     # (1, H)
    z = jnp.maximum(
        jnp.dot(pooled, l1w_ref[...], preferred_element_type=jnp.float32) + l1b_ref[...], 0.0)
    # TODO(synk): F.dropout(p=0.5) is identity in eval mode (training=False); not applied.
    res = jnp.dot(z, l2w_ref[...], preferred_element_type=jnp.float32) + l2b_ref[...]  # (1,128)
    out_ref[...] = jnp.broadcast_to(res.reshape(1, 1, OUT_PAD), out_ref.shape)


# ---------------- wrapper ----------------
def dgcnn_forward(x, prep):
    xp = jnp.pad(x, ((0, 0), (0, CIN_PAD - x.shape[1])))                  # (N, 8)
    out_pad = pl.pallas_call(
        dgcnn_kernel,
        out_shape=jax.ShapeDtypeStruct((B, 8, OUT_PAD), jnp.float32),
        grid=(B,),
        in_specs=[pl.BlockSpec((N_PER_GRAPH, CIN_PAD), lambda b: (b, 0))]   # per-graph rows
                 + [pl.BlockSpec(w.shape, lambda b: (0, 0)) for w in prep],  # resident weights
        out_specs=pl.BlockSpec((1, 8, OUT_PAD), lambda b: (b, 0, 0)),
        compiler_params=pltpu.CompilerParams(dimension_semantics=("parallel",)),
    )(xp, *prep)
    return out_pad[:, 0, :3]


# ---------------- parameter preparation (kernel-ready layouts, done once) ----------------
def prepare_params(params):
    def conv(w, bias, cin_pad):
        cin = w.shape[1] // 2
        w1, w2 = w[:, :cin], w[:, cin:]
        wa = (w1 - w2).T                                   # (Cin, H) acts on x_i
        w2t = w2.T                                         # (Cin, H) acts on x_j
        if cin_pad > cin:
            wa = jnp.pad(wa, ((0, cin_pad - cin), (0, 0)))
            w2t = jnp.pad(w2t, ((0, cin_pad - cin), (0, 0)))
        return wa, w2t, bias.reshape(1, -1)

    c1 = conv(*params["conv1"], CIN_PAD)
    c2 = conv(*params["conv2"], HIDDEN)
    c3 = conv(*params["conv3"], HIDDEN)
    l1w, l1b = params["lin1"]
    l2w, l2b = params["lin2"]
    l2wt = jnp.pad(l2w.T, ((0, 0), (0, OUT_PAD - l2w.shape[0])))       # (H, 128)
    l2bp = jnp.pad(l2b.reshape(1, -1), ((0, 0), (0, OUT_PAD - l2b.shape[0])))
    return (*c1, *c2, *c3, l1w.T, l1b.reshape(1, -1), l2wt, l2bp)


# ---------------- deterministic parameter init (matches nn.Linear shapes) ----------------
def init_params(key, hidden):
    def lin(k, fan_in, fan_out):
        kw, kb = jax.random.split(k)
        s = 1.0 / jnp.sqrt(jnp.float32(fan_in))
        w = jax.random.uniform(kw, (fan_out, fan_in), jnp.float32, -s, s)
        b = jax.random.uniform(kb, (fan_out,), jnp.float32, -s, s)
        return w, b

    k = jax.random.split(key, 5)
    return {
        "conv1": lin(k[0], CIN * 2, hidden),
        "conv2": lin(k[1], hidden * 2, hidden),
        "conv3": lin(k[2], hidden * 2, hidden),
        "lin1": lin(k[3], hidden, hidden),
        "lin2": lin(k[4], hidden, 3),
    }


# ---------------- pure-JAX reference (for correctness check) ----------------
def dgcnn_reference(x, batch, params):
    with jax.default_matmul_precision("highest"):
        def edge_conv(xin, w, b):
            sq = jnp.sum(xin * xin, axis=1)
            d = sq[:, None] + sq[None, :] - 2.0 * jnp.matmul(xin, xin.T)
            d = jnp.where(batch[:, None] == batch[None, :], d, jnp.inf)
            _, idx = jax.lax.top_k(-d, K)                         # k smallest (includes self)
            xi = xin[:, None, :]
            xj = xin[idx]                                         # (N, K, C)
            feat = jnp.concatenate([jnp.broadcast_to(xi, xj.shape), xj - xi], axis=-1)
            msg = jnp.maximum(jnp.matmul(feat, w.T) + b, 0.0)
            return jnp.maximum(jnp.max(msg, axis=1), 0.0)

        h = edge_conv(x, *params["conv1"])
        h = edge_conv(h, *params["conv2"])
        h = edge_conv(h, *params["conv3"])
        oneh = (batch[None, :] == jnp.arange(B, dtype=batch.dtype)[:, None]).astype(jnp.float32)
        pool = oneh / jnp.maximum(oneh.sum(axis=1, keepdims=True), 1.0)
        p = jnp.matmul(pool, h)
        p = jnp.maximum(jnp.matmul(p, params["lin1"][0].T) + params["lin1"][1], 0.0)
        return jnp.matmul(p, params["lin2"][0].T) + params["lin2"][1]


if __name__ == "__main__":
    key = jax.random.PRNGKey(0)
    kx, kp = jax.random.split(key)
    x = jax.random.normal(kx, (N, CIN), dtype=jnp.float32)           # point cloud positions
    batch = jnp.repeat(jnp.arange(B, dtype=jnp.int32), N_PER_GRAPH)  # contiguous equal graphs
    params = init_params(kp, HIDDEN)
    prep = prepare_params(params)

    out = jax.block_until_ready(jax.jit(dgcnn_forward)(x, prep))
    assert out.shape == (B, 3) and out.dtype == jnp.float32
    assert bool(jnp.all(jnp.isfinite(out)))

    ref = jax.block_until_ready(jax.jit(dgcnn_reference)(x, batch, params))
    assert bool(jnp.allclose(out, ref, rtol=2e-3, atol=2e-3)), (out, ref)

    print("KERNEL_OK")
</pallas_src>

<mosaic_0001>
module attributes {stable_mosaic.version = 11 : i64} {
  func.func @dgcnn_kernel(%arg0: i32, %arg1: memref<32x8xf32, #tpu.memory_space<vmem>>, %arg2: memref<8x32xf32, #tpu.memory_space<vmem>>, %arg3: memref<8x32xf32, #tpu.memory_space<vmem>>, %arg4: memref<1x32xf32, #tpu.memory_space<vmem>>, %arg5: memref<32x32xf32, #tpu.memory_space<vmem>>, %arg6: memref<32x32xf32, #tpu.memory_space<vmem>>, %arg7: memref<1x32xf32, #tpu.memory_space<vmem>>, %arg8: memref<32x32xf32, #tpu.memory_space<vmem>>, %arg9: memref<32x32xf32, #tpu.memory_space<vmem>>, %arg10: memref<1x32xf32, #tpu.memory_space<vmem>>, %arg11: memref<32x32xf32, #tpu.memory_space<vmem>>, %arg12: memref<1x32xf32, #tpu.memory_space<vmem>>, %arg13: memref<32x128xf32, #tpu.memory_space<vmem>>, %arg14: memref<1x128xf32, #tpu.memory_space<vmem>>, %arg15: memref<1x8x128xf32, #tpu.memory_space<vmem>>) attributes {dimension_semantics = [#tpu.dimension_semantics<parallel>], iteration_bounds = array<i64: 2>, scalar_prefetch = 0 : i64, scratch_operands = 0 : i64, tpu.core_type = #tpu.core_type<tc>, window_params = [{transform_indices = @transform_0, window_bounds = array<i64: 32, 8>}, {pipeline_mode = #tpu.pipeline_mode<synchronous>, transform_indices = @transform_1, window_bounds = array<i64: 8, 32>}, {pipeline_mode = #tpu.pipeline_mode<synchronous>, transform_indices = @transform_2, window_bounds = array<i64: 8, 32>}, {pipeline_mode = #tpu.pipeline_mode<synchronous>, transform_indices = @transform_3, window_bounds = array<i64: 1, 32>}, {pipeline_mode = #tpu.pipeline_mode<synchronous>, transform_indices = @transform_4, window_bounds = array<i64: 32, 32>}, {pipeline_mode = #tpu.pipeline_mode<synchronous>, transform_indices = @transform_5, window_bounds = array<i64: 32, 32>}, {pipeline_mode = #tpu.pipeline_mode<synchronous>, transform_indices = @transform_6, window_bounds = array<i64: 1, 32>}, {pipeline_mode = #tpu.pipeline_mode<synchronous>, transform_indices = @transform_7, window_bounds = array<i64: 32, 32>}, {pipeline_mode = #tpu.pipeline_mode<synchronous>, transform_indices = @transform_8, window_bounds = array<i64: 32, 32>}, {pipeline_mode = #tpu.pipeline_mode<synchronous>, transform_indices = @transform_9, window_bounds = array<i64: 1, 32>}, {pipeline_mode = #tpu.pipeline_mode<synchronous>, transform_indices = @transform_10, window_bounds = array<i64: 32, 32>}, {pipeline_mode = #tpu.pipeline_mode<synchronous>, transform_indices = @transform_11, window_bounds = array<i64: 1, 32>}, {pipeline_mode = #tpu.pipeline_mode<synchronous>, transform_indices = @transform_12, window_bounds = array<i64: 32, 128>}, {pipeline_mode = #tpu.pipeline_mode<synchronous>, transform_indices = @transform_13, window_bounds = array<i64: 1, 128>}, {transform_indices = @transform_14, window_bounds = array<i64: 1, 8, 128>}]} {
    %0 = tpu.iota {dimensions = array<i32: 1>} : vector<32x32xi32>
    %1 = arith.sitofp %0 : vector<32x32xi32> to vector<32x32xf32>
    %c0 = arith.constant 0 : index
    %c0_0 = arith.constant 0 : index
    %2 = vector.load %arg1[%c0, %c0_0] : memref<32x8xf32, #tpu.memory_space<vmem>>, vector<32x8xf32>
    %c0_1 = arith.constant 0 : index
    %c0_2 = arith.constant 0 : index
    %3 = vector.load %arg2[%c0_1, %c0_2] : memref<8x32xf32, #tpu.memory_space<vmem>>, vector<8x32xf32>
    %c0_3 = arith.constant 0 : index
    %c0_4 = arith.constant 0 : index
    %4 = vector.load %arg3[%c0_3, %c0_4] : memref<8x32xf32, #tpu.memory_space<vmem>>, vector<8x32xf32>
    %c0_5 = arith.constant 0 : index
    %c0_6 = arith.constant 0 : index
    %5 = vector.load %arg4[%c0_5, %c0_6] : memref<1x32xf32, #tpu.memory_space<vmem>>, vector<1x32xf32>
    %cst = arith.constant dense<0.000000e+00> : vector<32x32xf32>
    %6 = tpu.matmul %2, %2, %cst {dimension_numbers = #tpu.dot_dimension_numbers<[1], [1], [0], [0], [0, 0, 1, 0], [], []>} : vector<32x8xf32>, vector<32x8xf32>, vector<32x32xf32> -> vector<32x32xf32>
    %cst_7 = arith.constant 1.000000e+00 : f32
    %7 = vector.broadcast %cst_7 : f32 to vector<1x8xf32>
    %8 = arith.mulf %2, %2 : vector<32x8xf32>
    %cst_8 = arith.constant dense<0.000000e+00> : vector<1x32xf32>
    %9 = tpu.matmul %7, %8, %cst_8 {dimension_numbers = #tpu.dot_dimension_numbers<[1], [1], [0], [0], [0, 0, 1, 0], [], []>} : vector<1x8xf32>, vector<32x8xf32>, vector<1x32xf32> -> vector<1x32xf32>
    %cst_9 = arith.constant 2.000000e+00 : f32
    %10 = vector.broadcast %cst_9 : f32 to vector<32x32xf32>
    %11 = arith.mulf %10, %6 : vector<32x32xf32>
    %12 = vector.broadcast %9 : vector<1x32xf32> to vector<32x32xf32>
    %13 = arith.subf %12, %11 : vector<32x32xf32>
    %cst_10 = arith.constant dense<0.000000e+00> : vector<32x32xf32>
    %14 = tpu.matmul %2, %3, %cst_10 {dimension_numbers = #tpu.dot_dimension_numbers<[1], [0], [0], [1], [0, 0, 1, 1], [], []>} : vector<32x8xf32>, vector<8x32xf32>, vector<32x32xf32> -> vector<32x32xf32>
    %15 = vector.broadcast %5 : vector<1x32xf32> to vector<32x32xf32>
    %16 = arith.addf %14, %15 : vector<32x32xf32>
    %cst_11 = arith.constant dense<0.000000e+00> : vector<32x32xf32>
    %17 = tpu.matmul %2, %4, %cst_11 {dimension_numbers = #tpu.dot_dimension_numbers<[1], [0], [0], [1], [0, 0, 1, 1], [], []>} : vector<32x8xf32>, vector<8x32xf32>, vector<32x32xf32> -> vector<32x32xf32>
    %cst_12 = arith.constant dense<0x7F800000> : vector<32xf32>
    %18 = vector.multi_reduction <minimumf>, %13, %cst_12 [1] : vector<32x32xf32> to vector<32xf32>
    %19 = vector.shape_cast %18 : vector<32xf32> to vector<32x1xf32>
    %20 = vector.broadcast %19 : vector<32x1xf32> to vector<32x32xf32>
    %21 = arith.cmpf ole, %13, %20 : vector<32x32xf32>
    %cst_13 = arith.constant 3.200000e+01 : f32
    %22 = vector.broadcast %cst_13 : f32 to vector<32x32xf32>
    %23 = arith.select %21, %1, %22 : vector<32x32xi1>, vector<32x32xf32>
    %cst_14 = arith.constant dense<0x7F800000> : vector<32xf32>
    %24 = vector.multi_reduction <minimumf>, %23, %cst_14 [1] : vector<32x32xf32> to vector<32xf32>
    %25 = vector.shape_cast %24 : vector<32xf32> to vector<32x1xf32>
    %26 = vector.broadcast %25 : vector<32x1xf32> to vector<32x32xf32>
    %27 = arith.cmpf oeq, %1, %26 : vector<32x32xf32>
    %28 = arith.extui %27 : vector<32x32xi1> to vector<32x32xi32>
    %29 = arith.sitofp %28 : vector<32x32xi32> to vector<32x32xf32>
    %cst_15 = arith.constant 0x7F800000 : f32
    %30 = vector.broadcast %cst_15 : f32 to vector<32x32xf32>
    %31 = arith.select %21, %30, %13 : vector<32x32xi1>, vector<32x32xf32>
    %cst_16 = arith.constant dense<0x7F800000> : vector<32xf32>
    %32 = vector.multi_reduction <minimumf>, %31, %cst_16 [1] : vector<32x32xf32> to vector<32xf32>
    %33 = vector.shape_cast %32 : vector<32xf32> to vector<32x1xf32>
    %34 = vector.broadcast %33 : vector<32x1xf32> to vector<32x32xf32>
    %35 = arith.cmpf ole, %31, %34 : vector<32x32xf32>
    %cst_17 = arith.constant 3.200000e+01 : f32
    %36 = vector.broadcast %cst_17 : f32 to vector<32x32xf32>
    %37 = arith.select %35, %1, %36 : vector<32x32xi1>, vector<32x32xf32>
    %cst_18 = arith.constant dense<0x7F800000> : vector<32xf32>
    %38 = vector.multi_reduction <minimumf>, %37, %cst_18 [1] : vector<32x32xf32> to vector<32xf32>
    %39 = vector.shape_cast %38 : vector<32xf32> to vector<32x1xf32>
    %40 = vector.broadcast %39 : vector<32x1xf32> to vector<32x32xf32>
    %41 = arith.cmpf oeq, %1, %40 : vector<32x32xf32>
    %42 = arith.extui %41 : vector<32x32xi1> to vector<32x32xi32>
    %43 = arith.sitofp %42 : vector<32x32xi32> to vector<32x32xf32>
    %cst_19 = arith.constant 0x7F800000 : f32
    %44 = vector.broadcast %cst_19 : f32 to vector<32x32xf32>
    %45 = arith.select %35, %44, %31 : vector<32x32xi1>, vector<32x32xf32>
    %cst_20 = arith.constant dense<0x7F800000> : vector<32xf32>
    %46 = vector.multi_reduction <minimumf>, %45, %cst_20 [1] : vector<32x32xf32> to vector<32xf32>
    %47 = vector.shape_cast %46 : vector<32xf32> to vector<32x1xf32>
    %48 = vector.broadcast %47 : vector<32x1xf32> to vector<32x32xf32>
    %49 = arith.cmpf ole, %45, %48 : vector<32x32xf32>
    %cst_21 = arith.constant 3.200000e+01 : f32
    %50 = vector.broadcast %cst_21 : f32 to vector<32x32xf32>
    %51 = arith.select %49, %1, %50 : vector<32x32xi1>, vector<32x32xf32>
    %cst_22 = arith.constant dense<0x7F800000> : vector<32xf32>
    %52 = vector.multi_reduction <minimumf>, %51, %cst_22 [1] : vector<32x32xf32> to vector<32xf32>
    %53 = vector.shape_cast %52 : vector<32xf32> to vector<32x1xf32>
    %54 = vector.broadcast %53 : vector<32x1xf32> to vector<32x32xf32>
    %55 = arith.cmpf oeq, %1, %54 : vector<32x32xf32>
    %56 = arith.extui %55 : vector<32x32xi1> to vector<32x32xi32>
    %57 = arith.sitofp %56 : vector<32x32xi32> to vector<32x32xf32>
    %cst_23 = arith.constant 0x7F800000 : f32
    %58 = vector.broadcast %cst_23 : f32 to vector<32x32xf32>
    %59 = arith.select %49, %58, %45 : vector<32x32xi1>, vector<32x32xf32>
    %cst_24 = arith.constant dense<0x7F800000> : vector<32xf32>
    %60 = vector.multi_reduction <minimumf>, %59, %cst_24 [1] : vector<32x32xf32> to vector<32xf32>
    %61 = vector.shape_cast %60 : vector<32xf32> to vector<32x1xf32>
    %62 = vector.broadcast %61 : vector<32x1xf32> to vector<32x32xf32>
    %63 = arith.cmpf ole, %59, %62 : vector<32x32xf32>
    %cst_25 = arith.constant 3.200000e+01 : f32
    %64 = vector.broadcast %cst_25 : f32 to vector<32x32xf32>
    %65 = arith.select %63, %1, %64 : vector<32x32xi1>, vector<32x32xf32>
    %cst_26 = arith.constant dense<0x7F800000> : vector<32xf32>
    %66 = vector.multi_reduction <minimumf>, %65, %cst_26 [1] : vector<32x32xf32> to vector<32xf32>
    %67 = vector.shape_cast %66 : vector<32xf32> to vector<32x1xf32>
    %68 = vector.broadcast %67 : vector<32x1xf32> to vector<32x32xf32>
    %69 = arith.cmpf oeq, %1, %68 : vector<32x32xf32>
    %70 = arith.extui %69 : vector<32x32xi1> to vector<32x32xi32>
    %71 = arith.sitofp %70 : vector<32x32xi32> to vector<32x32xf32>
    %cst_27 = arith.constant 0x7F800000 : f32
    %72 = vector.broadcast %cst_27 : f32 to vector<32x32xf32>
    %73 = arith.select %63, %72, %59 : vector<32x32xi1>, vector<32x32xf32>
    %cst_28 = arith.constant dense<0x7F800000> : vector<32xf32>
    %74 = vector.multi_reduction <minimumf>, %73, %cst_28 [1] : vector<32x32xf32> to vector<32xf32>
    %75 = vector.shape_cast %74 : vector<32xf32> to vector<32x1xf32>
    %76 = vector.broadcast %75 : vector<32x1xf32> to vector<32x32xf32>
    %77 = arith.cmpf ole, %73, %76 : vector<32x32xf32>
    %cst_29 = arith.constant 3.200000e+01 : f32
    %78 = vector.broadcast %cst_29 : f32 to vector<32x32xf32>
    %79 = arith.select %77, %1, %78 : vector<32x32xi1>, vector<32x32xf32>
    %cst_30 = arith.constant dense<0x7F800000> : vector<32xf32>
    %80 = vector.multi_reduction <minimumf>, %79, %cst_30 [1] : vector<32x32xf32> to vector<32xf32>
    %81 = vector.shape_cast %80 : vector<32xf32> to vector<32x1xf32>
    %82 = vector.broadcast %81 : vector<32x1xf32> to vector<32x32xf32>
    %83 = arith.cmpf oeq, %1, %82 : vector<32x32xf32>
    %84 = arith.extui %83 : vector<32x32xi1> to vector<32x32xi32>
    %85 = arith.sitofp %84 : vector<32x32xi32> to vector<32x32xf32>
    %cst_31 = arith.constant 0x7F800000 : f32
    %86 = vector.broadcast %cst_31 : f32 to vector<32x32xf32>
    %87 = arith.select %77, %86, %73 : vector<32x32xi1>, vector<32x32xf32>
    %cst_32 = arith.constant dense<0x7F800000> : vector<32xf32>
    %88 = vector.multi_reduction <minimumf>, %87, %cst_32 [1] : vector<32x32xf32> to vector<32xf32>
    %89 = vector.shape_cast %88 : vector<32xf32> to vector<32x1xf32>
    %90 = vector.broadcast %89 : vector<32x1xf32> to vector<32x32xf32>
    %91 = arith.cmpf ole, %87, %90 : vector<32x32xf32>
    %cst_33 = arith.constant 3.200000e+01 : f32
    %92 = vector.broadcast %cst_33 : f32 to vector<32x32xf32>
    %93 = arith.select %91, %1, %92 : vector<32x32xi1>, vector<32x32xf32>
    %cst_34 = arith.constant dense<0x7F800000> : vector<32xf32>
    %94 = vector.multi_reduction <minimumf>, %93, %cst_34 [1] : vector<32x32xf32> to vector<32xf32>
    %95 = vector.shape_cast %94 : vector<32xf32> to vector<32x1xf32>
    %96 = vector.broadcast %95 : vector<32x1xf32> to vector<32x32xf32>
    %97 = arith.cmpf oeq, %1, %96 : vector<32x32xf32>
    %98 = arith.extui %97 : vector<32x32xi1> to vector<32x32xi32>
    %99 = arith.sitofp %98 : vector<32x32xi32> to vector<32x32xf32>
    %cst_35 = arith.constant 0x7F800000 : f32
    %100 = vector.broadcast %cst_35 : f32 to vector<32x32xf32>
    %101 = arith.select %91, %100, %87 : vector<32x32xi1>, vector<32x32xf32>
    %cst_36 = arith.constant dense<0x7F800000> : vector<32xf32>
    %102 = vector.multi_reduction <minimumf>, %101, %cst_36 [1] : vector<32x32xf32> to vector<32xf32>
    %103 = vector.shape_cast %102 : vector<32xf32> to vector<32x1xf32>
    %104 = vector.broadcast %103 : vector<32x1xf32> to vector<32x32xf32>
    %105 = arith.cmpf ole, %101, %104 : vector<32x32xf32>
    %cst_37 = arith.constant 3.200000e+01 : f32
    %106 = vector.broadcast %cst_37 : f32 to vector<32x32xf32>
    %107 = arith.select %105, %1, %106 : vector<32x32xi1>, vector<32x32xf32>
    %cst_38 = arith.constant dense<0x7F800000> : vector<32xf32>
    %108 = vector.multi_reduction <minimumf>, %107, %cst_38 [1] : vector<32x32xf32> to vector<32xf32>
    %109 = vector.shape_cast %108 : vector<32xf32> to vector<32x1xf32>
    %110 = vector.broadcast %109 : vector<32x1xf32> to vector<32x32xf32>
    %111 = arith.cmpf oeq, %1, %110 : vector<32x32xf32>
    %112 = arith.extui %111 : vector<32x32xi1> to vector<32x32xi32>
    %113 = arith.sitofp %112 : vector<32x32xi32> to vector<32x32xf32>
    %cst_39 = arith.constant 0x7F800000 : f32
    %114 = vector.broadcast %cst_39 : f32 to vector<32x32xf32>
    %115 = arith.select %105, %114, %101 : vector<32x32xi1>, vector<32x32xf32>
    %cst_40 = arith.constant dense<0x7F800000> : vector<32xf32>
    %116 = vector.multi_reduction <minimumf>, %115, %cst_40 [1] : vector<32x32xf32> to vector<32xf32>
    %117 = vector.shape_cast %116 : vector<32xf32> to vector<32x1xf32>
    %118 = vector.broadcast %117 : vector<32x1xf32> to vector<32x32xf32>
    %119 = arith.cmpf ole, %115, %118 : vector<32x32xf32>
    %cst_41 = arith.constant 3.200000e+01 : f32
    %120 = vector.broadcast %cst_41 : f32 to vector<32x32xf32>
    %121 = arith.select %119, %1, %120 : vector<32x32xi1>, vector<32x32xf32>
    %cst_42 = arith.constant dense<0x7F800000> : vector<32xf32>
    %122 = vector.multi_reduction <minimumf>, %121, %cst_42 [1] : vector<32x32xf32> to vector<32xf32>
    %123 = vector.shape_cast %122 : vector<32xf32> to vector<32x1xf32>
    %124 = vector.broadcast %123 : vector<32x1xf32> to vector<32x32xf32>
    %125 = arith.cmpf oeq, %1, %124 : vector<32x32xf32>
    %126 = arith.extui %125 : vector<32x32xi1> to vector<32x32xi32>
    %127 = arith.sitofp %126 : vector<32x32xi32> to vector<32x32xf32>
    %128 = tpu.concatenate %29, %43, %57, %71, %85, %99, %113, %127 in 0 : vector<32x32xf32>, vector<32x32xf32>, vector<32x32xf32>, vector<32x32xf32>, vector<32x32xf32>, vector<32x32xf32>, vector<32x32xf32>, vector<32x32xf32> -> vector<256x32xf32>
    %cst_43 = arith.constant dense<0.000000e+00> : vector<256x32xf32>
    %129 = tpu.matmul %128, %17, %cst_43 {dimension_numbers = #tpu.dot_dimension_numbers<[1], [0], [0], [1], [0, 0, 1, 1], [], []>} : vector<256x32xf32>, vector<32x32xf32>, vector<256x32xf32> -> vector<256x32xf32>
    %130 = vector.extract_strided_slice %129 {offsets = [0, 0], sizes = [32, 32], strides = [1, 1]} : vector<256x32xf32> to vector<32x32xf32>
    %131 = vector.extract_strided_slice %129 {offsets = [32, 0], sizes = [32, 32], strides = [1, 1]} : vector<256x32xf32> to vector<32x32xf32>
    %132 = arith.maximumf %130, %131 : vector<32x32xf32>
    %133 = vector.extract_strided_slice %129 {offsets = [64, 0], sizes = [32, 32], strides = [1, 1]} : vector<256x32xf32> to vector<32x32xf32>
    %134 = arith.maximumf %132, %133 : vector<32x32xf32>
    %135 = vector.extract_strided_slice %129 {offsets = [96, 0], sizes = [32, 32], strides = [1, 1]} : vector<256x32xf32> to vector<32x32xf32>
    %136 = arith.maximumf %134, %135 : vector<32x32xf32>
    %137 = vector.extract_strided_slice %129 {offsets = [128, 0], sizes = [32, 32], strides = [1, 1]} : vector<256x32xf32> to vector<32x32xf32>
    %138 = arith.maximumf %136, %137 : vector<32x32xf32>
    %139 = vector.extract_strided_slice %129 {offsets = [160, 0], sizes = [32, 32], strides = [1, 1]} : vector<256x32xf32> to vector<32x32xf32>
    %140 = arith.maximumf %138, %139 : vector<32x32xf32>
    %141 = vector.extract_strided_slice %129 {offsets = [192, 0], sizes = [32, 32], strides = [1, 1]} : vector<256x32xf32> to vector<32x32xf32>
    %142 = arith.maximumf %140, %141 : vector<32x32xf32>
    %143 = vector.extract_strided_slice %129 {offsets = [224, 0], sizes = [32, 32], strides = [1, 1]} : vector<256x32xf32> to vector<32x32xf32>
    %144 = arith.maximumf %142, %143 : vector<32x32xf32>
    %145 = arith.addf %16, %144 : vector<32x32xf32>
    %cst_44 = arith.constant 0.000000e+00 : f32
    %146 = vector.broadcast %cst_44 : f32 to vector<32x32xf32>
    %147 = arith.maximumf %145, %146 : vector<32x32xf32>
    %c0_45 = arith.constant 0 : index
    %c0_46 = arith.constant 0 : index
    %148 = vector.load %arg5[%c0_45, %c0_46] : memref<32x32xf32, #tpu.memory_space<vmem>>, vector<32x32xf32>
    %c0_47 = arith.constant 0 : index
    %c0_48 = arith.constant 0 : index
    %149 = vector.load %arg6[%c0_47, %c0_48] : memref<32x32xf32, #tpu.memory_space<vmem>>, vector<32x32xf32>
    %c0_49 = arith.constant 0 : index
    %c0_50 = arith.constant 0 : index
    %150 = vector.load %arg7[%c0_49, %c0_50] : memref<1x32xf32, #tpu.memory_space<vmem>>, vector<1x32xf32>
    %cst_51 = arith.constant dense<0.000000e+00> : vector<32x32xf32>
    %151 = tpu.matmul %147, %147, %cst_51 {dimension_numbers = #tpu.dot_dimension_numbers<[1], [1], [0], [0], [0, 0, 1, 0], [], []>} : vector<32x32xf32>, vector<32x32xf32>, vector<32x32xf32> -> vector<32x32xf32>
    %cst_52 = arith.constant 1.000000e+00 : f32
    %152 = vector.broadcast %cst_52 : f32 to vector<1x32xf32>
    %153 = arith.mulf %147, %147 : vector<32x32xf32>
    %cst_53 = arith.constant dense<0.000000e+00> : vector<1x32xf32>
    %154 = tpu.matmul %152, %153, %cst_53 {dimension_numbers = #tpu.dot_dimension_numbers<[1], [1], [0], [0], [0, 0, 1, 0], [], []>} : vector<1x32xf32>, vector<32x32xf32>, vector<1x32xf32> -> vector<1x32xf32>
    %cst_54 = arith.constant 2.000000e+00 : f32
    %155 = vector.broadcast %cst_54 : f32 to vector<32x32xf32>
    %156 = arith.mulf %155, %151 : vector<32x32xf32>
    %157 = vector.broadcast %154 : vector<1x32xf32> to vector<32x32xf32>
    %158 = arith.subf %157, %156 : vector<32x32xf32>
    %cst_55 = arith.constant dense<0.000000e+00> : vector<32x32xf32>
    %159 = tpu.matmul %147, %148, %cst_55 {dimension_numbers = #tpu.dot_dimension_numbers<[1], [0], [0], [1], [0, 0, 1, 1], [], []>} : vector<32x32xf32>, vector<32x32xf32>, vector<32x32xf32> -> vector<32x32xf32>
    %160 = vector.broadcast %150 : vector<1x32xf32> to vector<32x32xf32>
    %161 = arith.addf %159, %160 : vector<32x32xf32>
    %cst_56 = arith.constant dense<0.000000e+00> : vector<32x32xf32>
    %162 = tpu.matmul %147, %149, %cst_56 {dimension_numbers = #tpu.dot_dimension_numbers<[1], [0], [0], [1], [0, 0, 1, 1], [], []>} : vector<32x32xf32>, vector<32x32xf32>, vector<32x32xf32> -> vector<32x32xf32>
    %cst_57 = arith.constant dense<0x7F800000> : vector<32xf32>
    %163 = vector.multi_reduction <minimumf>, %158, %cst_57 [1] : vector<32x32xf32> to vector<32xf32>
    %164 = vector.shape_cast %163 : vector<32xf32> to vector<32x1xf32>
    %165 = vector.broadcast %164 : vector<32x1xf32> to vector<32x32xf32>
    %166 = arith.cmpf ole, %158, %165 : vector<32x32xf32>
    %cst_58 = arith.constant 3.200000e+01 : f32
    %167 = vector.broadcast %cst_58 : f32 to vector<32x32xf32>
    %168 = arith.select %166, %1, %167 : vector<32x32xi1>, vector<32x32xf32>
    %cst_59 = arith.constant dense<0x7F800000> : vector<32xf32>
    %169 = vector.multi_reduction <minimumf>, %168, %cst_59 [1] : vector<32x32xf32> to vector<32xf32>
    %170 = vector.shape_cast %169 : vector<32xf32> to vector<32x1xf32>
    %171 = vector.broadcast %170 : vector<32x1xf32> to vector<32x32xf32>
    %172 = arith.cmpf oeq, %1, %171 : vector<32x32xf32>
    %173 = arith.extui %172 : vector<32x32xi1> to vector<32x32xi32>
    %174 = arith.sitofp %173 : vector<32x32xi32> to vector<32x32xf32>
    %cst_60 = arith.constant 0x7F800000 : f32
    %175 = vector.broadcast %cst_60 : f32 to vector<32x32xf32>
    %176 = arith.select %166, %175, %158 : vector<32x32xi1>, vector<32x32xf32>
    %cst_61 = arith.constant dense<0x7F800000> : vector<32xf32>
    %177 = vector.multi_reduction <minimumf>, %176, %cst_61 [1] : vector<32x32xf32> to vector<32xf32>
    %178 = vector.shape_cast %177 : vector<32xf32> to vector<32x1xf32>
    %179 = vector.broadcast %178 : vector<32x1xf32> to vector<32x32xf32>
    %180 = arith.cmpf ole, %176, %179 : vector<32x32xf32>
    %cst_62 = arith.constant 3.200000e+01 : f32
    %181 = vector.broadcast %cst_62 : f32 to vector<32x32xf32>
    %182 = arith.select %180, %1, %181 : vector<32x32xi1>, vector<32x32xf32>
    %cst_63 = arith.constant dense<0x7F800000> : vector<32xf32>
    %183 = vector.multi_reduction <minimumf>, %182, %cst_63 [1] : vector<32x32xf32> to vector<32xf32>
    %184 = vector.shape_cast %183 : vector<32xf32> to vector<32x1xf32>
    %185 = vector.broadcast %184 : vector<32x1xf32> to vector<32x32xf32>
    %186 = arith.cmpf oeq, %1, %185 : vector<32x32xf32>
    %187 = arith.extui %186 : vector<32x32xi1> to vector<32x32xi32>
    %188 = arith.sitofp %187 : vector<32x32xi32> to vector<32x32xf32>
    %cst_64 = arith.constant 0x7F800000 : f32
    %189 = vector.broadcast %cst_64 : f32 to vector<32x32xf32>
    %190 = arith.select %180, %189, %176 : vector<32x32xi1>, vector<32x32xf32>
    %cst_65 = arith.constant dense<0x7F800000> : vector<32xf32>
    %191 = vector.multi_reduction <minimumf>, %190, %cst_65 [1] : vector<32x32xf32> to vector<32xf32>
    %192 = vector.shape_cast %191 : vector<32xf32> to vector<32x1xf32>
    %193 = vector.broadcast %192 : vector<32x1xf32> to vector<32x32xf32>
    %194 = arith.cmpf ole, %190, %193 : vector<32x32xf32>
    %cst_66 = arith.constant 3.200000e+01 : f32
    %195 = vector.broadcast %cst_66 : f32 to vector<32x32xf32>
    %196 = arith.select %194, %1, %195 : vector<32x32xi1>, vector<32x32xf32>
    %cst_67 = arith.constant dense<0x7F800000> : vector<32xf32>
    %197 = vector.multi_reduction <minimumf>, %196, %cst_67 [1] : vector<32x32xf32> to vector<32xf32>
    %198 = vector.shape_cast %197 : vector<32xf32> to vector<32x1xf32>
    %199 = vector.broadcast %198 : vector<32x1xf32> to vector<32x32xf32>
    %200 = arith.cmpf oeq, %1, %199 : vector<32x32xf32>
    %201 = arith.extui %200 : vector<32x32xi1> to vector<32x32xi32>
    %202 = arith.sitofp %201 : vector<32x32xi32> to vector<32x32xf32>
    %cst_68 = arith.constant 0x7F800000 : f32
    %203 = vector.broadcast %cst_68 : f32 to vector<32x32xf32>
    %204 = arith.select %194, %203, %190 : vector<32x32xi1>, vector<32x32xf32>
    %cst_69 = arith.constant dense<0x7F800000> : vector<32xf32>
    %205 = vector.multi_reduction <minimumf>, %204, %cst_69 [1] : vector<32x32xf32> to vector<32xf32>
    %206 = vector.shape_cast %205 : vector<32xf32> to vector<32x1xf32>
    %207 = vector.broadcast %206 : vector<32x1xf32> to vector<32x32xf32>
    %208 = arith.cmpf ole, %204, %207 : vector<32x32xf32>
    %cst_70 = arith.constant 3.200000e+01 : f32
    %209 = vector.broadcast %cst_70 : f32 to vector<32x32xf32>
    %210 = arith.select %208, %1, %209 : vector<32x32xi1>, vector<32x32xf32>
    %cst_71 = arith.constant dense<0x7F800000> : vector<32xf32>
    %211 = vector.multi_reduction <minimumf>, %210, %cst_71 [1] : vector<32x32xf32> to vector<32xf32>
    %212 = vector.shape_cast %211 : vector<32xf32> to vector<32x1xf32>
    %213 = vector.broadcast %212 : vector<32x1xf32> to vector<32x32xf32>
    %214 = arith.cmpf oeq, %1, %213 : vector<32x32xf32>
    %215 = arith.extui %214 : vector<32x32xi1> to vector<32x32xi32>
    %216 = arith.sitofp %215 : vector<32x32xi32> to vector<32x32xf32>
    %cst_72 = arith.constant 0x7F800000 : f32
    %217 = vector.broadcast %cst_72 : f32 to vector<32x32xf32>
    %218 = arith.select %208, %217, %204 : vector<32x32xi1>, vector<32x32xf32>
    %cst_73 = arith.constant dense<0x7F800000> : vector<32xf32>
    %219 = vector.multi_reduction <minimumf>, %218, %cst_73 [1] : vector<32x32xf32> to vector<32xf32>
    %220 = vector.shape_cast %219 : vector<32xf32> to vector<32x1xf32>
    %221 = vector.broadcast %220 : vector<32x1xf32> to vector<32x32xf32>
    %222 = arith.cmpf ole, %218, %221 : vector<32x32xf32>
    %cst_74 = arith.constant 3.200000e+01 : f32
    %223 = vector.broadcast %cst_74 : f32 to vector<32x32xf32>
    %224 = arith.select %222, %1, %223 : vector<32x32xi1>, vector<32x32xf32>
    %cst_75 = arith.constant dense<0x7F800000> : vector<32xf32>
    %225 = vector.multi_reduction <minimumf>, %224, %cst_75 [1] : vector<32x32xf32> to vector<32xf32>
    %226 = vector.shape_cast %225 : vector<32xf32> to vector<32x1xf32>
    %227 = vector.broadcast %226 : vector<32x1xf32> to vector<32x32xf32>
    %228 = arith.cmpf oeq, %1, %227 : vector<32x32xf32>
    %229 = arith.extui %228 : vector<32x32xi1> to vector<32x32xi32>
    %230 = arith.sitofp %229 : vector<32x32xi32> to vector<32x32xf32>
    %cst_76 = arith.constant 0x7F800000 : f32
    %231 = vector.broadcast %cst_76 : f32 to vector<32x32xf32>
    %232 = arith.select %222, %231, %218 : vector<32x32xi1>, vector<32x32xf32>
    %cst_77 = arith.constant dense<0x7F800000> : vector<32xf32>
    %233 = vector.multi_reduction <minimumf>, %232, %cst_77 [1] : vector<32x32xf32> to vector<32xf32>
    %234 = vector.shape_cast %233 : vector<32xf32> to vector<32x1xf32>
    %235 = vector.broadcast %234 : vector<32x1xf32> to vector<32x32xf32>
    %236 = arith.cmpf ole, %232, %235 : vector<32x32xf32>
    %cst_78 = arith.constant 3.200000e+01 : f32
    %237 = vector.broadcast %cst_78 : f32 to vector<32x32xf32>
    %238 = arith.select %236, %1, %237 : vector<32x32xi1>, vector<32x32xf32>
    %cst_79 = arith.constant dense<0x7F800000> : vector<32xf32>
    %239 = vector.multi_reduction <minimumf>, %238, %cst_79 [1] : vector<32x32xf32> to vector<32xf32>
    %240 = vector.shape_cast %239 : vector<32xf32> to vector<32x1xf32>
    %241 = vector.broadcast %240 : vector<32x1xf32> to vector<32x32xf32>
    %242 = arith.cmpf oeq, %1, %241 : vector<32x32xf32>
    %243 = arith.extui %242 : vector<32x32xi1> to vector<32x32xi32>
    %244 = arith.sitofp %243 : vector<32x32xi32> to vector<32x32xf32>
    %cst_80 = arith.constant 0x7F800000 : f32
    %245 = vector.broadcast %cst_80 : f32 to vector<32x32xf32>
    %246 = arith.select %236, %245, %232 : vector<32x32xi1>, vector<32x32xf32>
    %cst_81 = arith.constant dense<0x7F800000> : vector<32xf32>
    %247 = vector.multi_reduction <minimumf>, %246, %cst_81 [1] : vector<32x32xf32> to vector<32xf32>
    %248 = vector.shape_cast %247 : vector<32xf32> to vector<32x1xf32>
    %249 = vector.broadcast %248 : vector<32x1xf32> to vector<32x32xf32>
    %250 = arith.cmpf ole, %246, %249 : vector<32x32xf32>
    %cst_82 = arith.constant 3.200000e+01 : f32
    %251 = vector.broadcast %cst_82 : f32 to vector<32x32xf32>
    %252 = arith.select %250, %1, %251 : vector<32x32xi1>, vector<32x32xf32>
    %cst_83 = arith.constant dense<0x7F800000> : vector<32xf32>
    %253 = vector.multi_reduction <minimumf>, %252, %cst_83 [1] : vector<32x32xf32> to vector<32xf32>
    %254 = vector.shape_cast %253 : vector<32xf32> to vector<32x1xf32>
    %255 = vector.broadcast %254 : vector<32x1xf32> to vector<32x32xf32>
    %256 = arith.cmpf oeq, %1, %255 : vector<32x32xf32>
    %257 = arith.extui %256 : vector<32x32xi1> to vector<32x32xi32>
    %258 = arith.sitofp %257 : vector<32x32xi32> to vector<32x32xf32>
    %cst_84 = arith.constant 0x7F800000 : f32
    %259 = vector.broadcast %cst_84 : f32 to vector<32x32xf32>
    %260 = arith.select %250, %259, %246 : vector<32x32xi1>, vector<32x32xf32>
    %cst_85 = arith.constant dense<0x7F800000> : vector<32xf32>
    %261 = vector.multi_reduction <minimumf>, %260, %cst_85 [1] : vector<32x32xf32> to vector<32xf32>
    %262 = vector.shape_cast %261 : vector<32xf32> to vector<32x1xf32>
    %263 = vector.broadcast %262 : vector<32x1xf32> to vector<32x32xf32>
    %264 = arith.cmpf ole, %260, %263 : vector<32x32xf32>
    %cst_86 = arith.constant 3.200000e+01 : f32
    %265 = vector.broadcast %cst_86 : f32 to vector<32x32xf32>
    %266 = arith.select %264, %1, %265 : vector<32x32xi1>, vector<32x32xf32>
    %cst_87 = arith.constant dense<0x7F800000> : vector<32xf32>
    %267 = vector.multi_reduction <minimumf>, %266, %cst_87 [1] : vector<32x32xf32> to vector<32xf32>
    %268 = vector.shape_cast %267 : vector<32xf32> to vector<32x1xf32>
    %269 = vector.broadcast %268 : vector<32x1xf32> to vector<32x32xf32>
    %270 = arith.cmpf oeq, %1, %269 : vector<32x32xf32>
    %271 = arith.extui %270 : vector<32x32xi1> to vector<32x32xi32>
    %272 = arith.sitofp %271 : vector<32x32xi32> to vector<32x32xf32>
    %273 = tpu.concatenate %174, %188, %202, %216, %230, %244, %258, %272 in 0 : vector<32x32xf32>, vector<32x32xf32>, vector<32x32xf32>, vector<32x32xf32>, vector<32x32xf32>, vector<32x32xf32>, vector<32x32xf32>, vector<32x32xf32> -> vector<256x32xf32>
    %cst_88 = arith.constant dense<0.000000e+00> : vector<256x32xf32>
    %274 = tpu.matmul %273, %162, %cst_88 {dimension_numbers = #tpu.dot_dimension_numbers<[1], [0], [0], [1], [0, 0, 1, 1], [], []>} : vector<256x32xf32>, vector<32x32xf32>, vector<256x32xf32> -> vector<256x32xf32>
    %275 = vector.extract_strided_slice %274 {offsets = [0, 0], sizes = [32, 32], strides = [1, 1]} : vector<256x32xf32> to vector<32x32xf32>
    %276 = vector.extract_strided_slice %274 {offsets = [32, 0], sizes = [32, 32], strides = [1, 1]} : vector<256x32xf32> to vector<32x32xf32>
    %277 = arith.maximumf %275, %276 : vector<32x32xf32>
    %278 = vector.extract_strided_slice %274 {offsets = [64, 0], sizes = [32, 32], strides = [1, 1]} : vector<256x32xf32> to vector<32x32xf32>
    %279 = arith.maximumf %277, %278 : vector<32x32xf32>
    %280 = vector.extract_strided_slice %274 {offsets = [96, 0], sizes = [32, 32], strides = [1, 1]} : vector<256x32xf32> to vector<32x32xf32>
    %281 = arith.maximumf %279, %280 : vector<32x32xf32>
    %282 = vector.extract_strided_slice %274 {offsets = [128, 0], sizes = [32, 32], strides = [1, 1]} : vector<256x32xf32> to vector<32x32xf32>
    %283 = arith.maximumf %281, %282 : vector<32x32xf32>
    %284 = vector.extract_strided_slice %274 {offsets = [160, 0], sizes = [32, 32], strides = [1, 1]} : vector<256x32xf32> to vector<32x32xf32>
    %285 = arith.maximumf %283, %284 : vector<32x32xf32>
    %286 = vector.extract_strided_slice %274 {offsets = [192, 0], sizes = [32, 32], strides = [1, 1]} : vector<256x32xf32> to vector<32x32xf32>
    %287 = arith.maximumf %285, %286 : vector<32x32xf32>
    %288 = vector.extract_strided_slice %274 {offsets = [224, 0], sizes = [32, 32], strides = [1, 1]} : vector<256x32xf32> to vector<32x32xf32>
    %289 = arith.maximumf %287, %288 : vector<32x32xf32>
    %290 = arith.addf %161, %289 : vector<32x32xf32>
    %cst_89 = arith.constant 0.000000e+00 : f32
    %291 = vector.broadcast %cst_89 : f32 to vector<32x32xf32>
    %292 = arith.maximumf %290, %291 : vector<32x32xf32>
    %c0_90 = arith.constant 0 : index
    %c0_91 = arith.constant 0 : index
    %293 = vector.load %arg8[%c0_90, %c0_91] : memref<32x32xf32, #tpu.memory_space<vmem>>, vector<32x32xf32>
    %c0_92 = arith.constant 0 : index
    %c0_93 = arith.constant 0 : index
    %294 = vector.load %arg9[%c0_92, %c0_93] : memref<32x32xf32, #tpu.memory_space<vmem>>, vector<32x32xf32>
    %c0_94 = arith.constant 0 : index
    %c0_95 = arith.constant 0 : index
    %295 = vector.load %arg10[%c0_94, %c0_95] : memref<1x32xf32, #tpu.memory_space<vmem>>, vector<1x32xf32>
    %cst_96 = arith.constant dense<0.000000e+00> : vector<32x32xf32>
    %296 = tpu.matmul %292, %292, %cst_96 {dimension_numbers = #tpu.dot_dimension_numbers<[1], [1], [0], [0], [0, 0, 1, 0], [], []>} : vector<32x32xf32>, vector<32x32xf32>, vector<32x32xf32> -> vector<32x32xf32>
    %cst_97 = arith.constant 1.000000e+00 : f32
    %297 = vector.broadcast %cst_97 : f32 to vector<1x32xf32>
    %298 = arith.mulf %292, %292 : vector<32x32xf32>
    %cst_98 = arith.constant dense<0.000000e+00> : vector<1x32xf32>
    %299 = tpu.matmul %297, %298, %cst_98 {dimension_numbers = #tpu.dot_dimension_numbers<[1], [1], [0], [0], [0, 0, 1, 0], [], []>} : vector<1x32xf32>, vector<32x32xf32>, vector<1x32xf32> -> vector<1x32xf32>
    %cst_99 = arith.constant 2.000000e+00 : f32
    %300 = vector.broadcast %cst_99 : f32 to vector<32x32xf32>
    %301 = arith.mulf %300, %296 : vector<32x32xf32>
    %302 = vector.broadcast %299 : vector<1x32xf32> to vector<32x32xf32>
    %303 = arith.subf %302, %301 : vector<32x32xf32>
    %cst_100 = arith.constant dense<0.000000e+00> : vector<32x32xf32>
    %304 = tpu.matmul %292, %293, %cst_100 {dimension_numbers = #tpu.dot_dimension_numbers<[1], [0], [0], [1], [0, 0, 1, 1], [], []>} : vector<32x32xf32>, vector<32x32xf32>, vector<32x32xf32> -> vector<32x32xf32>
    %305 = vector.broadcast %295 : vector<1x32xf32> to vector<32x32xf32>
    %306 = arith.addf %304, %305 : vector<32x32xf32>
    %cst_101 = arith.constant dense<0.000000e+00> : vector<32x32xf32>
    %307 = tpu.matmul %292, %294, %cst_101 {dimension_numbers = #tpu.dot_dimension_numbers<[1], [0], [0], [1], [0, 0, 1, 1], [], []>} : vector<32x32xf32>, vector<32x32xf32>, vector<32x32xf32> -> vector<32x32xf32>
    %cst_102 = arith.constant dense<0x7F800000> : vector<32xf32>
    %308 = vector.multi_reduction <minimumf>, %303, %cst_102 [1] : vector<32x32xf32> to vector<32xf32>
    %309 = vector.shape_cast %308 : vector<32xf32> to vector<32x1xf32>
    %310 = vector.broadcast %309 : vector<32x1xf32> to vector<32x32xf32>
    %311 = arith.cmpf ole, %303, %310 : vector<32x32xf32>
    %cst_103 = arith.constant 3.200000e+01 : f32
    %312 = vector.broadcast %cst_103 : f32 to vector<32x32xf32>
    %313 = arith.select %311, %1, %312 : vector<32x32xi1>, vector<32x32xf32>
    %cst_104 = arith.constant dense<0x7F800000> : vector<32xf32>
    %314 = vector.multi_reduction <minimumf>, %313, %cst_104 [1] : vector<32x32xf32> to vector<32xf32>
    %315 = vector.shape_cast %314 : vector<32xf32> to vector<32x1xf32>
    %316 = vector.broadcast %315 : vector<32x1xf32> to vector<32x32xf32>
    %317 = arith.cmpf oeq, %1, %316 : vector<32x32xf32>
    %318 = arith.extui %317 : vector<32x32xi1> to vector<32x32xi32>
    %319 = arith.sitofp %318 : vector<32x32xi32> to vector<32x32xf32>
    %cst_105 = arith.constant 0x7F800000 : f32
    %320 = vector.broadcast %cst_105 : f32 to vector<32x32xf32>
    %321 = arith.select %311, %320, %303 : vector<32x32xi1>, vector<32x32xf32>
    %cst_106 = arith.constant dense<0x7F800000> : vector<32xf32>
    %322 = vector.multi_reduction <minimumf>, %321, %cst_106 [1] : vector<32x32xf32> to vector<32xf32>
    %323 = vector.shape_cast %322 : vector<32xf32> to vector<32x1xf32>
    %324 = vector.broadcast %323 : vector<32x1xf32> to vector<32x32xf32>
    %325 = arith.cmpf ole, %321, %324 : vector<32x32xf32>
    %cst_107 = arith.constant 3.200000e+01 : f32
    %326 = vector.broadcast %cst_107 : f32 to vector<32x32xf32>
    %327 = arith.select %325, %1, %326 : vector<32x32xi1>, vector<32x32xf32>
    %cst_108 = arith.constant dense<0x7F800000> : vector<32xf32>
    %328 = vector.multi_reduction <minimumf>, %327, %cst_108 [1] : vector<32x32xf32> to vector<32xf32>
    %329 = vector.shape_cast %328 : vector<32xf32> to vector<32x1xf32>
    %330 = vector.broadcast %329 : vector<32x1xf32> to vector<32x32xf32>
    %331 = arith.cmpf oeq, %1, %330 : vector<32x32xf32>
    %332 = arith.extui %331 : vector<32x32xi1> to vector<32x32xi32>
    %333 = arith.sitofp %332 : vector<32x32xi32> to vector<32x32xf32>
    %cst_109 = arith.constant 0x7F800000 : f32
    %334 = vector.broadcast %cst_109 : f32 to vector<32x32xf32>
    %335 = arith.select %325, %334, %321 : vector<32x32xi1>, vector<32x32xf32>
    %cst_110 = arith.constant dense<0x7F800000> : vector<32xf32>
    %336 = vector.multi_reduction <minimumf>, %335, %cst_110 [1] : vector<32x32xf32> to vector<32xf32>
    %337 = vector.shape_cast %336 : vector<32xf32> to vector<32x1xf32>
    %338 = vector.broadcast %337 : vector<32x1xf32> to vector<32x32xf32>
    %339 = arith.cmpf ole, %335, %338 : vector<32x32xf32>
    %cst_111 = arith.constant 3.200000e+01 : f32
    %340 = vector.broadcast %cst_111 : f32 to vector<32x32xf32>
    %341 = arith.select %339, %1, %340 : vector<32x32xi1>, vector<32x32xf32>
    %cst_112 = arith.constant dense<0x7F800000> : vector<32xf32>
    %342 = vector.multi_reduction <minimumf>, %341, %cst_112 [1] : vector<32x32xf32> to vector<32xf32>
    %343 = vector.shape_cast %342 : vector<32xf32> to vector<32x1xf32>
    %344 = vector.broadcast %343 : vector<32x1xf32> to vector<32x32xf32>
    %345 = arith.cmpf oeq, %1, %344 : vector<32x32xf32>
    %346 = arith.extui %345 : vector<32x32xi1> to vector<32x32xi32>
    %347 = arith.sitofp %346 : vector<32x32xi32> to vector<32x32xf32>
    %cst_113 = arith.constant 0x7F800000 : f32
    %348 = vector.broadcast %cst_113 : f32 to vector<32x32xf32>
    %349 = arith.select %339, %348, %335 : vector<32x32xi1>, vector<32x32xf32>
    %cst_114 = arith.constant dense<0x7F800000> : vector<32xf32>
    %350 = vector.multi_reduction <minimumf>, %349, %cst_114 [1] : vector<32x32xf32> to vector<32xf32>
    %351 = vector.shape_cast %350 : vector<32xf32> to vector<32x1xf32>
    %352 = vector.broadcast %351 : vector<32x1xf32> to vector<32x32xf32>
    %353 = arith.cmpf ole, %349, %352 : vector<32x32xf32>
    %cst_115 = arith.constant 3.200000e+01 : f32
    %354 = vector.broadcast %cst_115 : f32 to vector<32x32xf32>
    %355 = arith.select %353, %1, %354 : vector<32x32xi1>, vector<32x32xf32>
    %cst_116 = arith.constant dense<0x7F800000> : vector<32xf32>
    %356 = vector.multi_reduction <minimumf>, %355, %cst_116 [1] : vector<32x32xf32> to vector<32xf32>
    %357 = vector.shape_cast %356 : vector<32xf32> to vector<32x1xf32>
    %358 = vector.broadcast %357 : vector<32x1xf32> to vector<32x32xf32>
    %359 = arith.cmpf oeq, %1, %358 : vector<32x32xf32>
    %360 = arith.extui %359 : vector<32x32xi1> to vector<32x32xi32>
    %361 = arith.sitofp %360 : vector<32x32xi32> to vector<32x32xf32>
    %cst_117 = arith.constant 0x7F800000 : f32
    %362 = vector.broadcast %cst_117 : f32 to vector<32x32xf32>
    %363 = arith.select %353, %362, %349 : vector<32x32xi1>, vector<32x32xf32>
    %cst_118 = arith.constant dense<0x7F800000> : vector<32xf32>
    %364 = vector.multi_reduction <minimumf>, %363, %cst_118 [1] : vector<32x32xf32> to vector<32xf32>
    %365 = vector.shape_cast %364 : vector<32xf32> to vector<32x1xf32>
    %366 = vector.broadcast %365 : vector<32x1xf32> to vector<32x32xf32>
    %367 = arith.cmpf ole, %363, %366 : vector<32x32xf32>
    %cst_119 = arith.constant 3.200000e+01 : f32
    %368 = vector.broadcast %cst_119 : f32 to vector<32x32xf32>
    %369 = arith.select %367, %1, %368 : vector<32x32xi1>, vector<32x32xf32>
    %cst_120 = arith.constant dense<0x7F800000> : vector<32xf32>
    %370 = vector.multi_reduction <minimumf>, %369, %cst_120 [1] : vector<32x32xf32> to vector<32xf32>
    %371 = vector.shape_cast %370 : vector<32xf32> to vector<32x1xf32>
    %372 = vector.broadcast %371 : vector<32x1xf32> to vector<32x32xf32>
    %373 = arith.cmpf oeq, %1, %372 : vector<32x32xf32>
    %374 = arith.extui %373 : vector<32x32xi1> to vector<32x32xi32>
    %375 = arith.sitofp %374 : vector<32x32xi32> to vector<32x32xf32>
    %cst_121 = arith.constant 0x7F800000 : f32
    %376 = vector.broadcast %cst_121 : f32 to vector<32x32xf32>
    %377 = arith.select %367, %376, %363 : vector<32x32xi1>, vector<32x32xf32>
    %cst_122 = arith.constant dense<0x7F800000> : vector<32xf32>
    %378 = vector.multi_reduction <minimumf>, %377, %cst_122 [1] : vector<32x32xf32> to vector<32xf32>
    %379 = vector.shape_cast %378 : vector<32xf32> to vector<32x1xf32>
    %380 = vector.broadcast %379 : vector<32x1xf32> to vector<32x32xf32>
    %381 = arith.cmpf ole, %377, %380 : vector<32x32xf32>
    %cst_123 = arith.constant 3.200000e+01 : f32
    %382 = vector.broadcast %cst_123 : f32 to vector<32x32xf32>
    %383 = arith.select %381, %1, %382 : vector<32x32xi1>, vector<32x32xf32>
    %cst_124 = arith.constant dense<0x7F800000> : vector<32xf32>
    %384 = vector.multi_reduction <minimumf>, %383, %cst_124 [1] : vector<32x32xf32> to vector<32xf32>
    %385 = vector.shape_cast %384 : vector<32xf32> to vector<32x1xf32>
    %386 = vector.broadcast %385 : vector<32x1xf32> to vector<32x32xf32>
    %387 = arith.cmpf oeq, %1, %386 : vector<32x32xf32>
    %388 = arith.extui %387 : vector<32x32xi1> to vector<32x32xi32>
    %389 = arith.sitofp %388 : vector<32x32xi32> to vector<32x32xf32>
    %cst_125 = arith.constant 0x7F800000 : f32
    %390 = vector.broadcast %cst_125 : f32 to vector<32x32xf32>
    %391 = arith.select %381, %390, %377 : vector<32x32xi1>, vector<32x32xf32>
    %cst_126 = arith.constant dense<0x7F800000> : vector<32xf32>
    %392 = vector.multi_reduction <minimumf>, %391, %cst_126 [1] : vector<32x32xf32> to vector<32xf32>
    %393 = vector.shape_cast %392 : vector<32xf32> to vector<32x1xf32>
    %394 = vector.broadcast %393 : vector<32x1xf32> to vector<32x32xf32>
    %395 = arith.cmpf ole, %391, %394 : vector<32x32xf32>
    %cst_127 = arith.constant 3.200000e+01 : f32
    %396 = vector.broadcast %cst_127 : f32 to vector<32x32xf32>
    %397 = arith.select %395, %1, %396 : vector<32x32xi1>, vector<32x32xf32>
    %cst_128 = arith.constant dense<0x7F800000> : vector<32xf32>
    %398 = vector.multi_reduction <minimumf>, %397, %cst_128 [1] : vector<32x32xf32> to vector<32xf32>
    %399 = vector.shape_cast %398 : vector<32xf32> to vector<32x1xf32>
    %400 = vector.broadcast %399 : vector<32x1xf32> to vector<32x32xf32>
    %401 = arith.cmpf oeq, %1, %400 : vector<32x32xf32>
    %402 = arith.extui %401 : vector<32x32xi1> to vector<32x32xi32>
    %403 = arith.sitofp %402 : vector<32x32xi32> to vector<32x32xf32>
    %cst_129 = arith.constant 0x7F800000 : f32
    %404 = vector.broadcast %cst_129 : f32 to vector<32x32xf32>
    %405 = arith.select %395, %404, %391 : vector<32x32xi1>, vector<32x32xf32>
    %cst_130 = arith.constant dense<0x7F800000> : vector<32xf32>
    %406 = vector.multi_reduction <minimumf>, %405, %cst_130 [1] : vector<32x32xf32> to vector<32xf32>
    %407 = vector.shape_cast %406 : vector<32xf32> to vector<32x1xf32>
    %408 = vector.broadcast %407 : vector<32x1xf32> to vector<32x32xf32>
    %409 = arith.cmpf ole, %405, %408 : vector<32x32xf32>
    %cst_131 = arith.constant 3.200000e+01 : f32
    %410 = vector.broadcast %cst_131 : f32 to vector<32x32xf32>
    %411 = arith.select %409, %1, %410 : vector<32x32xi1>, vector<32x32xf32>
    %cst_132 = arith.constant dense<0x7F800000> : vector<32xf32>
    %412 = vector.multi_reduction <minimumf>, %411, %cst_132 [1] : vector<32x32xf32> to vector<32xf32>
    %413 = vector.shape_cast %412 : vector<32xf32> to vector<32x1xf32>
    %414 = vector.broadcast %413 : vector<32x1xf32> to vector<32x32xf32>
    %415 = arith.cmpf oeq, %1, %414 : vector<32x32xf32>
    %416 = arith.extui %415 : vector<32x32xi1> to vector<32x32xi32>
    %417 = arith.sitofp %416 : vector<32x32xi32> to vector<32x32xf32>
    %418 = tpu.concatenate %319, %333, %347, %361, %375, %389, %403, %417 in 0 : vector<32x32xf32>, vector<32x32xf32>, vector<32x32xf32>, vector<32x32xf32>, vector<32x32xf32>, vector<32x32xf32>, vector<32x32xf32>, vector<32x32xf32> -> vector<256x32xf32>
    %cst_133 = arith.constant dense<0.000000e+00> : vector<256x32xf32>
    %419 = tpu.matmul %418, %307, %cst_133 {dimension_numbers = #tpu.dot_dimension_numbers<[1], [0], [0], [1], [0, 0, 1, 1], [], []>} : vector<256x32xf32>, vector<32x32xf32>, vector<256x32xf32> -> vector<256x32xf32>
    %420 = vector.extract_strided_slice %419 {offsets = [0, 0], sizes = [32, 32], strides = [1, 1]} : vector<256x32xf32> to vector<32x32xf32>
    %421 = vector.extract_strided_slice %419 {offsets = [32, 0], sizes = [32, 32], strides = [1, 1]} : vector<256x32xf32> to vector<32x32xf32>
    %422 = arith.maximumf %420, %421 : vector<32x32xf32>
    %423 = vector.extract_strided_slice %419 {offsets = [64, 0], sizes = [32, 32], strides = [1, 1]} : vector<256x32xf32> to vector<32x32xf32>
    %424 = arith.maximumf %422, %423 : vector<32x32xf32>
    %425 = vector.extract_strided_slice %419 {offsets = [96, 0], sizes = [32, 32], strides = [1, 1]} : vector<256x32xf32> to vector<32x32xf32>
    %426 = arith.maximumf %424, %425 : vector<32x32xf32>
    %427 = vector.extract_strided_slice %419 {offsets = [128, 0], sizes = [32, 32], strides = [1, 1]} : vector<256x32xf32> to vector<32x32xf32>
    %428 = arith.maximumf %426, %427 : vector<32x32xf32>
    %429 = vector.extract_strided_slice %419 {offsets = [160, 0], sizes = [32, 32], strides = [1, 1]} : vector<256x32xf32> to vector<32x32xf32>
    %430 = arith.maximumf %428, %429 : vector<32x32xf32>
    %431 = vector.extract_strided_slice %419 {offsets = [192, 0], sizes = [32, 32], strides = [1, 1]} : vector<256x32xf32> to vector<32x32xf32>
    %432 = arith.maximumf %430, %431 : vector<32x32xf32>
    %433 = vector.extract_strided_slice %419 {offsets = [224, 0], sizes = [32, 32], strides = [1, 1]} : vector<256x32xf32> to vector<32x32xf32>
    %434 = arith.maximumf %432, %433 : vector<32x32xf32>
    %435 = arith.addf %306, %434 : vector<32x32xf32>
    %cst_134 = arith.constant 0.000000e+00 : f32
    %436 = vector.broadcast %cst_134 : f32 to vector<32x32xf32>
    %437 = arith.maximumf %435, %436 : vector<32x32xf32>
    %cst_135 = arith.constant 1.000000e+00 : f32
    %438 = vector.broadcast %cst_135 : f32 to vector<1x32xf32>
    %cst_136 = arith.constant dense<0.000000e+00> : vector<1x32xf32>
    %439 = tpu.matmul %438, %437, %cst_136 {dimension_numbers = #tpu.dot_dimension_numbers<[1], [0], [0], [1], [0, 0, 1, 1], [], []>} : vector<1x32xf32>, vector<32x32xf32>, vector<1x32xf32> -> vector<1x32xf32>
    %cst_137 = arith.constant 3.125000e-02 : f32
    %440 = vector.broadcast %cst_137 : f32 to vector<1x32xf32>
    %441 = arith.mulf %439, %440 : vector<1x32xf32>
    %c0_138 = arith.constant 0 : index
    %c0_139 = arith.constant 0 : index
    %442 = vector.load %arg11[%c0_138, %c0_139] : memref<32x32xf32, #tpu.memory_space<vmem>>, vector<32x32xf32>
    %cst_140 = arith.constant dense<0.000000e+00> : vector<1x32xf32>
    %443 = tpu.matmul %441, %442, %cst_140 {dimension_numbers = #tpu.dot_dimension_numbers<[1], [0], [0], [1], [0, 0, 1, 1], [], []>} : vector<1x32xf32>, vector<32x32xf32>, vector<1x32xf32> -> vector<1x32xf32>
    %c0_141 = arith.constant 0 : index
    %c0_142 = arith.constant 0 : index
    %444 = vector.load %arg12[%c0_141, %c0_142] : memref<1x32xf32, #tpu.memory_space<vmem>>, vector<1x32xf32>
    %445 = arith.addf %443, %444 : vector<1x32xf32>
    %cst_143 = arith.constant 0.000000e+00 : f32
    %446 = vector.broadcast %cst_143 : f32 to vector<1x32xf32>
    %447 = arith.maximumf %445, %446 : vector<1x32xf32>
    %c0_144 = arith.constant 0 : index
    %c0_145 = arith.constant 0 : index
    %448 = vector.load %arg13[%c0_144, %c0_145] : memref<32x128xf32, #tpu.memory_space<vmem>>, vector<32x128xf32>
    %cst_146 = arith.constant dense<0.000000e+00> : vector<1x128xf32>
    %449 = tpu.matmul %447, %448, %cst_146 {dimension_numbers = #tpu.dot_dimension_numbers<[1], [0], [0], [1], [0, 0, 1, 1], [], []>} : vector<1x32xf32>, vector<32x128xf32>, vector<1x128xf32> -> vector<1x128xf32>
    %c0_147 = arith.constant 0 : index
    %c0_148 = arith.constant 0 : index
    %450 = vector.load %arg14[%c0_147, %c0_148] : memref<1x128xf32, #tpu.memory_space<vmem>>, vector<1x128xf32>
    %451 = arith.addf %449, %450 : vector<1x128xf32>
    %452 = vector.shape_cast %451 : vector<1x128xf32> to vector<1x1x128xf32>
    %453 = vector.shape_cast %452 : vector<1x1x128xf32> to vector<1x1x128xf32>
    %454 = vector.broadcast %453 : vector<1x1x128xf32> to vector<1x8x128xf32>
    %c0_149 = arith.constant 0 : index
    %c0_150 = arith.constant 0 : index
    %c0_151 = arith.constant 0 : index
    %455 = vector.load %arg15[%c0_149, %c0_150, %c0_151] : memref<1x8x128xf32, #tpu.memory_space<vmem>>, vector<1x8x128xf32>
    tpu.vector_store %arg15[%c0_149, %c0_150, %c0_151], %454 {strides = array<i32>} : memref<1x8x128xf32, #tpu.memory_space<vmem>>, vector<1x8x128xf32>,
    return
  }
  func.func @transform_0(%arg0: i32) -> (i32, i32) {
    %c0_i32 = arith.constant 0 : i32
    %c0_i32_0 = arith.constant 0 : i32
    return %arg0, %c0_i32 : i32, i32
  }
  func.func @transform_1(%arg0: i32) -> (i32, i32) {
    %c0_i32 = arith.constant 0 : i32
    %c0_i32_0 = arith.constant 0 : i32
    %c0_i32_1 = arith.constant 0 : i32
    return %c0_i32, %c0_i32_0 : i32, i32
  }
  func.func @transform_2(%arg0: i32) -> (i32, i32) {
    %c0_i32 = arith.constant 0 : i32
    %c0_i32_0 = arith.constant 0 : i32
    %c0_i32_1 = arith.constant 0 : i32
    return %c0_i32, %c0_i32_0 : i32, i32
  }
  func.func @transform_3(%arg0: i32) -> (i32, i32) {
    %c0_i32 = arith.constant 0 : i32
    %c0_i32_0 = arith.constant 0 : i32
    %c0_i32_1 = arith.constant 0 : i32
    return %c0_i32, %c0_i32_0 : i32, i32
  }
  func.func @transform_4(%arg0: i32) -> (i32, i32) {
    %c0_i32 = arith.constant 0 : i32
    %c0_i32_0 = arith.constant 0 : i32
    %c0_i32_1 = arith.constant 0 : i32
    return %c0_i32, %c0_i32_0 : i32, i32
  }
  func.func @transform_5(%arg0: i32) -> (i32, i32) {
    %c0_i32 = arith.constant 0 : i32
    %c0_i32_0 = arith.constant 0 : i32
    %c0_i32_1 = arith.constant 0 : i32
    return %c0_i32, %c0_i32_0 : i32, i32
  }
  func.func @transform_6(%arg0: i32) -> (i32, i32) {
    %c0_i32 = arith.constant 0 : i32
    %c0_i32_0 = arith.constant 0 : i32
    %c0_i32_1 = arith.constant 0 : i32
    return %c0_i32, %c0_i32_0 : i32, i32
  }
  func.func @transform_7(%arg0: i32) -> (i32, i32) {
    %c0_i32 = arith.constant 0 : i32
    %c0_i32_0 = arith.constant 0 : i32
    %c0_i32_1 = arith.constant 0 : i32
    return %c0_i32, %c0_i32_0 : i32, i32
  }
  func.func @transform_8(%arg0: i32) -> (i32, i32) {
    %c0_i32 = arith.constant 0 : i32
    %c0_i32_0 = arith.constant 0 : i32
    %c0_i32_1 = arith.constant 0 : i32
    return %c0_i32, %c0_i32_0 : i32, i32
  }
  func.func @transform_9(%arg0: i32) -> (i32, i32) {
    %c0_i32 = arith.constant 0 : i32
    %c0_i32_0 = arith.constant 0 : i32
    %c0_i32_1 = arith.constant 0 : i32
    return %c0_i32, %c0_i32_0 : i32, i32
  }
  func.func @transform_10(%arg0: i32) -> (i32, i32) {
    %c0_i32 = arith.constant 0 : i32
    %c0_i32_0 = arith.constant 0 : i32
    %c0_i32_1 = arith.constant 0 : i32
    return %c0_i32, %c0_i32_0 : i32, i32
  }
  func.func @transform_11(%arg0: i32) -> (i32, i32) {
    %c0_i32 = arith.constant 0 : i32
    %c0_i32_0 = arith.constant 0 : i32
    %c0_i32_1 = arith.constant 0 : i32
    return %c0_i32, %c0_i32_0 : i32, i32
  }
  func.func @transform_12(%arg0: i32) -> (i32, i32) {
    %c0_i32 = arith.constant 0 : i32
    %c0_i32_0 = arith.constant 0 : i32
    %c0_i32_1 = arith.constant 0 : i32
    return %c0_i32, %c0_i32_0 : i32, i32
  }
  func.func @transform_13(%arg0: i32) -> (i32, i32) {
    %c0_i32 = arith.constant 0 : i32
    %c0_i32_0 = arith.constant 0 : i32
    %c0_i32_1 = arith.constant 0 : i32
    return %c0_i32, %c0_i32_0 : i32, i32
  }
  func.func @transform_14(%arg0: i32) -> (i32, i32, i32) {
    %c0_i32 = arith.constant 0 : i32
    %c0_i32_0 = arith.constant 0 : i32
    %c0_i32_1 = arith.constant 0 : i32
    return %arg0, %c0_i32, %c0_i32_0 : i32, i32, i32
  }
}

</mosaic_0001>

<llo_original>
// kernel: dgcnn_forward.1
$region0: #{dgcnn_forward.1}
  #allocation0 [shape = 'u32[]', space=smem, size = 0x4, offset = 0x4, fixed_abs, tag = 'smem constant byte address 0x4 - core index']
  #allocation1 [shape = 'u32[144,128]{1,0:T(1,128)}', space=vmem, size = 0x12000, scoped, tag = 'internal scratch']
  %s0 = inlined_call_operand.vmem [shape: f32[64,8], index: 0, kind: input, shape index: {}]
  %s1 = inlined_call_operand.hbm [shape: f32[8,32], index: 1, kind: input, shape index: {}]
  %s2 = inlined_call_operand.vmem [shape: f32[8,32], index: 2, kind: input, shape index: {}]
  %s3 = inlined_call_operand.hbm [shape: f32[1,32], index: 3, kind: input, shape index: {}]
  %s4 = inlined_call_operand.vmem [shape: f32[32,32], index: 4, kind: input, shape index: {}]
  %s5 = inlined_call_operand.vmem [shape: f32[32,32], index: 5, kind: input, shape index: {}]
  %s6 = inlined_call_operand.vmem [shape: f32[1,32], index: 6, kind: input, shape index: {}]
  %s7 = inlined_call_operand.vmem [shape: f32[32,32], index: 7, kind: input, shape index: {}]
  %s8 = inlined_call_operand.vmem [shape: f32[32,32], index: 8, kind: input, shape index: {}]
  %s9 = inlined_call_operand.vmem [shape: f32[1,32], index: 9, kind: input, shape index: {}]
  %s10 = inlined_call_operand.vmem [shape: f32[32,32], index: 10, kind: input, shape index: {}]
  %s11 = inlined_call_operand.vmem [shape: f32[1,32], index: 11, kind: input, shape index: {}]
  %s12 = inlined_call_operand.vmem [shape: f32[32,128], index: 12, kind: input, shape index: {}]
  %s13 = inlined_call_operand.vmem [shape: f32[1,128], index: 13, kind: input, shape index: {}]
  %s14 = inlined_call_operand.vmem [shape: f32[2,8,128], index: 14, kind: output, shape index: {}]
  %s15 = sld [smem:[#allocation0]]
  $region97: #{dgcnn_forward.1} parent=0
    _
  %s17 = ssub.s32 1, %s15
  %s18 = scalar_select 0, %s17, %s15
  $region1: #{dgcnn_forward.1} parent=0
    #allocation2 [shape = 'u8[4096]{0}', space=vmem, size = 0x1000, scoped, tag = 'input window, operand 1, single buffered']
    #allocation3 [shape = 's32[2]{0}', space=sflag, size = 0x8, scoped, tag = 'scoped memory for dgcnn_forward.1']
    #allocation4 [shape = 'u8[512]{0}', space=vmem, size = 0x400, scoped, tag = 'input window, operand 3, single buffered']
    #allocation5 [shape = 's32[1]{0}', space=sflag, size = 0x4, scoped, tag = 'scoped memory for dgcnn_forward.1']
    %19 = vsyncpa [#allocation3], 0
    %20 = vsyncpa [#allocation5], 0
    loop: start=0, step=1, limit=4
    $region2: #{dgcnn_forward.1} parent=1 // loop_pre_header
      _
    $region3: #{dgcnn_forward.1} parent=1 // loop_header
      %s22 = sphi 0, %s26
      %p23 = scmp.ge.s32.totalorder %s22, 4
      %s32 = sphi 0, %s34
      %s35 = sphi 0, %s32
      %s36 = sphi 0, %s35
      %s52 = sphi 0, %s36
      %s56 = sphi 0, %s56
      %s58 = sphi 0, %s56
      %s59 = sphi 0, %s58
      %s73 = sphi 0, %s59
      %s77 = sphi 0, %s77
      %s79 = sphi 0, %s77
      %s80 = sphi 0, %s79
      %s94 = sphi 0, %s80
      %s98 = sphi 0, %s98
      %s100 = sphi 0, %s98
      %s101 = sphi 0, %s100
      %s115 = sphi 0, %s101
      %s119 = sphi 0, %s119
      %s121 = sphi 0, %s119
      %s122 = sphi 0, %s121
      %s136 = sphi 0, %s122
      %s140 = sphi 0, %s140
      %s142 = sphi 0, %s140
      %s143 = sphi 0, %s142
      %s157 = sphi 0, %s143
      %s161 = sphi 0, %s161
      %s163 = sphi 0, %s161
      %s164 = sphi 0, %s163
      %s178 = sphi 0, %s164
      %s182 = sphi 0, %s182
      %s184 = sphi 0, %s182
      %s185 = sphi 0, %s184
      %s199 = sphi 0, %s185
      %s203 = sphi 0, %s203
      %s205 = sphi 0, %s203
      %s206 = sphi 0, %s205
      %s220 = sphi 0, %s206
      %s224 = sphi 0, %s224
      %s226 = sphi 0, %s224
      %s227 = sphi 0, %s226
      %s241 = sphi 0, %s227
      %s245 = sphi 0, %s245
      %s247 = sphi 0, %s245
      %s248 = sphi 0, %s247
      %s262 = sphi 0, %s248
      %s266 = sphi 0, %s266
      %s268 = sphi 0, %s266
      %s269 = sphi 0, %s268
      %s283 = sphi 0, %s269
      %s287 = sphi 0, %s287
      %s289 = sphi 0, %s287
      %s290 = sphi 0, %s289
      %s304 = sphi 0, %s290
      %s308 = sphi 0, %s308
      %s310 = sphi 0, %s308
      %s311 = sphi 0, %s310
      %s325 = sphi 0, %s311
      %s331 = sphi 0, %s333
      %s334 = sphi 0, %s331
      %s335 = sphi 0, %s334
      %s351 = sphi 0, %s335
    $region4: #{dgcnn_forward.1} parent=1 // loop_header_branch
      %25 = sbr.rel (%p23) target = $region8
    $region5: #{dgcnn_forward.1} parent=1 // loop_body
      %s27 = ssub.s32 %s22, 1
      %s28 = ssub.s32 %s22, 2
      %s29 = sadd.s32 %s22, 1
      %s30 = ssub.s32 %s22, %s29
      %p31 = scmp.eq.s32.totalorder %s30, 0
      %s33 = sadd.s32 %s32, 1
      %s34 = scalar_select %p31, %s32, %s33
      %p37 = pneg %p31
      %p38 = scmp.eq.s32.totalorder %s22, 1
      %p39 = por %p37, %p38
      %p40 = scmp.ne.s32.totalorder %s32, %s35
      %p41 = scmp.eq.s32.totalorder %s22, 0
      %p42 = por %p40, %p41
      %p43 = scmp.ne.s32.totalorder %s32, %s35
      %p44 = scmp.eq.s32.totalorder %s27, 1
      %p45 = por %p43, %p44
      %p46 = scmp.ne.s32.totalorder %s35, %s36
      %p47 = scmp.eq.s32.totalorder %s27, 0
      %p48 = por %p46, %p47
      %p49 = scmp.ne.s32.totalorder %s35, %s36
      %p50 = scmp.eq.s32.totalorder %s28, 1
      %p51 = por %p49, %p50
      %p53 = scmp.ne.s32.totalorder %s36, %s52
      %p54 = scmp.eq.s32.totalorder %s28, 0
      %p55 = por %p53, %p54
      %s57 = sadd.s32 %s56, 1
      %p60 = scmp.eq.s32.totalorder %s22, 1
      %p61 = scmp.ne.s32.totalorder %s56, %s58
      %p62 = scmp.eq.s32.totalorder %s22, 0
      %p63 = por %p61, %p62
      %p64 = scmp.ne.s32.totalorder %s56, %s58
      %p65 = scmp.eq.s32.totalorder %s27, 1
      %p66 = por %p64, %p65
      %p67 = scmp.ne.s32.totalorder %s58, %s59
      %p68 = scmp.eq.s32.totalorder %s27, 0
      %p69 = por %p67, %p68
      %p70 = scmp.ne.s32.totalorder %s58, %s59
      %p71 = scmp.eq.s32.totalorder %s28, 1
      %p72 = por %p70, %p71
      %p74 = scmp.ne.s32.totalorder %s59, %s73
      %p75 = scmp.eq.s32.totalorder %s28, 0
      %p76 = por %p74, %p75
      %s78 = sadd.s32 %s77, 1
      %p81 = scmp.eq.s32.totalorder %s22, 1
      %p82 = scmp.ne.s32.totalorder %s77, %s79
      %p83 = scmp.eq.s32.totalorder %s22, 0
      %p84 = por %p82, %p83
      %p85 = scmp.ne.s32.totalorder %s77, %s79
      %p86 = scmp.eq.s32.totalorder %s27, 1
      %p87 = por %p85, %p86
      %p88 = scmp.ne.s32.totalorder %s79, %s80
      %p89 = scmp.eq.s32.totalorder %s27, 0
      %p90 = por %p88, %p89
      %p91 = scmp.ne.s32.totalorder %s79, %s80
      %p92 = scmp.eq.s32.totalorder %s28, 1
      %p93 = por %p91, %p92
      %p95 = scmp.ne.s32.totalorder %s80, %s94
      %p96 = scmp.eq.s32.totalorder %s28, 0
      %p97 = por %p95, %p96
      %s99 = sadd.s32 %s98, 1
      %p102 = scmp.eq.s32.totalorder %s22, 1
      %p103 = scmp.ne.s32.totalorder %s98, %s100
      %p104 = scmp.eq.s32.totalorder %s22, 0
      %p105 = por %p103, %p104
      %p106 = scmp.ne.s32.totalorder %s98, %s100
      %p107 = scmp.eq.s32.totalorder %s27, 1
      %p108 = por %p106, %p107
      %p109 = scmp.ne.s32.totalorder %s100, %s101
      %p110 = scmp.eq.s32.totalorder %s27, 0
      %p111 = por %p109, %p110
      %p112 = scmp.ne.s32.totalorder %s100, %s101
      %p113 = scmp.eq.s32.totalorder %s28, 1
      %p114 = por %p112, %p113
      %p116 = scmp.ne.s32.totalorder %s101, %s115
      %p117 = scmp.eq.s32.totalorder %s28, 0
      %p118 = por %p116, %p117
      %s120 = sadd.s32 %s119, 1
      %p123 = scmp.eq.s32.totalorder %s22, 1
      %p124 = scmp.ne.s32.totalorder %s119, %s121
      %p125 = scmp.eq.s32.totalorder %s22, 0
      %p126 = por %p124, %p125
      %p127 = scmp.ne.s32.totalorder %s119, %s121
      %p128 = scmp.eq.s32.totalorder %s27, 1
      %p129 = por %p127, %p128
      %p130 = scmp.ne.s32.totalorder %s121, %s122
      %p131 = scmp.eq.s32.totalorder %s27, 0
      %p132 = por %p130, %p131
      %p133 = scmp.ne.s32.totalorder %s121, %s122
      %p134 = scmp.eq.s32.totalorder %s28, 1
      %p135 = por %p133, %p134
      %p137 = scmp.ne.s32.totalorder %s122, %s136
      %p138 = scmp.eq.s32.totalorder %s28, 0
      %p139 = por %p137, %p138
      %s141 = sadd.s32 %s140, 1
      %p144 = scmp.eq.s32.totalorder %s22, 1
      %p145 = scmp.ne.s32.totalorder %s140, %s142
      %p146 = scmp.eq.s32.totalorder %s22, 0
      %p147 = por %p145, %p146
      %p148 = scmp.ne.s32.totalorder %s140, %s142
      %p149 = scmp.eq.s32.totalorder %s27, 1
      %p150 = por %p148, %p149
      %p151 = scmp.ne.s32.totalorder %s142, %s143
      %p152 = scmp.eq.s32.totalorder %s27, 0
      %p153 = por %p151, %p152
      %p154 = scmp.ne.s32.totalorder %s142, %s143
      %p155 = scmp.eq.s32.totalorder %s28, 1
      %p156 = por %p154, %p155
      %p158 = scmp.ne.s32.totalorder %s143, %s157
      %p159 = scmp.eq.s32.totalorder %s28, 0
      %p160 = por %p158, %p159
      %s162 = sadd.s32 %s161, 1
      %p165 = scmp.eq.s32.totalorder %s22, 1
      %p166 = scmp.ne.s32.totalorder %s161, %s163
      %p167 = scmp.eq.s32.totalorder %s22, 0
      %p168 = por %p166, %p167
      %p169 = scmp.ne.s32.totalorder %s161, %s163
      %p170 = scmp.eq.s32.totalorder %s27, 1
      %p171 = por %p169, %p170
      %p172 = scmp.ne.s32.totalorder %s163, %s164
      %p173 = scmp.eq.s32.totalorder %s27, 0
      %p174 = por %p172, %p173
      %p175 = scmp.ne.s32.totalorder %s163, %s164
      %p176 = scmp.eq.s32.totalorder %s28, 1
      %p177 = por %p175, %p176
      %p179 = scmp.ne.s32.totalorder %s164, %s178
      %p180 = scmp.eq.s32.totalorder %s28, 0
      %p181 = por %p179, %p180
      %s183 = sadd.s32 %s182, 1
      %p186 = scmp.eq.s32.totalorder %s22, 1
      %p187 = scmp.ne.s32.totalorder %s182, %s184
      %p188 = scmp.eq.s32.totalorder %s22, 0
      %p189 = por %p187, %p188
      %p190 = scmp.ne.s32.totalorder %s182, %s184
      %p191 = scmp.eq.s32.totalorder %s27, 1
      %p192 = por %p190, %p191
      %p193 = scmp.ne.s32.totalorder %s184, %s185
      %p194 = scmp.eq.s32.totalorder %s27, 0
      %p195 = por %p193, %p194
      %p196 = scmp.ne.s32.totalorder %s184, %s185
      %p197 = scmp.eq.s32.totalorder %s28, 1
      %p198 = por %p196, %p197
      %p200 = scmp.ne.s32.totalorder %s185, %s199
      %p201 = scmp.eq.s32.totalorder %s28, 0
      %p202 = por %p200, %p201
      %s204 = sadd.s32 %s203, 1
      %p207 = scmp.eq.s32.totalorder %s22, 1
      %p208 = scmp.ne.s32.totalorder %s203, %s205
      %p209 = scmp.eq.s32.totalorder %s22, 0
      %p210 = por %p208, %p209
      %p211 = scmp.ne.s32.totalorder %s203, %s205
      %p212 = scmp.eq.s32.totalorder %s27, 1
      %p213 = por %p211, %p212
      %p214 = scmp.ne.s32.totalorder %s205, %s206
      %p215 = scmp.eq.s32.totalorder %s27, 0
      %p216 = por %p214, %p215
      %p217 = scmp.ne.s32.totalorder %s205, %s206
      %p218 = scmp.eq.s32.totalorder %s28, 1
      %p219 = por %p217, %p218
      %p221 = scmp.ne.s32.totalorder %s206, %s220
      %p222 = scmp.eq.s32.totalorder %s28, 0
      %p223 = por %p221, %p222
      %s225 = sadd.s32 %s224, 1
      %p228 = scmp.eq.s32.totalorder %s22, 1
      %p229 = scmp.ne.s32.totalorder %s224, %s226
      %p230 = scmp.eq.s32.totalorder %s22, 0
      %p231 = por %p229, %p230
      %p232 = scmp.ne.s32.totalorder %s224, %s226
      %p233 = scmp.eq.s32.totalorder %s27, 1
      %p234 = por %p232, %p233
      %p235 = scmp.ne.s32.totalorder %s226, %s227
      %p236 = scmp.eq.s32.totalorder %s27, 0
      %p237 = por %p235, %p236
      %p238 = scmp.ne.s32.totalorder %s226, %s227
      %p239 = scmp.eq.s32.totalorder %s28, 1
      %p240 = por %p238, %p239
      %p242 = scmp.ne.s32.totalorder %s227, %s241
      %p243 = scmp.eq.s32.totalorder %s28, 0
      %p244 = por %p242, %p243
      %s246 = sadd.s32 %s245, 1
      %p249 = scmp.eq.s32.totalorder %s22, 1
      %p250 = scmp.ne.s32.totalorder %s245, %s247
      %p251 = scmp.eq.s32.totalorder %s22, 0
      %p252 = por %p250, %p251
      %p253 = scmp.ne.s32.totalorder %s245, %s247
      %p254 = scmp.eq.s32.totalorder %s27, 1
      %p255 = por %p253, %p254
      %p256 = scmp.ne.s32.totalorder %s247, %s248
      %p257 = scmp.eq.s32.totalorder %s27, 0
      %p258 = por %p256, %p257
      %p259 = scmp.ne.s32.totalorder %s247, %s248
      %p260 = scmp.eq.s32.totalorder %s28, 1
      %p261 = por %p259, %p260
      %p263 = scmp.ne.s32.totalorder %s248, %s262
      %p264 = scmp.eq.s32.totalorder %s28, 0
      %p265 = por %p263, %p264
      %s267 = sadd.s32 %s266, 1
      %p270 = scmp.eq.s32.totalorder %s22, 1
      %p271 = scmp.ne.s32.totalorder %s266, %s268
      %p272 = scmp.eq.s32.totalorder %s22, 0
      %p273 = por %p271, %p272
      %p274 = scmp.ne.s32.totalorder %s266, %s268
      %p275 = scmp.eq.s32.totalorder %s27, 1
      %p276 = por %p274, %p275
      %p277 = scmp.ne.s32.totalorder %s268, %s269
      %p278 = scmp.eq.s32.totalorder %s27, 0
      %p279 = por %p277, %p278
      %p280 = scmp.ne.s32.totalorder %s268, %s269
      %p281 = scmp.eq.s32.totalorder %s28, 1
      %p282 = por %p280, %p281
      %p284 = scmp.ne.s32.totalorder %s269, %s283
      %p285 = scmp.eq.s32.totalorder %s28, 0
      %p286 = por %p284, %p285
      %s288 = sadd.s32 %s287, 1
      %p291 = scmp.eq.s32.totalorder %s22, 1
      %p292 = scmp.ne.s32.totalorder %s287, %s289
      %p293 = scmp.eq.s32.totalorder %s22, 0
      %p294 = por %p292, %p293
      %p295 = scmp.ne.s32.totalorder %s287, %s289
      %p296 = scmp.eq.s32.totalorder %s27, 1
      %p297 = por %p295, %p296
      %p298 = scmp.ne.s32.totalorder %s289, %s290
      %p299 = scmp.eq.s32.totalorder %s27, 0
      %p300 = por %p298, %p299
      %p301 = scmp.ne.s32.totalorder %s289, %s290
      %p302 = scmp.eq.s32.totalorder %s28, 1
      %p303 = por %p301, %p302
      %p305 = scmp.ne.s32.totalorder %s290, %s304
      %p306 = scmp.eq.s32.totalorder %s28, 0
      %p307 = por %p305, %p306
      %s309 = sadd.s32 %s308, 1
      %p312 = scmp.eq.s32.totalorder %s22, 1
      %p313 = scmp.ne.s32.totalorder %s308, %s310
      %p314 = scmp.eq.s32.totalorder %s22, 0
      %p315 = por %p313, %p314
      %p316 = scmp.ne.s32.totalorder %s308, %s310
      %p317 = scmp.eq.s32.totalorder %s27, 1
      %p318 = por %p316, %p317
      %p319 = scmp.ne.s32.totalorder %s310, %s311
      %p320 = scmp.eq.s32.totalorder %s27, 0
      %p321 = por %p319, %p320
      %p322 = scmp.ne.s32.totalorder %s310, %s311
      %p323 = scmp.eq.s32.totalorder %s28, 1
      %p324 = por %p322, %p323
      %p326 = scmp.ne.s32.totalorder %s311, %s325
      %p327 = scmp.eq.s32.totalorder %s28, 0
      %p328 = por %p326, %p327
      %s329 = ssub.s32 %s22, %s29
      %p330 = scmp.eq.s32.totalorder %s329, 0
      %s332 = sadd.s32 %s331, 1
      %s333 = scalar_select %p330, %s331, %s332
      %p336 = pneg %p330
      %p337 = scmp.eq.s32.totalorder %s22, 1
      %p338 = por %p336, %p337
      %p339 = scmp.ne.s32.totalorder %s331, %s334
      %p340 = scmp.eq.s32.totalorder %s22, 0
      %p341 = por %p339, %p340
      %p342 = scmp.ne.s32.totalorder %s331, %s334
      %p343 = scmp.eq.s32.totalorder %s27, 1
      %p344 = por %p342, %p343
      %p345 = scmp.ne.s32.totalorder %s334, %s335
      %p346 = scmp.eq.s32.totalorder %s27, 0
      %p347 = por %p345, %p346
      %p348 = scmp.ne.s32.totalorder %s334, %s335
      %p349 = scmp.eq.s32.totalorder %s28, 1
      %p350 = por %p348, %p349
      %p352 = scmp.ne.s32.totalorder %s335, %s351
      %p353 = scmp.eq.s32.totalorder %s28, 0
      %p354 = por %p352, %p353
      %p355 = scmp.le.s32.totalorder 1, %s22
      %p356 = scmp.lt.s32.totalorder %s22, 3
      %p357 = pnand %p355, %p356
      %p358 = pneg %p357
      // Predicated region
      $region9: #{dgcnn_forward.1} parent=5 // pred_check
        _
      $region10: #{dgcnn_forward.1} parent=5 // pred_check_branch
        %360 = sbr.rel (%p357) target = $region12
      $region11: #{dgcnn_forward.1} parent=5 // pred_region
        %s361 = ssub.s32 %s22, 1
        // Predicated region
        $region13: #{dgcnn_forward.1} parent=11 // pred_check
          %p362 = pneg %p69
        $region14: #{dgcnn_forward.1} parent=11 // pred_check_branch
          %364 = sbr.rel (%p362) target = $region16
        $region15: #{dgcnn_forward.1} parent=11 // pred_region
          %s366 = ssub.s32 128, 128
          %367 = vsyncadd [#allocation3], %s366
          %s369 = sshll.u32 [#allocation2], 4
          %s370 = int_to_ptr.vmem [resolvable:$true] %s369
          %372 = dma.hbm_to_vmem [thread:$0]  %s1, 128, %s370, [#allocation3]
        $region16: #{dgcnn_forward.1} parent=11 // pred_fallthru
          _
        // Predicated region
        $region17: #{dgcnn_forward.1} parent=11 // pred_check
          %p373 = pneg %p90
        $region18: #{dgcnn_forward.1} parent=11 // pred_check_branch
          %375 = sbr.rel (%p373) target = $region20
        $region19: #{dgcnn_forward.1} parent=11 // pred_region
          _
        $region20: #{dgcnn_forward.1} parent=11 // pred_fallthru
          _
        // Predicated region
        $region21: #{dgcnn_forward.1} parent=11 // pred_check
          %p376 = pneg %p111
        $region22: #{dgcnn_forward.1} parent=11 // pred_check_branch
          %378 = sbr.rel (%p376) target = $region24
        $region23: #{dgcnn_forward.1} parent=11 // pred_region
          %s380 = ssub.s32 16, 16
          %381 = vsyncadd [#allocation5], %s380
          %s383 = sshll.u32 [#allocation4], 4
          %s384 = int_to_ptr.vmem [resolvable:$true] %s383
          %386 = dma.hbm_to_vmem [thread:$0]  %s3, 16, %s384, [#allocation5]
        $region24: #{dgcnn_forward.1} parent=11 // pred_fallthru
          _
        // Predicated region
        $region25: #{dgcnn_forward.1} parent=11 // pred_check
          %p387 = pneg %p132
        $region26: #{dgcnn_forward.1} parent=11 // pred_check_branch
          %389 = sbr.rel (%p387) target = $region28
        $region27: #{dgcnn_forward.1} parent=11 // pred_region
          _
        $region28: #{dgcnn_forward.1} parent=11 // pred_fallthru
          _
        // Predicated region
        $region29: #{dgcnn_forward.1} parent=11 // pred_check
          %p390 = pneg %p153
        $region30: #{dgcnn_forward.1} parent=11 // pred_check_branch
          %392 = sbr.rel (%p390) target = $region32
        $region31: #{dgcnn_forward.1} parent=11 // pred_region
          _
        $region32: #{dgcnn_forward.1} parent=11 // pred_fallthru
          _
        // Predicated region
        $region33: #{dgcnn_forward.1} parent=11 // pred_check
          %p393 = pneg %p174
        $region34: #{dgcnn_forward.1} parent=11 // pred_check_branch
          %395 = sbr.rel (%p393) target = $region36
        $region35: #{dgcnn_forward.1} parent=11 // pred_region
          _
        $region36: #{dgcnn_forward.1} parent=11 // pred_fallthru
          _
        // Predicated region
        $region37: #{dgcnn_forward.1} parent=11 // pred_check
          %p396 = pneg %p195
        $region38: #{dgcnn_forward.1} parent=11 // pred_check_branch
          %398 = sbr.rel (%p396) target = $region40
        $region39: #{dgcnn_forward.1} parent=11 // pred_region
          _
        $region40: #{dgcnn_forward.1} parent=11 // pred_fallthru
          _
        // Predicated region
        $region41: #{dgcnn_forward.1} parent=11 // pred_check
          %p399 = pneg %p216
        $region42: #{dgcnn_forward.1} parent=11 // pred_check_branch
          %401 = sbr.rel (%p399) target = $region44
        $region43: #{dgcnn_forward.1} parent=11 // pred_region
          _
        $region44: #{dgcnn_forward.1} parent=11 // pred_fallthru
          _
        // Predicated region
        $region45: #{dgcnn_forward.1} parent=11 // pred_check
          %p402 = pneg %p237
        $region46: #{dgcnn_forward.1} parent=11 // pred_check_branch
          %404 = sbr.rel (%p402) target = $region48
        $region47: #{dgcnn_forward.1} parent=11 // pred_region
          _
        $region48: #{dgcnn_forward.1} parent=11 // pred_fallthru
          _
        // Predicated region
        $region49: #{dgcnn_forward.1} parent=11 // pred_check
          %p405 = pneg %p258
        $region50: #{dgcnn_forward.1} parent=11 // pred_check_branch
          %407 = sbr.rel (%p405) target = $region52
        $region51: #{dgcnn_forward.1} parent=11 // pred_region
          _
        $region52: #{dgcnn_forward.1} parent=11 // pred_fallthru
          _
        // Predicated region
        $region53: #{dgcnn_forward.1} parent=11 // pred_check
          %p408 = pneg %p279
        $region54: #{dgcnn_forward.1} parent=11 // pred_check_branch
          %410 = sbr.rel (%p408) target = $region56
        $region55: #{dgcnn_forward.1} parent=11 // pred_region
          _
        $region56: #{dgcnn_forward.1} parent=11 // pred_fallthru
          _
        // Predicated region
        $region57: #{dgcnn_forward.1} parent=11 // pred_check
          %p411 = pneg %p300
        $region58: #{dgcnn_forward.1} parent=11 // pred_check_branch
          %413 = sbr.rel (%p411) target = $region60
        $region59: #{dgcnn_forward.1} parent=11 // pred_region
          _
        $region60: #{dgcnn_forward.1} parent=11 // pred_fallthru
          _
        // Predicated region
        $region61: #{dgcnn_forward.1} parent=11 // pred_check
          %p414 = pneg %p321
        $region62: #{dgcnn_forward.1} parent=11 // pred_check_branch
          %416 = sbr.rel (%p414) target = $region64
        $region63: #{dgcnn_forward.1} parent=11 // pred_region
          _
        $region64: #{dgcnn_forward.1} parent=11 // pred_fallthru
          _
      $region12: #{dgcnn_forward.1} parent=5 // pred_fallthru
        _
      %p417 = scmp.lt.s32.totalorder %s22, 2
      // Predicated region
      $region65: #{dgcnn_forward.1} parent=5 // pred_check
        %p418 = pneg %p417
      $region66: #{dgcnn_forward.1} parent=5 // pred_check_branch
        %420 = sbr.rel (%p418) target = $region68
      $region67: #{dgcnn_forward.1} parent=5 // pred_region
        // Predicated region
        $region69: #{dgcnn_forward.1} parent=67 // pred_check
          %p421 = pneg %p42
        $region70: #{dgcnn_forward.1} parent=67 // pred_check_branch
          %423 = sbr.rel (%p421) target = $region72
        $region71: #{dgcnn_forward.1} parent=67 // pred_region
          %s424 = smul.u32 4, %s22
          %p425 = scmp.lt.s32.totalorder %s424, 7
          %s426 = scalar_select %p425, %s424, 7
          %s427 = smul.addr %s426, 8
          %s428 = scalar_lea.vmem %s0, %s427
          %s429 = smul.u32 4, %s22
        $region72: #{dgcnn_forward.1} parent=67 // pred_fallthru
          _
      $region68: #{dgcnn_forward.1} parent=5 // pred_fallthru
        _
      %p430 = scmp.le.s32.totalorder 1, %s22
      %p431 = scmp.lt.s32.totalorder %s22, 3
      %p432 = pnand %p430, %p431
      %p433 = pneg %p432
      // Predicated region
      $region73: #{dgcnn_forward.1} parent=5 // pred_check
        _
      $region74: #{dgcnn_forward.1} parent=5 // pred_check_branch
        %435 = sbr.rel (%p432) target = $region76
      $region75: #{dgcnn_forward.1} parent=5 // pred_region
        %s436 = ssub.s32 %s22, 1
        // Predicated region
        $region77: #{dgcnn_forward.1} parent=75 // pred_check
          %p437 = pneg %p69
        $region78: #{dgcnn_forward.1} parent=75 // pred_check_branch
          %439 = sbr.rel (%p437) target = $region80
        $region79: #{dgcnn_forward.1} parent=75 // pred_region
          %440 = dma.done [#allocation3], 128
        $region80: #{dgcnn_forward.1} parent=75 // pred_fallthru
          _
        // Predicated region
        $region81: #{dgcnn_forward.1} parent=75 // pred_check
          %p441 = pneg %p111
        $region82: #{dgcnn_forward.1} parent=75 // pred_check_branch
          %443 = sbr.rel (%p441) target = $region84
        $region83: #{dgcnn_forward.1} parent=75 // pred_region
          %444 = dma.done [#allocation5], 16
        $region84: #{dgcnn_forward.1} parent=75 // pred_fallthru
          _
        %s445 = smul.u32 4, %s27
        %p446 = scmp.lt.s32.totalorder %s445, 7
        %s447 = scalar_select %p446, %s445, 7
        %s448 = smul.addr %s447, 8
        %s449 = scalar_lea.vmem %s0, %s448
        %p450 = pneg %p48
        %p451 = pneg %p45
        %p452 = pneg %p69
        %p453 = pneg %p66
        %p454 = pneg %p90
        %p455 = pneg %p87
        %p456 = pneg %p111
        %p457 = pneg %p108
        %p458 = pneg %p132
        %p459 = pneg %p129
        %p460 = pneg %p153
        %p461 = pneg %p150
        %p462 = pneg %p174
        %p463 = pneg %p171
        %p464 = pneg %p195
        %p465 = pneg %p192
        %p466 = pneg %p216
        %p467 = pneg %p213
        %p468 = pneg %p237
        %p469 = pneg %p234
        %p470 = pneg %p258
        %p471 = pneg %p255
        %p472 = pneg %p279
        %p473 = pneg %p276
        %p474 = pneg %p300
        %p475 = pneg %p297
        %p476 = pneg %p321
        %p477 = pneg %p318
        %p478 = pneg %p347
        %p479 = pneg %p344
        %p480 = scmp.lt.s32.totalorder %s27, 1
        %s481 = scalar_select %p480, %s27, 1
        %s482 = smul.addr %s481, 8
        %s483 = scalar_lea.vmem %s14, %s482
        %s484 = smul.u32 4, %s27
        %p485 = scmp.lt.s32.totalorder %s484, 7
        %s486 = scalar_select %p485, %s484, 7
        %s487 = smul.addr %s486, 8
        %s488 = scalar_lea.vmem %s0, %s487
        %s489 = smul.u32 4, %s27
        %p490 = scmp.lt.s32.totalorder %s27, 1
        %s491 = scalar_select %p490, %s27, 1
        %s492 = smul.addr %s491, 8
        %s493 = scalar_lea.vmem %s14, %s492
        %v494 = vlaneseq
        %v495 = vand.u32 %v494, 127
        %v496 = vcvt.s32.f32 %v495
        %v497 = vld [vmem:[%s488] sm:$0xff]
        %v498 = vld [vmem:[%s488 + $0x8] sm:$0xff]
        %v499 = vld [vmem:[%s488 + $0x10] sm:$0xff]
        %v500 = vld [vmem:[%s488 + $0x18] sm:$0xff]
        %v501 = vld [vmem:[#allocation2] sm:$0xff]
        %v502 = vld [vmem:[%s2] sm:$0xff]
        %v503 = vld [vmem:[#allocation4] sm:$0x1]
        %vm504 = vcmask 64512
        %v506 = vsel %vm504, %v497, 0
        %v509 = vsel %vm504, %v498, 0
        %v512 = vsel %vm504, %v499, 0
        %v515 = vsel %vm504, %v500, 0
        %517 = vmatprep.subr.mxu0 0.0
        %518 = vmatpush1.xpose.msra.mxu0 0.0
        %519 = vmatprep.subr.mxu0 0.0
        %520 = vmatpush1.xpose.msra.mxu0 0.0
        %521 = vmatprep.subr.mxu0 0.0
        %522 = vmatpush1.xpose.msra.mxu0 0.0
        %523 = vmatprep.subr.mxu0 0.0
        %524 = vmatpush1.xpose.msra.mxu0 0.0
        %525 = vmatprep.subr.mxu0 0.0
        %526 = vmatpush1.xpose.msra.mxu0 0.0
        %527 = vmatprep.subr.mxu0 0.0
        %528 = vmatpush1.xpose.msra.mxu0 0.0
        %529 = vmatprep.subr.mxu0 0.0
        %530 = vmatpush1.xpose.msra.mxu0 0.0
        %531 = vmatprep.subr.mxu0 0.0
        %532 = vmatpush1.xpose.msra.mxu0 0.0
        %533 = vmatprep.subr.mxu0 0.0
        %534 = vmatpush1.xpose.msra.mxu0 0.0
        %535 = vmatprep.subr.mxu0 0.0
        %536 = vmatpush1.xpose.msra.mxu0 0.0
        %537 = vmatprep.subr.mxu0 0.0
        %538 = vmatpush1.xpose.msra.mxu0 0.0
        %539 = vmatprep.subr.mxu0 0.0
        %540 = vmatpush1.xpose.msra.mxu0 0.0
        %541 = vmatprep.subr.mxu0 0.0
        %542 = vmatpush1.xpose.msra.mxu0 %v515
        %543 = vmatprep.subr.mxu0 0.0
        %544 = vmatpush1.xpose.msra.mxu0 %v512
        %545 = vmatprep.subr.mxu0 0.0
        %546 = vmatpush1.xpose.msra.mxu0 %v509
        %547 = vmatprep.subr.mxu0 0.0
        %548 = vmatpush1.xpose.msra.mxu0 %v506
        %549 = vmatprep.subr.mxu0 0.0
        %550 = vmatpush2.xpose.msra.mxu0 0.0
        %551 = vmatprep.subr.mxu0 0.0
        %552 = vmatpush2.xpose.msra.mxu0 0.0
        %553 = vmatprep.subr.mxu0 0.0
        %554 = vmatpush2.xpose.msra.mxu0 0.0
        %555 = vmatprep.subr.mxu0 0.0
        %556 = vmatpush2.xpose.msra.mxu0 0.0
        %557 = vmatprep.subr.mxu0 0.0
        %558 = vmatpush2.xpose.msra.mxu0 0.0
        %559 = vmatprep.subr.mxu0 0.0
        %560 = vmatpush2.xpose.msra.mxu0 0.0
        %561 = vmatprep.subr.mxu0 0.0
        %562 = vmatpush2.xpose.msra.mxu0 0.0
        %563 = vmatprep.subr.mxu0 0.0
        %564 = vmatpush2.xpose.msra.mxu0 0.0
        %565 = vmatprep.subr.mxu0 0.0
        %566 = vmatpush2.xpose.msra.mxu0 0.0
        %567 = vmatprep.subr.mxu0 0.0
        %568 = vmatpush2.xpose.msra.mxu0 0.0
        %569 = vmatprep.subr.mxu0 0.0
        %570 = vmatpush2.xpose.msra.mxu0 0.0
        %571 = vmatprep.subr.mxu0 0.0
        %572 = vmatpush2.xpose.msra.mxu0 0.0
        %573 = vmatprep.subr.mxu0 0.0
        %574 = vmatpush2.xpose.msra.mxu0 0.0
        %575 = vmatprep.subr.mxu0 0.0
        %576 = vmatpush2.xpose.msra.mxu0 0.0
        %577 = vmatprep.subr.mxu0 0.0
        %578 = vmatpush2.xpose.msra.mxu0 0.0
        %579 = vmatprep.subr.mxu0 0.0
        %580 = vmatpush2.xpose.msra.mxu0 0.0
        %581 = vmatprep.mubr.f32.mxu0 0.0
        %582 = vmatmul.mubr.f32.gmra.mxu0 %v506
        %v583 = vpop.f32.mrf.mxu0
        %v584 = vadd.f32 0.0, %v583
        %v585 = vpop.f32.mrf.mxu0
        %586 = vmatprep.mubr.f32.mxu0 0.0
        %587 = vmatmul.mubr.f32.gmra.mxu0 %v509
        %v588 = vpop.f32.mrf.mxu0
        %v589 = vadd.f32 0.0, %v588
        %v590 = vpop.f32.mrf.mxu0
        %591 = vmatprep.mubr.f32.mxu0 0.0
        %592 = vmatmul.mubr.f32.gmra.mxu0 %v512
        %v593 = vpop.f32.mrf.mxu0
        %v594 = vadd.f32 0.0, %v593
        %v595 = vpop.f32.mrf.mxu0
        %596 = vmatprep.mubr.f32.mxu0 0.0
        %597 = vmatmul.mubr.f32.gmra.mxu0 %v515
        %v598 = vpop.f32.mrf.mxu0
        %v599 = vadd.f32 0.0, %v598
        %v600 = vpop.f32.mrf.mxu0
        %601 = vdwg.mxu0
        %v602 = vmul.f32 %v497, %v497
        %v603 = vmul.f32 %v498, %v498
        %v604 = vmul.f32 %v499, %v499
        %v605 = vmul.f32 %v500, %v500
        %v607 = vsel %vm504, 1.0, 0
        %v610 = vsel %vm504, %v602, 0
        %v613 = vsel %vm504, %v603, 0
        %v616 = vsel %vm504, %v604, 0
        %v619 = vsel %vm504, %v605, 0
        %621 = vmatprep.subr.mxu0 0.0
        %622 = vmatpush1.xpose.msra.mxu0 0.0
        %623 = vmatprep.subr.mxu0 0.0
        %624 = vmatpush1.xpose.msra.mxu0 0.0
        %625 = vmatprep.subr.mxu0 0.0
        %626 = vmatpush1.xpose.msra.mxu0 0.0
        %627 = vmatprep.subr.mxu0 0.0
        %628 = vmatpush1.xpose.msra.mxu0 0.0
        %629 = vmatprep.subr.mxu0 0.0
        %630 = vmatpush1.xpose.msra.mxu0 0.0
        %631 = vmatprep.subr.mxu0 0.0
        %632 = vmatpush1.xpose.msra.mxu0 0.0
        %633 = vmatprep.subr.mxu0 0.0
        %634 = vmatpush1.xpose.msra.mxu0 0.0
        %635 = vmatprep.subr.mxu0 0.0
        %636 = vmatpush1.xpose.msra.mxu0 0.0
        %637 = vmatprep.subr.mxu0 0.0
        %638 = vmatpush1.xpose.msra.mxu0 0.0
        %639 = vmatprep.subr.mxu0 0.0
        %640 = vmatpush1.xpose.msra.mxu0 0.0
        %641 = vmatprep.subr.mxu0 0.0
        %642 = vmatpush1.xpose.msra.mxu0 0.0
        %643 = vmatprep.subr.mxu0 0.0
        %644 = vmatpush1.xpose.msra.mxu0 0.0
        %645 = vmatprep.subr.mxu0 0.0
        %646 = vmatpush1.xpose.msra.mxu0 %v619
        %647 = vmatprep.subr.mxu0 0.0
        %648 = vmatpush1.xpose.msra.mxu0 %v616
        %649 = vmatprep.subr.mxu0 0.0
        %650 = vmatpush1.xpose.msra.mxu0 %v613
        %651 = vmatprep.subr.mxu0 0.0
        %652 = vmatpush1.xpose.msra.mxu0 %v610
        %653 = vmatprep.subr.mxu0 0.0
        %654 = vmatpush2.xpose.msra.mxu0 0.0
        %655 = vmatprep.subr.mxu0 0.0
        %656 = vmatpush2.xpose.msra.mxu0 0.0
        %657 = vmatprep.subr.mxu0 0.0
        %658 = vmatpush2.xpose.msra.mxu0 0.0
        %659 = vmatprep.subr.mxu0 0.0
        %660 = vmatpush2.xpose.msra.mxu0 0.0
        %661 = vmatprep.subr.mxu0 0.0
        %662 = vmatpush2.xpose.msra.mxu0 0.0
        %663 = vmatprep.subr.mxu0 0.0
        %664 = vmatpush2.xpose.msra.mxu0 0.0
        %665 = vmatprep.subr.mxu0 0.0
        %666 = vmatpush2.xpose.msra.mxu0 0.0
        %667 = vmatprep.subr.mxu0 0.0
        %668 = vmatpush2.xpose.msra.mxu0 0.0
        %669 = vmatprep.subr.mxu0 0.0
        %670 = vmatpush2.xpose.msra.mxu0 0.0
        %671 = vmatprep.subr.mxu0 0.0
        %672 = vmatpush2.xpose.msra.mxu0 0.0
        %673 = vmatprep.subr.mxu0 0.0
        %674 = vmatpush2.xpose.msra.mxu0 0.0
        %675 = vmatprep.subr.mxu0 0.0
        %676 = vmatpush2.xpose.msra.mxu0 0.0
        %677 = vmatprep.subr.mxu0 0.0
        %678 = vmatpush2.xpose.msra.mxu0 0.0
        %679 = vmatprep.subr.mxu0 0.0
        %680 = vmatpush2.xpose.msra.mxu0 0.0
        %681 = vmatprep.subr.mxu0 0.0
        %682 = vmatpush2.xpose.msra.mxu0 0.0
        %683 = vmatprep.subr.mxu0 0.0
        %684 = vmatpush2.xpose.msra.mxu0 0.0
        %685 = vmatprep.mubr.f32.mxu0 0.0
        %686 = vmatmul.mubr.f32.gmra.mxu0 %v607
        %v687 = vpop.f32.mrf.mxu0
        %v688 = vadd.f32 0.0, %v687
        %v689 = vpop.f32.mrf.mxu0
        %690 = vdwg.mxu0
        %v691 = vmul.f32 %v584, 2.0
        %v692 = vmul.f32 %v589, 2.0
        %v693 = vmul.f32 %v594, 2.0
        %v694 = vmul.f32 %v599, 2.0
        %v695 = vlaneseq
        %v696 = vshrl.u32 %v695, 7
        %v697 = vsub.s32 0, %v696
        %v698 = vrot.slane %v688, %v697
        %v699 = vsub.f32 %v698, %v691
        %v700 = vsub.f32 %v698, %v692
        %v701 = vsub.f32 %v698, %v693
        %v702 = vsub.f32 %v698, %v694
        %v704 = vlaneseq
        %v705 = vshrl.u32 %v704, 7
        %v706 = vsub.s32 0, %v705
        %v707 = vrot.slane %v503, %v706
        %709 = vmatprep.subr.mxu0 0.0
        %710 = vmatpush1.msra.mxu0 0.0
        %711 = vmatprep.subr.mxu0 0.0
        %712 = vmatpush1.msra.mxu0 0.0
        %713 = vmatprep.subr.mxu0 0.0
        %714 = vmatpush1.msra.mxu0 0.0
        %715 = vmatprep.subr.mxu0 0.0
        %716 = vmatpush1.msra.mxu0 0.0
        %717 = vmatprep.subr.mxu0 0.0
        %718 = vmatpush1.msra.mxu0 0.0
        %719 = vmatprep.subr.mxu0 0.0
        %720 = vmatpush1.msra.mxu0 0.0
        %721 = vmatprep.subr.mxu0 0.0
        %722 = vmatpush1.msra.mxu0 0.0
        %723 = vmatprep.subr.mxu0 0.0
        %724 = vmatpush1.msra.mxu0 0.0
        %725 = vmatprep.subr.mxu0 0.0
        %726 = vmatpush1.msra.mxu0 0.0
        %727 = vmatprep.subr.mxu0 0.0
        %728 = vmatpush1.msra.mxu0 0.0
        %729 = vmatprep.subr.mxu0 0.0
        %730 = vmatpush1.msra.mxu0 0.0
        %731 = vmatprep.subr.mxu0 0.0
        %732 = vmatpush1.msra.mxu0 0.0
        %733 = vmatprep.subr.mxu0 0.0
        %734 = vmatpush1.msra.mxu0 0.0
        %735 = vmatprep.subr.mxu0 0.0
        %736 = vmatpush1.msra.mxu0 0.0
        %737 = vmatprep.subr.mxu0 0.0
        %738 = vmatpush1.msra.mxu0 0.0
        %739 = vmatprep.subr.mxu0 0.0
        %740 = vmatpush1.msra.mxu0 %v501
        %741 = vmatprep.subr.mxu0 0.0
        %742 = vmatpush2.msra.mxu0 0.0
        %743 = vmatprep.subr.mxu0 0.0
        %744 = vmatpush2.msra.mxu0 0.0
        %745 = vmatprep.subr.mxu0 0.0
        %746 = vmatpush2.msra.mxu0 0.0
        %747 = vmatprep.subr.mxu0 0.0
        %748 = vmatpush2.msra.mxu0 0.0
        %749 = vmatprep.subr.mxu0 0.0
        %750 = vmatpush2.msra.mxu0 0.0
        %751 = vmatprep.subr.mxu0 0.0
        %752 = vmatpush2.msra.mxu0 0.0
        %753 = vmatprep.subr.mxu0 0.0
        %754 = vmatpush2.msra.mxu0 0.0
        %755 = vmatprep.subr.mxu0 0.0
        %756 = vmatpush2.msra.mxu0 0.0
        %757 = vmatprep.subr.mxu0 0.0
        %758 = vmatpush2.msra.mxu0 0.0
        %759 = vmatprep.subr.mxu0 0.0
        %760 = vmatpush2.msra.mxu0 0.0
        %761 = vmatprep.subr.mxu0 0.0
        %762 = vmatpush2.msra.mxu0 0.0
        %763 = vmatprep.subr.mxu0 0.0
        %764 = vmatpush2.msra.mxu0 0.0
        %765 = vmatprep.subr.mxu0 0.0
        %766 = vmatpush2.msra.mxu0 0.0
        %767 = vmatprep.subr.mxu0 0.0
        %768 = vmatpush2.msra.mxu0 0.0
        %769 = vmatprep.subr.mxu0 0.0
        %770 = vmatpush2.msra.mxu0 0.0
        %771 = vmatprep.subr.mxu0 0.0
        %772 = vmatpush2.msra.mxu0 0.0
        %773 = vmatprep.mubr.f32.mxu0 0.0
        %774 = vmatmul.mubr.f32.gmra.mxu0 %v506
        %v775 = vpop.f32.mrf.mxu0
        %v776 = vadd.f32 %v707, %v775
        %v777 = vpop.f32.mrf.mxu0
        %778 = vmatprep.mubr.f32.mxu0 0.0
        %779 = vmatmul.mubr.f32.gmra.mxu0 %v509
        %v780 = vpop.f32.mrf.mxu0
        %v781 = vadd.f32 %v707, %v780
        %v782 = vpop.f32.mrf.mxu0
        %783 = vmatprep.mubr.f32.mxu0 0.0
        %784 = vmatmul.mubr.f32.gmra.mxu0 %v512
        %v785 = vpop.f32.mrf.mxu0
        %v786 = vadd.f32 %v707, %v785
        %v787 = vpop.f32.mrf.mxu0
        %788 = vmatprep.mubr.f32.mxu0 0.0
        %789 = vmatmul.mubr.f32.gmra.mxu0 %v515
        %v790 = vpop.f32.mrf.mxu0
        %v791 = vadd.f32 %v707, %v790
        %v792 = vpop.f32.mrf.mxu0
        %793 = vdwg.mxu0
        %794 = vmatprep.subr.mxu0 0.0
        %795 = vmatpush1.msra.mxu0 0.0
        %796 = vmatprep.subr.mxu0 0.0
        %797 = vmatpush1.msra.mxu0 0.0
        %798 = vmatprep.subr.mxu0 0.0
        %799 = vmatpush1.msra.mxu0 0.0
        %800 = vmatprep.subr.mxu0 0.0
        %801 = vmatpush1.msra.mxu0 0.0
        %802 = vmatprep.subr.mxu0 0.0
        %803 = vmatpush1.msra.mxu0 0.0
        %804 = vmatprep.subr.mxu0 0.0
        %805 = vmatpush1.msra.mxu0 0.0
        %806 = vmatprep.subr.mxu0 0.0
        %807 = vmatpush1.msra.mxu0 0.0
        %808 = vmatprep.subr.mxu0 0.0
        %809 = vmatpush1.msra.mxu0 0.0
        %810 = vmatprep.subr.mxu0 0.0
        %811 = vmatpush1.msra.mxu0 0.0
        %812 = vmatprep.subr.mxu0 0.0
        %813 = vmatpush1.msra.mxu0 0.0
        %814 = vmatprep.subr.mxu0 0.0
        %815 = vmatpush1.msra.mxu0 0.0
        %816 = vmatprep.subr.mxu0 0.0
        %817 = vmatpush1.msra.mxu0 0.0
        %818 = vmatprep.subr.mxu0 0.0
        %819 = vmatpush1.msra.mxu0 0.0
        %820 = vmatprep.subr.mxu0 0.0
        %821 = vmatpush1.msra.mxu0 0.0
        %822 = vmatprep.subr.mxu0 0.0
        %823 = vmatpush1.msra.mxu0 0.0
        %824 = vmatprep.subr.mxu0 0.0
        %825 = vmatpush1.msra.mxu0 %v502
        %826 = vmatprep.subr.mxu0 0.0
        %827 = vmatpush2.msra.mxu0 0.0
        %828 = vmatprep.subr.mxu0 0.0
        %829 = vmatpush2.msra.mxu0 0.0
        %830 = vmatprep.subr.mxu0 0.0
        %831 = vmatpush2.msra.mxu0 0.0
        %832 = vmatprep.subr.mxu0 0.0
        %833 = vmatpush2.msra.mxu0 0.0
        %834 = vmatprep.subr.mxu0 0.0
        %835 = vmatpush2.msra.mxu0 0.0
        %836 = vmatprep.subr.mxu0 0.0
        %837 = vmatpush2.msra.mxu0 0.0
        %838 = vmatprep.subr.mxu0 0.0
        %839 = vmatpush2.msra.mxu0 0.0
        %840 = vmatprep.subr.mxu0 0.0
        %841 = vmatpush2.msra.mxu0 0.0
        %842 = vmatprep.subr.mxu0 0.0
        %843 = vmatpush2.msra.mxu0 0.0
        %844 = vmatprep.subr.mxu0 0.0
        %845 = vmatpush2.msra.mxu0 0.0
        %846 = vmatprep.subr.mxu0 0.0
        %847 = vmatpush2.msra.mxu0 0.0
        %848 = vmatprep.subr.mxu0 0.0
        %849 = vmatpush2.msra.mxu0 0.0
        %850 = vmatprep.subr.mxu0 0.0
        %851 = vmatpush2.msra.mxu0 0.0
        %852 = vmatprep.subr.mxu0 0.0
        %853 = vmatpush2.msra.mxu0 0.0
        %854 = vmatprep.subr.mxu0 0.0
        %855 = vmatpush2.msra.mxu0 0.0
        %856 = vmatprep.subr.mxu0 0.0
        %857 = vmatpush2.msra.mxu0 0.0
        %858 = vmatprep.mubr.f32.mxu0 0.0
        %859 = vmatmul.mubr.f32.gmra.mxu0 %v506
        %v860 = vpop.f32.mrf.mxu0
        %v861 = vadd.f32 0.0, %v860
        %v862 = vpop.f32.mrf.mxu0
        %863 = vmatprep.mubr.f32.mxu0 0.0
        %864 = vmatmul.mubr.f32.gmra.mxu0 %v509
        %v865 = vpop.f32.mrf.mxu0
        %v866 = vadd.f32 0.0, %v865
        %v867 = vpop.f32.mrf.mxu0
        %868 = vmatprep.mubr.f32.mxu0 0.0
        %869 = vmatmul.mubr.f32.gmra.mxu0 %v512
        %v870 = vpop.f32.mrf.mxu0
        %v871 = vadd.f32 0.0, %v870
        %v872 = vpop.f32.mrf.mxu0
        %873 = vmatprep.mubr.f32.mxu0 0.0
        %874 = vmatmul.mubr.f32.gmra.mxu0 %v515
        %v875 = vpop.f32.mrf.mxu0
        %v876 = vadd.f32 0.0, %v875
        %v877 = vpop.f32.mrf.mxu0
        %878 = vdwg.mxu0
        %vm879 = vcmask 261120
        %v880 = vsel %vm879, %v699, inf
        %881 = vmin.xlane.f32.xlu0 %v880
        %v882 = vpop.xlane.xlu0 %881
        %v883 = vsel %vm879, %v700, inf
        %884 = vmin.xlane.f32.xlu0 %v883
        %v885 = vpop.xlane.xlu0 %884
        %v886 = vsel %vm879, %v701, inf
        %887 = vmin.xlane.f32.xlu0 %v886
        %v888 = vpop.xlane.xlu0 %887
        %v889 = vsel %vm879, %v702, inf
        %890 = vmin.xlane.f32.xlu0 %v889
        %v891 = vpop.xlane.xlu0 %890
        %vm892 = vcmp.le.f32.partialorder %v699, %v882
        %vm893 = vcmp.le.f32.partialorder %v700, %v885
        %vm894 = vcmp.le.f32.partialorder %v701, %v888
        %vm895 = vcmp.le.f32.partialorder %v702, %v891
        %v896 = vsel %vm892, %v496, 32.0
        %v897 = vsel %vm893, %v496, 32.0
        %v898 = vsel %vm894, %v496, 32.0
        %v899 = vsel %vm895, %v496, 32.0
        %v900 = vsel %vm879, %v896, inf
        %901 = vmin.xlane.f32.xlu0 %v900
        %v902 = vpop.xlane.xlu0 %901
        %v903 = vsel %vm879, %v897, inf
        %904 = vmin.xlane.f32.xlu0 %v903
        %v905 = vpop.xlane.xlu0 %904
        %v906 = vsel %vm879, %v898, inf
        %907 = vmin.xlane.f32.xlu0 %v906
        %v908 = vpop.xlane.xlu0 %907
        %v909 = vsel %vm879, %v899, inf
        %910 = vmin.xlane.f32.xlu0 %v909
        %v911 = vpop.xlane.xlu0 %910
        %vm912 = vcmp.eq.f32.partialorder %v496, %v902
        %vm913 = vcmp.eq.f32.partialorder %v496, %v905
        %vm914 = vcmp.eq.f32.partialorder %v496, %v908
        %vm915 = vcmp.eq.f32.partialorder %v496, %v911
        %v916 = vsel %vm912, 1, 0
        %v917 = vsel %vm913, 1, 0
        %v918 = vsel %vm914, 1, 0
        %v919 = vsel %vm915, 1, 0
        %v920 = vcvt.s32.f32 %v916
        %v921 = vcvt.s32.f32 %v917
        %v922 = vcvt.s32.f32 %v918
        %v923 = vcvt.s32.f32 %v919
        %v924 = vsel %vm892, inf, %v699
        %v925 = vsel %vm893, inf, %v700
        %v926 = vsel %vm894, inf, %v701
        %v927 = vsel %vm895, inf, %v702
        %v928 = vsel %vm879, %v924, inf
        %929 = vmin.xlane.f32.xlu0 %v928
        %v930 = vpop.xlane.xlu0 %929
        %v931 = vsel %vm879, %v925, inf
        %932 = vmin.xlane.f32.xlu0 %v931
        %v933 = vpop.xlane.xlu0 %932
        %v934 = vsel %vm879, %v926, inf
        %935 = vmin.xlane.f32.xlu0 %v934
        %v936 = vpop.xlane.xlu0 %935
        %v937 = vsel %vm879, %v927, inf
        %938 = vmin.xlane.f32.xlu0 %v937
        %v939 = vpop.xlane.xlu0 %938
        %vm940 = vcmp.le.f32.partialorder %v924, %v930
        %vm941 = vcmp.le.f32.partialorder %v925, %v933
        %vm942 = vcmp.le.f32.partialorder %v926, %v936
        %vm943 = vcmp.le.f32.partialorder %v927, %v939
        %v944 = vsel %vm940, %v496, 32.0
        %v945 = vsel %vm941, %v496, 32.0
        %v946 = vsel %vm942, %v496, 32.0
        %v947 = vsel %vm943, %v496, 32.0
        %v948 = vsel %vm879, %v944, inf
        %949 = vmin.xlane.f32.xlu0 %v948
        %v950 = vpop.xlane.xlu0 %949
        %v951 = vsel %vm879, %v945, inf
        %952 = vmin.xlane.f32.xlu0 %v951
        %v953 = vpop.xlane.xlu0 %952
        %v954 = vsel %vm879, %v946, inf
        %955 = vmin.xlane.f32.xlu0 %v954
        %v956 = vpop.xlane.xlu0 %955
        %v957 = vsel %vm879, %v947, inf
        %958 = vmin.xlane.f32.xlu0 %v957
        %v959 = vpop.xlane.xlu0 %958
        %vm960 = vcmp.eq.f32.partialorder %v496, %v950
        %vm961 = vcmp.eq.f32.partialorder %v496, %v953
        %vm962 = vcmp.eq.f32.partialorder %v496, %v956
        %vm963 = vcmp.eq.f32.partialorder %v496, %v959
        %v964 = vsel %vm960, 1, 0
        %v965 = vsel %vm961, 1, 0
        %v966 = vsel %vm962, 1, 0
        %v967 = vsel %vm963, 1, 0
        %v968 = vcvt.s32.f32 %v964
        %v969 = vcvt.s32.f32 %v965
        %v970 = vcvt.s32.f32 %v966
        %v971 = vcvt.s32.f32 %v967
        %v972 = vsel %vm940, inf, %v924
        %v973 = vsel %vm941, inf, %v925
        %v974 = vsel %vm942, inf, %v926
        %v975 = vsel %vm943, inf, %v927
        %v976 = vsel %vm879, %v972, inf
        %977 = vmin.xlane.f32.xlu0 %v976
        %v978 = vpop.xlane.xlu0 %977
        %v979 = vsel %vm879, %v973, inf
        %980 = vmin.xlane.f32.xlu0 %v979
        %v981 = vpop.xlane.xlu0 %980
        %v982 = vsel %vm879, %v974, inf
        %983 = vmin.xlane.f32.xlu0 %v982
        %v984 = vpop.xlane.xlu0 %983
        %v985 = vsel %vm879, %v975, inf
        %986 = vmin.xlane.f32.xlu0 %v985
        %v987 = vpop.xlane.xlu0 %986
        %vm988 = vcmp.le.f32.partialorder %v972, %v978
        %vm989 = vcmp.le.f32.partialorder %v973, %v981
        %vm990 = vcmp.le.f32.partialorder %v974, %v984
        %vm991 = vcmp.le.f32.partialorder %v975, %v987
        %v992 = vsel %vm988, %v496, 32.0
        %v993 = vsel %vm989, %v496, 32.0
        %v994 = vsel %vm990, %v496, 32.0
        %v995 = vsel %vm991, %v496, 32.0
        %v996 = vsel %vm879, %v992, inf
        %997 = vmin.xlane.f32.xlu0 %v996
        %v998 = vpop.xlane.xlu0 %997
        %v999 = vsel %vm879, %v993, inf
        %1000 = vmin.xlane.f32.xlu0 %v999
        %v1001 = vpop.xlane.xlu0 %1000
        %v1002 = vsel %vm879, %v994, inf
        %1003 = vmin.xlane.f32.xlu0 %v1002
        %v1004 = vpop.xlane.xlu0 %1003
        %v1005 = vsel %vm879, %v995, inf
        %1006 = vmin.xlane.f32.xlu0 %v1005
        %v1007 = vpop.xlane.xlu0 %1006
        %vm1008 = vcmp.eq.f32.partialorder %v496, %v998
        %vm1009 = vcmp.eq.f32.partialorder %v496, %v1001
        %vm1010 = vcmp.eq.f32.partialorder %v496, %v1004
        %vm1011 = vcmp.eq.f32.partialorder %v496, %v1007
        %v1012 = vsel %vm1008, 1, 0
        %v1013 = vsel %vm1009, 1, 0
        %v1014 = vsel %vm1010, 1, 0
        %v1015 = vsel %vm1011, 1, 0
        %v1016 = vcvt.s32.f32 %v1012
        %v1017 = vcvt.s32.f32 %v1013
        %v1018 = vcvt.s32.f32 %v1014
        %v1019 = vcvt.s32.f32 %v1015
        %v1020 = vsel %vm988, inf, %v972
        %v1021 = vsel %vm989, inf, %v973
        %v1022 = vsel %vm990, inf, %v974
        %v1023 = vsel %vm991, inf, %v975
        %v1024 = vsel %vm879, %v1020, inf
        %1025 = vmin.xlane.f32.xlu0 %v1024
        %v1026 = vpop.xlane.xlu0 %1025
        %v1027 = vsel %vm879, %v1021, inf
        %1028 = vmin.xlane.f32.xlu0 %v1027
        %v1029 = vpop.xlane.xlu0 %1028
        %v1030 = vsel %vm879, %v1022, inf
        %1031 = vmin.xlane.f32.xlu0 %v1030
        %v1032 = vpop.xlane.xlu0 %1031
        %v1033 = vsel %vm879, %v1023, inf
        %1034 = vmin.xlane.f32.xlu0 %v1033
        %v1035 = vpop.xlane.xlu0 %1034
        %vm1036 = vcmp.le.f32.partialorder %v1020, %v1026
        %vm1037 = vcmp.le.f32.partialorder %v1021, %v1029
        %vm1038 = vcmp.le.f32.partialorder %v1022, %v1032
        %vm1039 = vcmp.le.f32.partialorder %v1023, %v1035
        %v1040 = vsel %vm1036, %v496, 32.0
        %v1041 = vsel %vm1037, %v496, 32.0
        %v1042 = vsel %vm1038, %v496, 32.0
        %v1043 = vsel %vm1039, %v496, 32.0
        %v1044 = vsel %vm879, %v1040, inf
        %1045 = vmin.xlane.f32.xlu0 %v1044
        %v1046 = vpop.xlane.xlu0 %1045
        %v1047 = vsel %vm879, %v1041, inf
        %1048 = vmin.xlane.f32.xlu0 %v1047
        %v1049 = vpop.xlane.xlu0 %1048
        %v1050 = vsel %vm879, %v1042, inf
        %1051 = vmin.xlane.f32.xlu0 %v1050
        %v1052 = vpop.xlane.xlu0 %1051
        %v1053 = vsel %vm879, %v1043, inf
        %1054 = vmin.xlane.f32.xlu0 %v1053
        %v1055 = vpop.xlane.xlu0 %1054
        %vm1056 = vcmp.eq.f32.partialorder %v496, %v1046
        %vm1057 = vcmp.eq.f32.partialorder %v496, %v1049
        %vm1058 = vcmp.eq.f32.partialorder %v496, %v1052
        %vm1059 = vcmp.eq.f32.partialorder %v496, %v1055
        %v1060 = vsel %vm1056, 1, 0
        %v1061 = vsel %vm1057, 1, 0
        %v1062 = vsel %vm1058, 1, 0
        %v1063 = vsel %vm1059, 1, 0
        %v1064 = vcvt.s32.f32 %v1060
        %v1065 = vcvt.s32.f32 %v1061
        %v1066 = vcvt.s32.f32 %v1062
        %v1067 = vcvt.s32.f32 %v1063
        %v1068 = vsel %vm1036, inf, %v1020
        %v1069 = vsel %vm1037, inf, %v1021
        %v1070 = vsel %vm1038, inf, %v1022
        %v1071 = vsel %vm1039, inf, %v1023
        %v1072 = vsel %vm879, %v1068, inf
        %1073 = vmin.xlane.f32.xlu0 %v1072
        %v1074 = vpop.xlane.xlu0 %1073
        %v1075 = vsel %vm879, %v1069, inf
        %1076 = vmin.xlane.f32.xlu0 %v1075
        %v1077 = vpop.xlane.xlu0 %1076
        %v1078 = vsel %vm879, %v1070, inf
        %1079 = vmin.xlane.f32.xlu0 %v1078
        %v1080 = vpop.xlane.xlu0 %1079
        %v1081 = vsel %vm879, %v1071, inf
        %1082 = vmin.xlane.f32.xlu0 %v1081
        %v1083 = vpop.xlane.xlu0 %1082
        %vm1084 = vcmp.le.f32.partialorder %v1068, %v1074
        %vm1085 = vcmp.le.f32.partialorder %v1069, %v1077
        %vm1086 = vcmp.le.f32.partialorder %v1070, %v1080
        %vm1087 = vcmp.le.f32.partialorder %v1071, %v1083
        %v1088 = vsel %vm1084, %v496, 32.0
        %v1089 = vsel %vm1085, %v496, 32.0
        %v1090 = vsel %vm1086, %v496, 32.0
        %v1091 = vsel %vm1087, %v496, 32.0
        %v1092 = vsel %vm879, %v1088, inf
        %1093 = vmin.xlane.f32.xlu0 %v1092
        %v1094 = vpop.xlane.xlu0 %1093
        %v1095 = vsel %vm879, %v1089, inf
        %1096 = vmin.xlane.f32.xlu0 %v1095
        %v1097 = vpop.xlane.xlu0 %1096
        %v1098 = vsel %vm879, %v1090, inf
        %1099 = vmin.xlane.f32.xlu0 %v1098
        %v1100 = vpop.xlane.xlu0 %1099
        %v1101 = vsel %vm879, %v1091, inf
        %1102 = vmin.xlane.f32.xlu0 %v1101
        %v1103 = vpop.xlane.xlu0 %1102
        %vm1104 = vcmp.eq.f32.partialorder %v496, %v1094
        %vm1105 = vcmp.eq.f32.partialorder %v496, %v1097
        %vm1106 = vcmp.eq.f32.partialorder %v496, %v1100
        %vm1107 = vcmp.eq.f32.partialorder %v496, %v1103
        %v1108 = vsel %vm1104, 1, 0
        %v1109 = vsel %vm1105, 1, 0
        %v1110 = vsel %vm1106, 1, 0
        %v1111 = vsel %vm1107, 1, 0
        %v1112 = vcvt.s32.f32 %v1108
        %v1113 = vcvt.s32.f32 %v1109
        %v1114 = vcvt.s32.f32 %v1110
        %v1115 = vcvt.s32.f32 %v1111
        %v1116 = vsel %vm1084, inf, %v1068
        %v1117 = vsel %vm1085, inf, %v1069
        %v1118 = vsel %vm1086, inf, %v1070
        %v1119 = vsel %vm1087, inf, %v1071
        %v1120 = vsel %vm879, %v1116, inf
        %1121 = vmin.xlane.f32.xlu0 %v1120
        %v1122 = vpop.xlane.xlu0 %1121
        %v1123 = vsel %vm879, %v1117, inf
        %1124 = vmin.xlane.f32.xlu0 %v1123
        %v1125 = vpop.xlane.xlu0 %1124
        %v1126 = vsel %vm879, %v1118, inf
        %1127 = vmin.xlane.f32.xlu0 %v1126
        %v1128 = vpop.xlane.xlu0 %1127
        %v1129 = vsel %vm879, %v1119, inf
        %1130 = vmin.xlane.f32.xlu0 %v1129
        %v1131 = vpop.xlane.xlu0 %1130
        %vm1132 = vcmp.le.f32.partialorder %v1116, %v1122
        %vm1133 = vcmp.le.f32.partialorder %v1117, %v1125
        %vm1134 = vcmp.le.f32.partialorder %v1118, %v1128
        %vm1135 = vcmp.le.f32.partialorder %v1119, %v1131
        %v1136 = vsel %vm1132, %v496, 32.0
        %v1137 = vsel %vm1133, %v496, 32.0
        %v1138 = vsel %vm1134, %v496, 32.0
        %v1139 = vsel %vm1135, %v496, 32.0
        %v1140 = vsel %vm879, %v1136, inf
        %1141 = vmin.xlane.f32.xlu0 %v1140
        %v1142 = vpop.xlane.xlu0 %1141
        %v1143 = vsel %vm879, %v1137, inf
        %1144 = vmin.xlane.f32.xlu0 %v1143
        %v1145 = vpop.xlane.xlu0 %1144
        %v1146 = vsel %vm879, %v1138, inf
        %1147 = vmin.xlane.f32.xlu0 %v1146
        %v1148 = vpop.xlane.xlu0 %1147
        %v1149 = vsel %vm879, %v1139, inf
        %1150 = vmin.xlane.f32.xlu0 %v1149
        %v1151 = vpop.xlane.xlu0 %1150
        %vm1152 = vcmp.eq.f32.partialorder %v496, %v1142
        %vm1153 = vcmp.eq.f32.partialorder %v496, %v1145
        %vm1154 = vcmp.eq.f32.partialorder %v496, %v1148
        %vm1155 = vcmp.eq.f32.partialorder %v496, %v1151
        %v1156 = vsel %vm1152, 1, 0
        %v1157 = vsel %vm1153, 1, 0
        %v1158 = vsel %vm1154, 1, 0
        %v1159 = vsel %vm1155, 1, 0
        %v1160 = vcvt.s32.f32 %v1156
        %v1161 = vcvt.s32.f32 %v1157
        %v1162 = vcvt.s32.f32 %v1158
        %v1163 = vcvt.s32.f32 %v1159
        %v1164 = vsel %vm1132, inf, %v1116
        %v1165 = vsel %vm1133, inf, %v1117
        %v1166 = vsel %vm1134, inf, %v1118
        %v1167 = vsel %vm1135, inf, %v1119
        %v1168 = vsel %vm879, %v1164, inf
        %1169 = vmin.xlane.f32.xlu0 %v1168
        %v1170 = vpop.xlane.xlu0 %1169
        %v1171 = vsel %vm879, %v1165, inf
        %1172 = vmin.xlane.f32.xlu0 %v1171
        %v1173 = vpop.xlane.xlu0 %1172
        %v1174 = vsel %vm879, %v1166, inf
        %1175 = vmin.xlane.f32.xlu0 %v1174
        %v1176 = vpop.xlane.xlu0 %1175
        %v1177 = vsel %vm879, %v1167, inf
        %1178 = vmin.xlane.f32.xlu0 %v1177
        %v1179 = vpop.xlane.xlu0 %1178
        %vm1180 = vcmp.le.f32.partialorder %v1164, %v1170
        %vm1181 = vcmp.le.f32.partialorder %v1165, %v1173
        %vm1182 = vcmp.le.f32.partialorder %v1166, %v1176
        %vm1183 = vcmp.le.f32.partialorder %v1167, %v1179
        %v1184 = vsel %vm1180, %v496, 32.0
        %v1185 = vsel %vm1181, %v496, 32.0
        %v1186 = vsel %vm1182, %v496, 32.0
        %v1187 = vsel %vm1183, %v496, 32.0
        %v1188 = vsel %vm879, %v1184, inf
        %1189 = vmin.xlane.f32.xlu0 %v1188
        %v1190 = vpop.xlane.xlu0 %1189
        %v1191 = vsel %vm879, %v1185, inf
        %1192 = vmin.xlane.f32.xlu0 %v1191
        %v1193 = vpop.xlane.xlu0 %1192
        %v1194 = vsel %vm879, %v1186, inf
        %1195 = vmin.xlane.f32.xlu0 %v1194
        %v1196 = vpop.xlane.xlu0 %1195
        %v1197 = vsel %vm879, %v1187, inf
        %1198 = vmin.xlane.f32.xlu0 %v1197
        %v1199 = vpop.xlane.xlu0 %1198
        %vm1200 = vcmp.eq.f32.partialorder %v496, %v1190
        %vm1201 = vcmp.eq.f32.partialorder %v496, %v1193
        %vm1202 = vcmp.eq.f32.partialorder %v496, %v1196
        %vm1203 = vcmp.eq.f32.partialorder %v496, %v1199
        %v1204 = vsel %vm1200, 1, 0
        %v1205 = vsel %vm1201, 1, 0
        %v1206 = vsel %vm1202, 1, 0
        %v1207 = vsel %vm1203, 1, 0
        %v1208 = vcvt.s32.f32 %v1204
        %v1209 = vcvt.s32.f32 %v1205
        %v1210 = vcvt.s32.f32 %v1206
        %v1211 = vcvt.s32.f32 %v1207
        %v1212 = vsel %vm1180, inf, %v1164
        %v1213 = vsel %vm1181, inf, %v1165
        %v1214 = vsel %vm1182, inf, %v1166
        %v1215 = vsel %vm1183, inf, %v1167
        %v1216 = vsel %vm879, %v1212, inf
        %1217 = vmin.xlane.f32.xlu0 %v1216
        %v1218 = vpop.xlane.xlu0 %1217
        %v1219 = vsel %vm879, %v1213, inf
        %1220 = vmin.xlane.f32.xlu0 %v1219
        %v1221 = vpop.xlane.xlu0 %1220
        %v1222 = vsel %vm879, %v1214, inf
        %1223 = vmin.xlane.f32.xlu0 %v1222
        %v1224 = vpop.xlane.xlu0 %1223
        %v1225 = vsel %vm879, %v1215, inf
        %1226 = vmin.xlane.f32.xlu0 %v1225
        %v1227 = vpop.xlane.xlu0 %1226
        %vm1228 = vcmp.le.f32.partialorder %v1212, %v1218
        %vm1229 = vcmp.le.f32.partialorder %v1213, %v1221
        %vm1230 = vcmp.le.f32.partialorder %v1214, %v1224
        %vm1231 = vcmp.le.f32.partialorder %v1215, %v1227
        %v1232 = vsel %vm1228, %v496, 32.0
        %v1233 = vsel %vm1229, %v496, 32.0
        %v1234 = vsel %vm1230, %v496, 32.0
        %v1235 = vsel %vm1231, %v496, 32.0
        %v1236 = vsel %vm879, %v1232, inf
        %1237 = vmin.xlane.f32.xlu0 %v1236
        %v1238 = vpop.xlane.xlu0 %1237
        %v1239 = vsel %vm879, %v1233, inf
        %1240 = vmin.xlane.f32.xlu0 %v1239
        %v1241 = vpop.xlane.xlu0 %1240
        %v1242 = vsel %vm879, %v1234, inf
        %1243 = vmin.xlane.f32.xlu0 %v1242
        %v1244 = vpop.xlane.xlu0 %1243
        %v1245 = vsel %vm879, %v1235, inf
        %1246 = vmin.xlane.f32.xlu0 %v1245
        %v1247 = vpop.xlane.xlu0 %1246
        %vm1248 = vcmp.eq.f32.partialorder %v496, %v1238
        %vm1249 = vcmp.eq.f32.partialorder %v496, %v1241
        %vm1250 = vcmp.eq.f32.partialorder %v496, %v1244
        %vm1251 = vcmp.eq.f32.partialorder %v496, %v1247
        %v1252 = vsel %vm1248, 1, 0
        %v1253 = vsel %vm1249, 1, 0
        %v1254 = vsel %vm1250, 1, 0
        %v1255 = vsel %vm1251, 1, 0
        %v1256 = vcvt.s32.f32 %v1252
        %v1257 = vcvt.s32.f32 %v1253
        %v1258 = vcvt.s32.f32 %v1254
        %v1259 = vcvt.s32.f32 %v1255
        %v1261 = vsel %vm879, %v920, 0
        %v1264 = vsel %vm879, %v921, 0
        %v1267 = vsel %vm879, %v922, 0
        %v1270 = vsel %vm879, %v923, 0
        %v1273 = vsel %vm879, %v968, 0
        %v1276 = vsel %vm879, %v969, 0
        %v1279 = vsel %vm879, %v970, 0
        %v1282 = vsel %vm879, %v971, 0
        %v1285 = vsel %vm879, %v1016, 0
        %v1288 = vsel %vm879, %v1017, 0
        %v1291 = vsel %vm879, %v1018, 0
        %v1294 = vsel %vm879, %v1019, 0
        %v1297 = vsel %vm879, %v1064, 0
        %v1300 = vsel %vm879, %v1065, 0
        %v1303 = vsel %vm879, %v1066, 0
        %v1306 = vsel %vm879, %v1067, 0
        %v1309 = vsel %vm879, %v1112, 0
        %v1312 = vsel %vm879, %v1113, 0
        %v1315 = vsel %vm879, %v1114, 0
        %v1318 = vsel %vm879, %v1115, 0
        %v1321 = vsel %vm879, %v1160, 0
        %v1324 = vsel %vm879, %v1161, 0
        %v1327 = vsel %vm879, %v1162, 0
        %v1330 = vsel %vm879, %v1163, 0
        %v1333 = vsel %vm879, %v1208, 0
        %v1336 = vsel %vm879, %v1209, 0
        %v1339 = vsel %vm879, %v1210, 0
        %v1342 = vsel %vm879, %v1211, 0
        %v1345 = vsel %vm879, %v1256, 0
        %v1348 = vsel %vm879, %v1257, 0
        %v1351 = vsel %vm879, %v1258, 0
        %v1354 = vsel %vm879, %v1259, 0
        %1356 = vmatprep.subr.mxu0 0.0
        %1357 = vmatpush1.msra.mxu0 0.0
        %1358 = vmatprep.subr.mxu0 0.0
        %1359 = vmatpush1.msra.mxu0 0.0
        %1360 = vmatprep.subr.mxu0 0.0
        %1361 = vmatpush1.msra.mxu0 0.0
        %1362 = vmatprep.subr.mxu0 0.0
        %1363 = vmatpush1.msra.mxu0 0.0
        %1364 = vmatprep.subr.mxu0 0.0
        %1365 = vmatpush1.msra.mxu0 0.0
        %1366 = vmatprep.subr.mxu0 0.0
        %1367 = vmatpush1.msra.mxu0 0.0
        %1368 = vmatprep.subr.mxu0 0.0
        %1369 = vmatpush1.msra.mxu0 0.0
        %1370 = vmatprep.subr.mxu0 0.0
        %1371 = vmatpush1.msra.mxu0 0.0
        %1372 = vmatprep.subr.mxu0 0.0
        %1373 = vmatpush1.msra.mxu0 0.0
        %1374 = vmatprep.subr.mxu0 0.0
        %1375 = vmatpush1.msra.mxu0 0.0
        %1376 = vmatprep.subr.mxu0 0.0
        %1377 = vmatpush1.msra.mxu0 0.0
        %1378 = vmatprep.subr.mxu0 0.0
        %1379 = vmatpush1.msra.mxu0 0.0
        %1380 = vmatprep.subr.mxu0 0.0
        %1381 = vmatpush1.msra.mxu0 %v876
        %1382 = vmatprep.subr.mxu0 0.0
        %1383 = vmatpush1.msra.mxu0 %v871
        %1384 = vmatprep.subr.mxu0 0.0
        %1385 = vmatpush1.msra.mxu0 %v866
        %1386 = vmatprep.subr.mxu0 0.0
        %1387 = vmatpush1.msra.mxu0 %v861
        %1388 = vmatprep.subr.mxu0 0.0
        %1389 = vmatpush2.msra.mxu0 0.0
        %1390 = vmatprep.subr.mxu0 0.0
        %1391 = vmatpush2.msra.mxu0 0.0
        %1392 = vmatprep.subr.mxu0 0.0
        %1393 = vmatpush2.msra.mxu0 0.0
        %1394 = vmatprep.subr.mxu0 0.0
        %1395 = vmatpush2.msra.mxu0 0.0
        %1396 = vmatprep.subr.mxu0 0.0
        %1397 = vmatpush2.msra.mxu0 0.0
        %1398 = vmatprep.subr.mxu0 0.0
        %1399 = vmatpush2.msra.mxu0 0.0
        %1400 = vmatprep.subr.mxu0 0.0
        %1401 = vmatpush2.msra.mxu0 0.0
        %1402 = vmatprep.subr.mxu0 0.0
        %1403 = vmatpush2.msra.mxu0 0.0
        %1404 = vmatprep.subr.mxu0 0.0
        %1405 = vmatpush2.msra.mxu0 0.0
        %1406 = vmatprep.subr.mxu0 0.0
        %1407 = vmatpush2.msra.mxu0 0.0
        %1408 = vmatprep.subr.mxu0 0.0
        %1409 = vmatpush2.msra.mxu0 0.0
        %1410 = vmatprep.subr.mxu0 0.0
        %1411 = vmatpush2.msra.mxu0 0.0
        %1412 = vmatprep.subr.mxu0 0.0
        %1413 = vmatpush2.msra.mxu0 0.0
        %1414 = vmatprep.subr.mxu0 0.0
        %1415 = vmatpush2.msra.mxu0 0.0
        %1416 = vmatprep.subr.mxu0 0.0
        %1417 = vmatpush2.msra.mxu0 0.0
        %1418 = vmatprep.subr.mxu0 0.0
        %1419 = vmatpush2.msra.mxu0 0.0
        %1420 = vmatprep.mubr.f32.mxu0 0.0
        %1421 = vmatmul.mubr.f32.gmra.mxu0 %v1261
        %v1422 = vpop.f32.mrf.mxu0
        %v1423 = vadd.f32 0.0, %v1422
        %v1424 = vpop.f32.mrf.mxu0
        %1425 = vmatprep.mubr.f32.mxu0 0.0
        %1426 = vmatmul.mubr.f32.gmra.mxu0 %v1264
        %v1427 = vpop.f32.mrf.mxu0
        %v1428 = vadd.f32 0.0, %v1427
        %v1429 = vpop.f32.mrf.mxu0
        %1430 = vmatprep.mubr.f32.mxu0 0.0
        %1431 = vmatmul.mubr.f32.gmra.mxu0 %v1267
        %v1432 = vpop.f32.mrf.mxu0
        %v1433 = vadd.f32 0.0, %v1432
        %v1434 = vpop.f32.mrf.mxu0
        %1435 = vmatprep.mubr.f32.mxu0 0.0
        %1436 = vmatmul.mubr.f32.gmra.mxu0 %v1270
        %v1437 = vpop.f32.mrf.mxu0
        %v1438 = vadd.f32 0.0, %v1437
        %v1439 = vpop.f32.mrf.mxu0
        %1440 = vmatprep.mubr.f32.mxu0 0.0
        %1441 = vmatmul.mubr.f32.gmra.mxu0 %v1273
        %v1442 = vpop.f32.mrf.mxu0
        %v1443 = vadd.f32 0.0, %v1442
        %v1444 = vpop.f32.mrf.mxu0
        %1445 = vmatprep.mubr.f32.mxu0 0.0
        %1446 = vmatmul.mubr.f32.gmra.mxu0 %v1276
        %v1447 = vpop.f32.mrf.mxu0
        %v1448 = vadd.f32 0.0, %v1447
        %v1449 = vpop.f32.mrf.mxu0
        %1450 = vmatprep.mubr.f32.mxu0 0.0
        %1451 = vmatmul.mubr.f32.gmra.mxu0 %v1279
        %v1452 = vpop.f32.mrf.mxu0
        %v1453 = vadd.f32 0.0, %v1452
        %v1454 = vpop.f32.mrf.mxu0
        %1455 = vmatprep.mubr.f32.mxu0 0.0
        %1456 = vmatmul.mubr.f32.gmra.mxu0 %v1282
        %v1457 = vpop.f32.mrf.mxu0
        %v1458 = vadd.f32 0.0, %v1457
        %v1459 = vpop.f32.mrf.mxu0
        %1460 = vmatprep.mubr.f32.mxu0 0.0
        %1461 = vmatmul.mubr.f32.gmra.mxu0 %v1285
        %v1462 = vpop.f32.mrf.mxu0
        %v1463 = vadd.f32 0.0, %v1462
        %v1464 = vpop.f32.mrf.mxu0
        %1465 = vmatprep.mubr.f32.mxu0 0.0
        %1466 = vmatmul.mubr.f32.gmra.mxu0 %v1288
        %v1467 = vpop.f32.mrf.mxu0
        %v1468 = vadd.f32 0.0, %v1467
        %v1469 = vpop.f32.mrf.mxu0
        %1470 = vmatprep.mubr.f32.mxu0 0.0
        %1471 = vmatmul.mubr.f32.gmra.mxu0 %v1291
        %v1472 = vpop.f32.mrf.mxu0
        %v1473 = vadd.f32 0.0, %v1472
        %v1474 = vpop.f32.mrf.mxu0
        %1475 = vmatprep.mubr.f32.mxu0 0.0
        %1476 = vmatmul.mubr.f32.gmra.mxu0 %v1294
        %v1477 = vpop.f32.mrf.mxu0
        %v1478 = vadd.f32 0.0, %v1477
        %v1479 = vpop.f32.mrf.mxu0
        %1480 = vmatprep.mubr.f32.mxu0 0.0
        %1481 = vmatmul.mubr.f32.gmra.mxu0 %v1297
        %v1482 = vpop.f32.mrf.mxu0
        %v1483 = vadd.f32 0.0, %v1482
        %v1484 = vpop.f32.mrf.mxu0
        %1485 = vmatprep.mubr.f32.mxu0 0.0
        %1486 = vmatmul.mubr.f32.gmra.mxu0 %v1300
        %v1487 = vpop.f32.mrf.mxu0
        %v1488 = vadd.f32 0.0, %v1487
        %v1489 = vpop.f32.mrf.mxu0
        %1490 = vmatprep.mubr.f32.mxu0 0.0
        %1491 = vmatmul.mubr.f32.gmra.mxu0 %v1303
        %v1492 = vpop.f32.mrf.mxu0
        %v1493 = vadd.f32 0.0, %v1492
        %v1494 = vpop.f32.mrf.mxu0
        %1495 = vmatprep.mubr.f32.mxu0 0.0
        %1496 = vmatmul.mubr.f32.gmra.mxu0 %v1306
        %v1497 = vpop.f32.mrf.mxu0
        %v1498 = vadd.f32 0.0, %v1497
        %v1499 = vpop.f32.mrf.mxu0
        %1500 = vmatprep.mubr.f32.mxu0 0.0
        %1501 = vmatmul.mubr.f32.gmra.mxu0 %v1309
        %v1502 = vpop.f32.mrf.mxu0
        %v1503 = vadd.f32 0.0, %v1502
        %v1504 = vpop.f32.mrf.mxu0
        %1505 = vmatprep.mubr.f32.mxu0 0.0
        %1506 = vmatmul.mubr.f32.gmra.mxu0 %v1312
        %v1507 = vpop.f32.mrf.mxu0
        %v1508 = vadd.f32 0.0, %v1507
        %v1509 = vpop.f32.mrf.mxu0
        %1510 = vmatprep.mubr.f32.mxu0 0.0
        %1511 = vmatmul.mubr.f32.gmra.mxu0 %v1315
        %v1512 = vpop.f32.mrf.mxu0
        %v1513 = vadd.f32 0.0, %v1512
        %v1514 = vpop.f32.mrf.mxu0
        %1515 = vmatprep.mubr.f32.mxu0 0.0
        %1516 = vmatmul.mubr.f32.gmra.mxu0 %v1318
        %v1517 = vpop.f32.mrf.mxu0
        %v1518 = vadd.f32 0.0, %v1517
        %v1519 = vpop.f32.mrf.mxu0
        %1520 = vmatprep.mubr.f32.mxu0 0.0
        %1521 = vmatmul.mubr.f32.gmra.mxu0 %v1321
        %v1522 = vpop.f32.mrf.mxu0
        %v1523 = vadd.f32 0.0, %v1522
        %v1524 = vpop.f32.mrf.mxu0
        %1525 = vmatprep.mubr.f32.mxu0 0.0
        %1526 = vmatmul.mubr.f32.gmra.mxu0 %v1324
        %v1527 = vpop.f32.mrf.mxu0
        %v1528 = vadd.f32 0.0, %v1527
        %v1529 = vpop.f32.mrf.mxu0
        %1530 = vmatprep.mubr.f32.mxu0 0.0
        %1531 = vmatmul.mubr.f32.gmra.mxu0 %v1327
        %v1532 = vpop.f32.mrf.mxu0
        %v1533 = vadd.f32 0.0, %v1532
        %v1534 = vpop.f32.mrf.mxu0
        %1535 = vmatprep.mubr.f32.mxu0 0.0
        %1536 = vmatmul.mubr.f32.gmra.mxu0 %v1330
        %v1537 = vpop.f32.mrf.mxu0
        %v1538 = vadd.f32 0.0, %v1537
        %v1539 = vpop.f32.mrf.mxu0
        %1540 = vmatprep.mubr.f32.mxu0 0.0
        %1541 = vmatmul.mubr.f32.gmra.mxu0 %v1333
        %v1542 = vpop.f32.mrf.mxu0
        %v1543 = vadd.f32 0.0, %v1542
        %v1544 = vpop.f32.mrf.mxu0
        %1545 = vmatprep.mubr.f32.mxu0 0.0
        %1546 = vmatmul.mubr.f32.gmra.mxu0 %v1336
        %v1547 = vpop.f32.mrf.mxu0
        %v1548 = vadd.f32 0.0, %v1547
        %v1549 = vpop.f32.mrf.mxu0
        %1550 = vmatprep.mubr.f32.mxu0 0.0
        %1551 = vmatmul.mubr.f32.gmra.mxu0 %v1339
        %v1552 = vpop.f32.mrf.mxu0
        %v1553 = vadd.f32 0.0, %v1552
        %v1554 = vpop.f32.mrf.mxu0
        %1555 = vmatprep.mubr.f32.mxu0 0.0
        %1556 = vmatmul.mubr.f32.gmra.mxu0 %v1342
        %v1557 = vpop.f32.mrf.mxu0
        %v1558 = vadd.f32 0.0, %v1557
        %v1559 = vpop.f32.mrf.mxu0
        %1560 = vmatprep.mubr.f32.mxu0 0.0
        %1561 = vmatmul.mubr.f32.gmra.mxu0 %v1345
        %v1562 = vpop.f32.mrf.mxu0
        %v1563 = vadd.f32 0.0, %v1562
        %v1564 = vpop.f32.mrf.mxu0
        %1565 = vmatprep.mubr.f32.mxu0 0.0
        %1566 = vmatmul.mubr.f32.gmra.mxu0 %v1348
        %v1567 = vpop.f32.mrf.mxu0
        %v1568 = vadd.f32 0.0, %v1567
        %v1569 = vpop.f32.mrf.mxu0
        %1570 = vmatprep.mubr.f32.mxu0 0.0
        %1571 = vmatmul.mubr.f32.gmra.mxu0 %v1351
        %v1572 = vpop.f32.mrf.mxu0
        %v1573 = vadd.f32 0.0, %v1572
        %v1574 = vpop.f32.mrf.mxu0
        %1575 = vmatprep.mubr.f32.mxu0 0.0
        %1576 = vmatmul.mubr.f32.gmra.mxu0 %v1354
        %v1577 = vpop.f32.mrf.mxu0
        %v1578 = vadd.f32 0.0, %v1577
        %v1579 = vpop.f32.mrf.mxu0
        %1580 = vdwg.mxu0
        %v1581 = vmax.f32 %v1423, %v1443
        %v1582 = vmax.f32 %v1428, %v1448
        %v1583 = vmax.f32 %v1433, %v1453
        %v1584 = vmax.f32 %v1438, %v1458
        %v1585 = vmax.f32 %v1581, %v1463
        %v1586 = vmax.f32 %v1582, %v1468
        %v1587 = vmax.f32 %v1583, %v1473
        %v1588 = vmax.f32 %v1584, %v1478
        %v1589 = vmax.f32 %v1585, %v1483
        %v1590 = vmax.f32 %v1586, %v1488
        %v1591 = vmax.f32 %v1587, %v1493
        %v1592 = vmax.f32 %v1588, %v1498
        %v1593 = vmax.f32 %v1589, %v1503
        %v1594 = vmax.f32 %v1590, %v1508
        %v1595 = vmax.f32 %v1591, %v1513
        %v1596 = vmax.f32 %v1592, %v1518
        %v1597 = vmax.f32 %v1593, %v1523
        %v1598 = vmax.f32 %v1594, %v1528
        %v1599 = vmax.f32 %v1595, %v1533
        %v1600 = vmax.f32 %v1596, %v1538
        %v1601 = vmax.f32 %v1597, %v1543
        %v1602 = vmax.f32 %v1598, %v1548
        %v1603 = vmax.f32 %v1599, %v1553
        %v1604 = vmax.f32 %v1600, %v1558
        %v1605 = vmax.f32 %v1601, %v1563
        %v1606 = vmax.f32 %v1602, %v1568
        %v1607 = vmax.f32 %v1603, %v1573
        %v1608 = vmax.f32 %v1604, %v1578
        %v1609 = vadd.f32 %v776, %v1605
        %v1610 = vadd.f32 %v781, %v1606
        %v1611 = vadd.f32 %v786, %v1607
        %v1612 = vadd.f32 %v791, %v1608
        %v1613 = vmax.f32 %v1609, 0.0
        %v1614 = vmax.f32 %v1610, 0.0
        %v1615 = vmax.f32 %v1611, 0.0
        %v1616 = vmax.f32 %v1612, 0.0
        %v1617 = vld [vmem:[%s4] sm:$0xff]
        %v1618 = vld [vmem:[%s4 + $0x8] sm:$0xff]
        %v1619 = vld [vmem:[%s4 + $0x10] sm:$0xff]
        %v1620 = vld [vmem:[%s4 + $0x18] sm:$0xff]
        %v1621 = vld [vmem:[%s5] sm:$0xff]
        %v1622 = vld [vmem:[%s5 + $0x8] sm:$0xff]
        %v1623 = vld [vmem:[%s5 + $0x10] sm:$0xff]
        %v1624 = vld [vmem:[%s5 + $0x18] sm:$0xff]
        %v1625 = vld [vmem:[%s6] sm:$0x1]
        %v1627 = vsel %vm879, %v1613, 0
        %v1630 = vsel %vm879, %v1614, 0
        %v1633 = vsel %vm879, %v1615, 0
        %v1636 = vsel %vm879, %v1616, 0
        %1638 = vmatprep.subr.mxu0 0.0
        %1639 = vmatpush1.xpose.msra.mxu0 0.0
        %1640 = vmatprep.subr.mxu0 0.0
        %1641 = vmatpush1.xpose.msra.mxu0 0.0
        %1642 = vmatprep.subr.mxu0 0.0
        %1643 = vmatpush1.xpose.msra.mxu0 0.0
        %1644 = vmatprep.subr.mxu0 0.0
        %1645 = vmatpush1.xpose.msra.mxu0 0.0
        %1646 = vmatprep.subr.mxu0 0.0
        %1647 = vmatpush1.xpose.msra.mxu0 0.0
        %1648 = vmatprep.subr.mxu0 0.0
        %1649 = vmatpush1.xpose.msra.mxu0 0.0
        %1650 = vmatprep.subr.mxu0 0.0
        %1651 = vmatpush1.xpose.msra.mxu0 0.0
        %1652 = vmatprep.subr.mxu0 0.0
        %1653 = vmatpush1.xpose.msra.mxu0 0.0
        %1654 = vmatprep.subr.mxu0 0.0
        %1655 = vmatpush1.xpose.msra.mxu0 0.0
        %1656 = vmatprep.subr.mxu0 0.0
        %1657 = vmatpush1.xpose.msra.mxu0 0.0
        %1658 = vmatprep.subr.mxu0 0.0
        %1659 = vmatpush1.xpose.msra.mxu0 0.0
        %1660 = vmatprep.subr.mxu0 0.0
        %1661 = vmatpush1.xpose.msra.mxu0 0.0
        %1662 = vmatprep.subr.mxu0 0.0
        %1663 = vmatpush1.xpose.msra.mxu0 %v1636
        %1664 = vmatprep.subr.mxu0 0.0
        %1665 = vmatpush1.xpose.msra.mxu0 %v1633
        %1666 = vmatprep.subr.mxu0 0.0
        %1667 = vmatpush1.xpose.msra.mxu0 %v1630
        %1668 = vmatprep.subr.mxu0 0.0
        %1669 = vmatpush1.xpose.msra.mxu0 %v1627
        %1670 = vmatprep.subr.mxu0 0.0
        %1671 = vmatpush2.xpose.msra.mxu0 0.0
        %1672 = vmatprep.subr.mxu0 0.0
        %1673 = vmatpush2.xpose.msra.mxu0 0.0
        %1674 = vmatprep.subr.mxu0 0.0
        %1675 = vmatpush2.xpose.msra.mxu0 0.0
        %1676 = vmatprep.subr.mxu0 0.0
        %1677 = vmatpush2.xpose.msra.mxu0 0.0
        %1678 = vmatprep.subr.mxu0 0.0
        %1679 = vmatpush2.xpose.msra.mxu0 0.0
        %1680 = vmatprep.subr.mxu0 0.0
        %1681 = vmatpush2.xpose.msra.mxu0 0.0
        %1682 = vmatprep.subr.mxu0 0.0
        %1683 = vmatpush2.xpose.msra.mxu0 0.0
        %1684 = vmatprep.subr.mxu0 0.0
        %1685 = vmatpush2.xpose.msra.mxu0 0.0
        %1686 = vmatprep.subr.mxu0 0.0
        %1687 = vmatpush2.xpose.msra.mxu0 0.0
        %1688 = vmatprep.subr.mxu0 0.0
        %1689 = vmatpush2.xpose.msra.mxu0 0.0
        %1690 = vmatprep.subr.mxu0 0.0
        %1691 = vmatpush2.xpose.msra.mxu0 0.0
        %1692 = vmatprep.subr.mxu0 0.0
        %1693 = vmatpush2.xpose.msra.mxu0 0.0
        %1694 = vmatprep.subr.mxu0 0.0
        %1695 = vmatpush2.xpose.msra.mxu0 0.0
        %1696 = vmatprep.subr.mxu0 0.0
        %1697 = vmatpush2.xpose.msra.mxu0 0.0
        %1698 = vmatprep.subr.mxu0 0.0
        %1699 = vmatpush2.xpose.msra.mxu0 0.0
        %1700 = vmatprep.subr.mxu0 0.0
        %1701 = vmatpush2.xpose.msra.mxu0 0.0
        %1702 = vmatprep.mubr.f32.mxu0 0.0
        %1703 = vmatmul.mubr.f32.gmra.mxu0 %v1627
        %v1704 = vpop.f32.mrf.mxu0
        %v1705 = vadd.f32 0.0, %v1704
        %v1706 = vpop.f32.mrf.mxu0
        %1707 = vmatprep.mubr.f32.mxu0 0.0
        %1708 = vmatmul.mubr.f32.gmra.mxu0 %v1630
        %v1709 = vpop.f32.mrf.mxu0
        %v1710 = vadd.f32 0.0, %v1709
        %v1711 = vpop.f32.mrf.mxu0
        %1712 = vmatprep.mubr.f32.mxu0 0.0
        %1713 = vmatmul.mubr.f32.gmra.mxu0 %v1633
        %v1714 = vpop.f32.mrf.mxu0
        %v1715 = vadd.f32 0.0, %v1714
        %v1716 = vpop.f32.mrf.mxu0
        %1717 = vmatprep.mubr.f32.mxu0 0.0
        %1718 = vmatmul.mubr.f32.gmra.mxu0 %v1636
        %v1719 = vpop.f32.mrf.mxu0
        %v1720 = vadd.f32 0.0, %v1719
        %v1721 = vpop.f32.mrf.mxu0
        %1722 = vdwg.mxu0
        %v1723 = vmul.f32 %v1613, %v1613
        %v1724 = vmul.f32 %v1614, %v1614
        %v1725 = vmul.f32 %v1615, %v1615
        %v1726 = vmul.f32 %v1616, %v1616
        %v1727 = vsel %vm879, 1.0, 0
        %v1730 = vsel %vm879, %v1723, 0
        %v1733 = vsel %vm879, %v1724, 0
        %v1736 = vsel %vm879, %v1725, 0
        %v1739 = vsel %vm879, %v1726, 0
        %1741 = vmatprep.subr.mxu0 0.0
        %1742 = vmatpush1.xpose.msra.mxu0 0.0
        %1743 = vmatprep.subr.mxu0 0.0
        %1744 = vmatpush1.xpose.msra.mxu0 0.0
        %1745 = vmatprep.subr.mxu0 0.0
        %1746 = vmatpush1.xpose.msra.mxu0 0.0
        %1747 = vmatprep.subr.mxu0 0.0
        %1748 = vmatpush1.xpose.msra.mxu0 0.0
        %1749 = vmatprep.subr.mxu0 0.0
        %1750 = vmatpush1.xpose.msra.mxu0 0.0
        %1751 = vmatprep.subr.mxu0 0.0
        %1752 = vmatpush1.xpose.msra.mxu0 0.0
        %1753 = vmatprep.subr.mxu0 0.0
        %1754 = vmatpush1.xpose.msra.mxu0 0.0
        %1755 = vmatprep.subr.mxu0 0.0
        %1756 = vmatpush1.xpose.msra.mxu0 0.0
        %1757 = vmatprep.subr.mxu0 0.0
        %1758 = vmatpush1.xpose.msra.mxu0 0.0
        %1759 = vmatprep.subr.mxu0 0.0
        %1760 = vmatpush1.xpose.msra.mxu0 0.0
        %1761 = vmatprep.subr.mxu0 0.0
        %1762 = vmatpush1.xpose.msra.mxu0 0.0
        %1763 = vmatprep.subr.mxu0 0.0
        %1764 = vmatpush1.xpose.msra.mxu0 0.0
        %1765 = vmatprep.subr.mxu0 0.0
        %1766 = vmatpush1.xpose.msra.mxu0 %v1739
        %1767 = vmatprep.subr.mxu0 0.0
        %1768 = vmatpush1.xpose.msra.mxu0 %v1736
        %1769 = vmatprep.subr.mxu0 0.0
        %1770 = vmatpush1.xpose.msra.mxu0 %v1733
        %1771 = vmatprep.subr.mxu0 0.0
        %1772 = vmatpush1.xpose.msra.mxu0 %v1730
        %1773 = vmatprep.subr.mxu0 0.0
        %1774 = vmatpush2.xpose.msra.mxu0 0.0
        %1775 = vmatprep.subr.mxu0 0.0
        %1776 = vmatpush2.xpose.msra.mxu0 0.0
        %1777 = vmatprep.subr.mxu0 0.0
        %1778 = vmatpush2.xpose.msra.mxu0 0.0
        %1779 = vmatprep.subr.mxu0 0.0
        %1780 = vmatpush2.xpose.msra.mxu0 0.0
        %1781 = vmatprep.subr.mxu0 0.0
        %1782 = vmatpush2.xpose.msra.mxu0 0.0
        %1783 = vmatprep.subr.mxu0 0.0
        %1784 = vmatpush2.xpose.msra.mxu0 0.0
        %1785 = vmatprep.subr.mxu0 0.0
        %1786 = vmatpush2.xpose.msra.mxu0 0.0
        %1787 = vmatprep.subr.mxu0 0.0
        %1788 = vmatpush2.xpose.msra.mxu0 0.0
        %1789 = vmatprep.subr.mxu0 0.0
        %1790 = vmatpush2.xpose.msra.mxu0 0.0
        %1791 = vmatprep.subr.mxu0 0.0
        %1792 = vmatpush2.xpose.msra.mxu0 0.0
        %1793 = vmatprep.subr.mxu0 0.0
        %1794 = vmatpush2.xpose.msra.mxu0 0.0
        %1795 = vmatprep.subr.mxu0 0.0
        %1796 = vmatpush2.xpose.msra.mxu0 0.0
        %1797 = vmatprep.subr.mxu0 0.0
        %1798 = vmatpush2.xpose.msra.mxu0 0.0
        %1799 = vmatprep.subr.mxu0 0.0
        %1800 = vmatpush2.xpose.msra.mxu0 0.0
        %1801 = vmatprep.subr.mxu0 0.0
        %1802 = vmatpush2.xpose.msra.mxu0 0.0
        %1803 = vmatprep.subr.mxu0 0.0
        %1804 = vmatpush2.xpose.msra.mxu0 0.0
        %1805 = vmatprep.mubr.f32.mxu0 0.0
        %1806 = vmatmul.mubr.f32.gmra.mxu0 %v1727
        %v1807 = vpop.f32.mrf.mxu0
        %v1808 = vadd.f32 0.0, %v1807
        %v1809 = vpop.f32.mrf.mxu0
        %1810 = vdwg.mxu0
        %v1811 = vmul.f32 %v1705, 2.0
        %v1812 = vmul.f32 %v1710, 2.0
        %v1813 = vmul.f32 %v1715, 2.0
        %v1814 = vmul.f32 %v1720, 2.0
        %v1815 = vlaneseq
        %v1816 = vshrl.u32 %v1815, 7
        %v1817 = vsub.s32 0, %v1816
        %v1818 = vrot.slane %v1808, %v1817
        %v1819 = vsub.f32 %v1818, %v1811
        %v1820 = vsub.f32 %v1818, %v1812
        %v1821 = vsub.f32 %v1818, %v1813
        %v1822 = vsub.f32 %v1818, %v1814
        %v1824 = vlaneseq
        %v1825 = vshrl.u32 %v1824, 7
        %v1826 = vsub.s32 0, %v1825
        %v1827 = vrot.slane %v1625, %v1826
        %1829 = vmatprep.subr.mxu0 0.0
        %1830 = vmatpush1.msra.mxu0 0.0
        %1831 = vmatprep.subr.mxu0 0.0
        %1832 = vmatpush1.msra.mxu0 0.0
        %1833 = vmatprep.subr.mxu0 0.0
        %1834 = vmatpush1.msra.mxu0 0.0
        %1835 = vmatprep.subr.mxu0 0.0
        %1836 = vmatpush1.msra.mxu0 0.0
        %1837 = vmatprep.subr.mxu0 0.0
        %1838 = vmatpush1.msra.mxu0 0.0
        %1839 = vmatprep.subr.mxu0 0.0
        %1840 = vmatpush1.msra.mxu0 0.0
        %1841 = vmatprep.subr.mxu0 0.0
        %1842 = vmatpush1.msra.mxu0 0.0
        %1843 = vmatprep.subr.mxu0 0.0
        %1844 = vmatpush1.msra.mxu0 0.0
        %1845 = vmatprep.subr.mxu0 0.0
        %1846 = vmatpush1.msra.mxu0 0.0
        %1847 = vmatprep.subr.mxu0 0.0
        %1848 = vmatpush1.msra.mxu0 0.0
        %1849 = vmatprep.subr.mxu0 0.0
        %1850 = vmatpush1.msra.mxu0 0.0
        %1851 = vmatprep.subr.mxu0 0.0
        %1852 = vmatpush1.msra.mxu0 0.0
        %1853 = vmatprep.subr.mxu0 0.0
        %1854 = vmatpush1.msra.mxu0 %v1620
        %1855 = vmatprep.subr.mxu0 0.0
        %1856 = vmatpush1.msra.mxu0 %v1619
        %1857 = vmatprep.subr.mxu0 0.0
        %1858 = vmatpush1.msra.mxu0 %v1618
        %1859 = vmatprep.subr.mxu0 0.0
        %1860 = vmatpush1.msra.mxu0 %v1617
        %1861 = vmatprep.subr.mxu0 0.0
        %1862 = vmatpush2.msra.mxu0 0.0
        %1863 = vmatprep.subr.mxu0 0.0
        %1864 = vmatpush2.msra.mxu0 0.0
        %1865 = vmatprep.subr.mxu0 0.0
        %1866 = vmatpush2.msra.mxu0 0.0
        %1867 = vmatprep.subr.mxu0 0.0
        %1868 = vmatpush2.msra.mxu0 0.0
        %1869 = vmatprep.subr.mxu0 0.0
        %1870 = vmatpush2.msra.mxu0 0.0
        %1871 = vmatprep.subr.mxu0 0.0
        %1872 = vmatpush2.msra.mxu0 0.0
        %1873 = vmatprep.subr.mxu0 0.0
        %1874 = vmatpush2.msra.mxu0 0.0
        %1875 = vmatprep.subr.mxu0 0.0
        %1876 = vmatpush2.msra.mxu0 0.0
        %1877 = vmatprep.subr.mxu0 0.0
        %1878 = vmatpush2.msra.mxu0 0.0
        %1879 = vmatprep.subr.mxu0 0.0
        %1880 = vmatpush2.msra.mxu0 0.0
        %1881 = vmatprep.subr.mxu0 0.0
        %1882 = vmatpush2.msra.mxu0 0.0
        %1883 = vmatprep.subr.mxu0 0.0
        %1884 = vmatpush2.msra.mxu0 0.0
        %1885 = vmatprep.subr.mxu0 0.0
        %1886 = vmatpush2.msra.mxu0 0.0
        %1887 = vmatprep.subr.mxu0 0.0
        %1888 = vmatpush2.msra.mxu0 0.0
        %1889 = vmatprep.subr.mxu0 0.0
        %1890 = vmatpush2.msra.mxu0 0.0
        %1891 = vmatprep.subr.mxu0 0.0
        %1892 = vmatpush2.msra.mxu0 0.0
        %1893 = vmatprep.mubr.f32.mxu0 0.0
        %1894 = vmatmul.mubr.f32.gmra.mxu0 %v1627
        %v1895 = vpop.f32.mrf.mxu0
        %v1896 = vadd.f32 %v1827, %v1895
        %v1897 = vpop.f32.mrf.mxu0
        %1898 = vmatprep.mubr.f32.mxu0 0.0
        %1899 = vmatmul.mubr.f32.gmra.mxu0 %v1630
        %v1900 = vpop.f32.mrf.mxu0
        %v1901 = vadd.f32 %v1827, %v1900
        %v1902 = vpop.f32.mrf.mxu0
        %1903 = vmatprep.mubr.f32.mxu0 0.0
        %1904 = vmatmul.mubr.f32.gmra.mxu0 %v1633
        %v1905 = vpop.f32.mrf.mxu0
        %v1906 = vadd.f32 %v1827, %v1905
        %v1907 = vpop.f32.mrf.mxu0
        %1908 = vmatprep.mubr.f32.mxu0 0.0
        %1909 = vmatmul.mubr.f32.gmra.mxu0 %v1636
        %v1910 = vpop.f32.mrf.mxu0
        %v1911 = vadd.f32 %v1827, %v1910
        %v1912 = vpop.f32.mrf.mxu0
        %1913 = vdwg.mxu0
        %1914 = vmatprep.subr.mxu0 0.0
        %1915 = vmatpush1.msra.mxu0 0.0
        %1916 = vmatprep.subr.mxu0 0.0
        %1917 = vmatpush1.msra.mxu0 0.0
        %1918 = vmatprep.subr.mxu0 0.0
        %1919 = vmatpush1.msra.mxu0 0.0
        %1920 = vmatprep.subr.mxu0 0.0
        %1921 = vmatpush1.msra.mxu0 0.0
        %1922 = vmatprep.subr.mxu0 0.0
        %1923 = vmatpush1.msra.mxu0 0.0
        %1924 = vmatprep.subr.mxu0 0.0
        %1925 = vmatpush1.msra.mxu0 0.0
        %1926 = vmatprep.subr.mxu0 0.0
        %1927 = vmatpush1.msra.mxu0 0.0
        %1928 = vmatprep.subr.mxu0 0.0
        %1929 = vmatpush1.msra.mxu0 0.0
        %1930 = vmatprep.subr.mxu0 0.0
        %1931 = vmatpush1.msra.mxu0 0.0
        %1932 = vmatprep.subr.mxu0 0.0
        %1933 = vmatpush1.msra.mxu0 0.0
        %1934 = vmatprep.subr.mxu0 0.0
        %1935 = vmatpush1.msra.mxu0 0.0
        %1936 = vmatprep.subr.mxu0 0.0
        %1937 = vmatpush1.msra.mxu0 0.0
        %1938 = vmatprep.subr.mxu0 0.0
        %1939 = vmatpush1.msra.mxu0 %v1624
        %1940 = vmatprep.subr.mxu0 0.0
        %1941 = vmatpush1.msra.mxu0 %v1623
        %1942 = vmatprep.subr.mxu0 0.0
        %1943 = vmatpush1.msra.mxu0 %v1622
        %1944 = vmatprep.subr.mxu0 0.0
        %1945 = vmatpush1.msra.mxu0 %v1621
        %1946 = vmatprep.subr.mxu0 0.0
        %1947 = vmatpush2.msra.mxu0 0.0
        %1948 = vmatprep.subr.mxu0 0.0
        %1949 = vmatpush2.msra.mxu0 0.0
        %1950 = vmatprep.subr.mxu0 0.0
        %1951 = vmatpush2.msra.mxu0 0.0
        %1952 = vmatprep.subr.mxu0 0.0
        %1953 = vmatpush2.msra.mxu0 0.0
        %1954 = vmatprep.subr.mxu0 0.0
        %1955 = vmatpush2.msra.mxu0 0.0
        %1956 = vmatprep.subr.mxu0 0.0
        %1957 = vmatpush2.msra.mxu0 0.0
        %1958 = vmatprep.subr.mxu0 0.0
        %1959 = vmatpush2.msra.mxu0 0.0
        %1960 = vmatprep.subr.mxu0 0.0
        %1961 = vmatpush2.msra.mxu0 0.0
        %1962 = vmatprep.subr.mxu0 0.0
        %1963 = vmatpush2.msra.mxu0 0.0
        %1964 = vmatprep.subr.mxu0 0.0
        %1965 = vmatpush2.msra.mxu0 0.0
        %1966 = vmatprep.subr.mxu0 0.0
        %1967 = vmatpush2.msra.mxu0 0.0
        %1968 = vmatprep.subr.mxu0 0.0
        %1969 = vmatpush2.msra.mxu0 0.0
        %1970 = vmatprep.subr.mxu0 0.0
        %1971 = vmatpush2.msra.mxu0 0.0
        %1972 = vmatprep.subr.mxu0 0.0
        %1973 = vmatpush2.msra.mxu0 0.0
        %1974 = vmatprep.subr.mxu0 0.0
        %1975 = vmatpush2.msra.mxu0 0.0
        %1976 = vmatprep.subr.mxu0 0.0
        %1977 = vmatpush2.msra.mxu0 0.0
        %1978 = vmatprep.mubr.f32.mxu0 0.0
        %1979 = vmatmul.mubr.f32.gmra.mxu0 %v1627
        %v1980 = vpop.f32.mrf.mxu0
        %v1981 = vadd.f32 0.0, %v1980
        %v1982 = vpop.f32.mrf.mxu0
        %1983 = vmatprep.mubr.f32.mxu0 0.0
        %1984 = vmatmul.mubr.f32.gmra.mxu0 %v1630
        %v1985 = vpop.f32.mrf.mxu0
        %v1986 = vadd.f32 0.0, %v1985
        %v1987 = vpop.f32.mrf.mxu0
        %1988 = vmatprep.mubr.f32.mxu0 0.0
        %1989 = vmatmul.mubr.f32.gmra.mxu0 %v1633
        %v1990 = vpop.f32.mrf.mxu0
        %v1991 = vadd.f32 0.0, %v1990
        %v1992 = vpop.f32.mrf.mxu0
        %1993 = vmatprep.mubr.f32.mxu0 0.0
        %1994 = vmatmul.mubr.f32.gmra.mxu0 %v1636
        %v1995 = vpop.f32.mrf.mxu0
        %v1996 = vadd.f32 0.0, %v1995
        %v1997 = vpop.f32.mrf.mxu0
        %1998 = vdwg.mxu0
        %v1999 = vsel %vm879, %v1819, inf
        %2000 = vmin.xlane.f32.xlu0 %v1999
        %v2001 = vpop.xlane.xlu0 %2000
        %v2002 = vsel %vm879, %v1820, inf
        %2003 = vmin.xlane.f32.xlu0 %v2002
        %v2004 = vpop.xlane.xlu0 %2003
        %v2005 = vsel %vm879, %v1821, inf
        %2006 = vmin.xlane.f32.xlu0 %v2005
        %v2007 = vpop.xlane.xlu0 %2006
        %v2008 = vsel %vm879, %v1822, inf
        %2009 = vmin.xlane.f32.xlu0 %v2008
        %v2010 = vpop.xlane.xlu0 %2009
        %vm2011 = vcmp.le.f32.partialorder %v1819, %v2001
        %vm2012 = vcmp.le.f32.partialorder %v1820, %v2004
        %vm2013 = vcmp.le.f32.partialorder %v1821, %v2007
        %vm2014 = vcmp.le.f32.partialorder %v1822, %v2010
        %v2015 = vsel %vm2011, %v496, 32.0
        %v2016 = vsel %vm2012, %v496, 32.0
        %v2017 = vsel %vm2013, %v496, 32.0
        %v2018 = vsel %vm2014, %v496, 32.0
        %v2019 = vsel %vm879, %v2015, inf
        %2020 = vmin.xlane.f32.xlu0 %v2019
        %v2021 = vpop.xlane.xlu0 %2020
        %v2022 = vsel %vm879, %v2016, inf
        %2023 = vmin.xlane.f32.xlu0 %v2022
        %v2024 = vpop.xlane.xlu0 %2023
        %v2025 = vsel %vm879, %v2017, inf
        %2026 = vmin.xlane.f32.xlu0 %v2025
        %v2027 = vpop.xlane.xlu0 %2026
        %v2028 = vsel %vm879, %v2018, inf
        %2029 = vmin.xlane.f32.xlu0 %v2028
        %v2030 = vpop.xlane.xlu0 %2029
        %vm2031 = vcmp.eq.f32.partialorder %v496, %v2021
        %vm2032 = vcmp.eq.f32.partialorder %v496, %v2024
        %vm2033 = vcmp.eq.f32.partialorder %v496, %v2027
        %vm2034 = vcmp.eq.f32.partialorder %v496, %v2030
        %v2035 = vsel %vm2031, 1, 0
        %v2036 = vsel %vm2032, 1, 0
        %v2037 = vsel %vm2033, 1, 0
        %v2038 = vsel %vm2034, 1, 0
        %v2039 = vcvt.s32.f32 %v2035
        %v2040 = vcvt.s32.f32 %v2036
        %v2041 = vcvt.s32.f32 %v2037
        %v2042 = vcvt.s32.f32 %v2038
        %v2043 = vsel %vm2011, inf, %v1819
        %v2044 = vsel %vm2012, inf, %v1820
        %v2045 = vsel %vm2013, inf, %v1821
        %v2046 = vsel %vm2014, inf, %v1822
        %v2047 = vsel %vm879, %v2043, inf
        %2048 = vmin.xlane.f32.xlu0 %v2047
        %v2049 = vpop.xlane.xlu0 %2048
        %v2050 = vsel %vm879, %v2044, inf
        %2051 = vmin.xlane.f32.xlu0 %v2050
        %v2052 = vpop.xlane.xlu0 %2051
        %v2053 = vsel %vm879, %v2045, inf
        %2054 = vmin.xlane.f32.xlu0 %v2053
        %v2055 = vpop.xlane.xlu0 %2054
        %v2056 = vsel %vm879, %v2046, inf
        %2057 = vmin.xlane.f32.xlu0 %v2056
        %v2058 = vpop.xlane.xlu0 %2057
        %vm2059 = vcmp.le.f32.partialorder %v2043, %v2049
        %vm2060 = vcmp.le.f32.partialorder %v2044, %v2052
        %vm2061 = vcmp.le.f32.partialorder %v2045, %v2055
        %vm2062 = vcmp.le.f32.partialorder %v2046, %v2058
        %v2063 = vsel %vm2059, %v496, 32.0
        %v2064 = vsel %vm2060, %v496, 32.0
        %v2065 = vsel %vm2061, %v496, 32.0
        %v2066 = vsel %vm2062, %v496, 32.0
        %v2067 = vsel %vm879, %v2063, inf
        %2068 = vmin.xlane.f32.xlu0 %v2067
        %v2069 = vpop.xlane.xlu0 %2068
        %v2070 = vsel %vm879, %v2064, inf
        %2071 = vmin.xlane.f32.xlu0 %v2070
        %v2072 = vpop.xlane.xlu0 %2071
        %v2073 = vsel %vm879, %v2065, inf
        %2074 = vmin.xlane.f32.xlu0 %v2073
        %v2075 = vpop.xlane.xlu0 %2074
        %v2076 = vsel %vm879, %v2066, inf
        %2077 = vmin.xlane.f32.xlu0 %v2076
        %v2078 = vpop.xlane.xlu0 %2077
        %vm2079 = vcmp.eq.f32.partialorder %v496, %v2069
        %vm2080 = vcmp.eq.f32.partialorder %v496, %v2072
        %vm2081 = vcmp.eq.f32.partialorder %v496, %v2075
        %vm2082 = vcmp.eq.f32.partialorder %v496, %v2078
        %v2083 = vsel %vm2079, 1, 0
        %v2084 = vsel %vm2080, 1, 0
        %v2085 = vsel %vm2081, 1, 0
        %v2086 = vsel %vm2082, 1, 0
        %v2087 = vcvt.s32.f32 %v2083
        %v2088 = vcvt.s32.f32 %v2084
        %v2089 = vcvt.s32.f32 %v2085
        %v2090 = vcvt.s32.f32 %v2086
        %v2091 = vsel %vm2059, inf, %v2043
        %v2092 = vsel %vm2060, inf, %v2044
        %v2093 = vsel %vm2061, inf, %v2045
        %v2094 = vsel %vm2062, inf, %v2046
        %v2095 = vsel %vm879, %v2091, inf
        %2096 = vmin.xlane.f32.xlu0 %v2095
        %v2097 = vpop.xlane.xlu0 %2096
        %v2098 = vsel %vm879, %v2092, inf
        %2099 = vmin.xlane.f32.xlu0 %v2098
        %v2100 = vpop.xlane.xlu0 %2099
        %v2101 = vsel %vm879, %v2093, inf
        %2102 = vmin.xlane.f32.xlu0 %v2101
        %v2103 = vpop.xlane.xlu0 %2102
        %v2104 = vsel %vm879, %v2094, inf
        %2105 = vmin.xlane.f32.xlu0 %v2104
        %v2106 = vpop.xlane.xlu0 %2105
        %vm2107 = vcmp.le.f32.partialorder %v2091, %v2097
        %vm2108 = vcmp.le.f32.partialorder %v2092, %v2100
        %vm2109 = vcmp.le.f32.partialorder %v2093, %v2103
        %vm2110 = vcmp.le.f32.partialorder %v2094, %v2106
        %v2111 = vsel %vm2107, %v496, 32.0
        %v2112 = vsel %vm2108, %v496, 32.0
        %v2113 = vsel %vm2109, %v496, 32.0
        %v2114 = vsel %vm2110, %v496, 32.0
        %v2115 = vsel %vm879, %v2111, inf
        %2116 = vmin.xlane.f32.xlu0 %v2115
        %v2117 = vpop.xlane.xlu0 %2116
        %v2118 = vsel %vm879, %v2112, inf
        %2119 = vmin.xlane.f32.xlu0 %v2118
        %v2120 = vpop.xlane.xlu0 %2119
        %v2121 = vsel %vm879, %v2113, inf
        %2122 = vmin.xlane.f32.xlu0 %v2121
        %v2123 = vpop.xlane.xlu0 %2122
        %v2124 = vsel %vm879, %v2114, inf
        %2125 = vmin.xlane.f32.xlu0 %v2124
        %v2126 = vpop.xlane.xlu0 %2125
        %vm2127 = vcmp.eq.f32.partialorder %v496, %v2117
        %vm2128 = vcmp.eq.f32.partialorder %v496, %v2120
        %vm2129 = vcmp.eq.f32.partialorder %v496, %v2123
        %vm2130 = vcmp.eq.f32.partialorder %v496, %v2126
        %v2131 = vsel %vm2127, 1, 0
        %v2132 = vsel %vm2128, 1, 0
        %v2133 = vsel %vm2129, 1, 0
        %v2134 = vsel %vm2130, 1, 0
        %v2135 = vcvt.s32.f32 %v2131
        %v2136 = vcvt.s32.f32 %v2132
        %v2137 = vcvt.s32.f32 %v2133
        %v2138 = vcvt.s32.f32 %v2134
        %v2139 = vsel %vm2107, inf, %v2091
        %v2140 = vsel %vm2108, inf, %v2092
        %v2141 = vsel %vm2109, inf, %v2093
        %v2142 = vsel %vm2110, inf, %v2094
        %v2143 = vsel %vm879, %v2139, inf
        %2144 = vmin.xlane.f32.xlu0 %v2143
        %v2145 = vpop.xlane.xlu0 %2144
        %v2146 = vsel %vm879, %v2140, inf
        %2147 = vmin.xlane.f32.xlu0 %v2146
        %v2148 = vpop.xlane.xlu0 %2147
        %v2149 = vsel %vm879, %v2141, inf
        %2150 = vmin.xlane.f32.xlu0 %v2149
        %v2151 = vpop.xlane.xlu0 %2150
        %v2152 = vsel %vm879, %v2142, inf
        %2153 = vmin.xlane.f32.xlu0 %v2152
        %v2154 = vpop.xlane.xlu0 %2153
        %vm2155 = vcmp.le.f32.partialorder %v2139, %v2145
        %vm2156 = vcmp.le.f32.partialorder %v2140, %v2148
        %vm2157 = vcmp.le.f32.partialorder %v2141, %v2151
        %vm2158 = vcmp.le.f32.partialorder %v2142, %v2154
        %v2159 = vsel %vm2155, %v496, 32.0
        %v2160 = vsel %vm2156, %v496, 32.0
        %v2161 = vsel %vm2157, %v496, 32.0
        %v2162 = vsel %vm2158, %v496, 32.0
        %v2163 = vsel %vm879, %v2159, inf
        %2164 = vmin.xlane.f32.xlu0 %v2163
        %v2165 = vpop.xlane.xlu0 %2164
        %v2166 = vsel %vm879, %v2160, inf
        %2167 = vmin.xlane.f32.xlu0 %v2166
        %v2168 = vpop.xlane.xlu0 %2167
        %v2169 = vsel %vm879, %v2161, inf
        %2170 = vmin.xlane.f32.xlu0 %v2169
        %v2171 = vpop.xlane.xlu0 %2170
        %v2172 = vsel %vm879, %v2162, inf
        %2173 = vmin.xlane.f32.xlu0 %v2172
        %v2174 = vpop.xlane.xlu0 %2173
        %vm2175 = vcmp.eq.f32.partialorder %v496, %v2165
        %vm2176 = vcmp.eq.f32.partialorder %v496, %v2168
        %vm2177 = vcmp.eq.f32.partialorder %v496, %v2171
        %vm2178 = vcmp.eq.f32.partialorder %v496, %v2174
        %v2179 = vsel %vm2175, 1, 0
        %v2180 = vsel %vm2176, 1, 0
        %v2181 = vsel %vm2177, 1, 0
        %v2182 = vsel %vm2178, 1, 0
        %v2183 = vcvt.s32.f32 %v2179
        %v2184 = vcvt.s32.f32 %v2180
        %v2185 = vcvt.s32.f32 %v2181
        %v2186 = vcvt.s32.f32 %v2182
        %v2187 = vsel %vm2155, inf, %v2139
        %v2188 = vsel %vm2156, inf, %v2140
        %v2189 = vsel %vm2157, inf, %v2141
        %v2190 = vsel %vm2158, inf, %v2142
        %v2191 = vsel %vm879, %v2187, inf
        %2192 = vmin.xlane.f32.xlu0 %v2191
        %v2193 = vpop.xlane.xlu0 %2192
        %v2194 = vsel %vm879, %v2188, inf
        %2195 = vmin.xlane.f32.xlu0 %v2194
        %v2196 = vpop.xlane.xlu0 %2195
        %v2197 = vsel %vm879, %v2189, inf
        %2198 = vmin.xlane.f32.xlu0 %v2197
        %v2199 = vpop.xlane.xlu0 %2198
        %v2200 = vsel %vm879, %v2190, inf
        %2201 = vmin.xlane.f32.xlu0 %v2200
        %v2202 = vpop.xlane.xlu0 %2201
        %vm2203 = vcmp.le.f32.partialorder %v2187, %v2193
        %vm2204 = vcmp.le.f32.partialorder %v2188, %v2196
        %vm2205 = vcmp.le.f32.partialorder %v2189, %v2199
        %vm2206 = vcmp.le.f32.partialorder %v2190, %v2202
        %v2207 = vsel %vm2203, %v496, 32.0
        %v2208 = vsel %vm2204, %v496, 32.0
        %v2209 = vsel %vm2205, %v496, 32.0
        %v2210 = vsel %vm2206, %v496, 32.0
        %v2211 = vsel %vm879, %v2207, inf
        %2212 = vmin.xlane.f32.xlu0 %v2211
        %v2213 = vpop.xlane.xlu0 %2212
        %v2214 = vsel %vm879, %v2208, inf
        %2215 = vmin.xlane.f32.xlu0 %v2214
        %v2216 = vpop.xlane.xlu0 %2215
        %v2217 = vsel %vm879, %v2209, inf
        %2218 = vmin.xlane.f32.xlu0 %v2217
        %v2219 = vpop.xlane.xlu0 %2218
        %v2220 = vsel %vm879, %v2210, inf
        %2221 = vmin.xlane.f32.xlu0 %v2220
        %v2222 = vpop.xlane.xlu0 %2221
        %vm2223 = vcmp.eq.f32.partialorder %v496, %v2213
        %vm2224 = vcmp.eq.f32.partialorder %v496, %v2216
        %vm2225 = vcmp.eq.f32.partialorder %v496, %v2219
        %vm2226 = vcmp.eq.f32.partialorder %v496, %v2222
        %v2227 = vsel %vm2223, 1, 0
        %v2228 = vsel %vm2224, 1, 0
        %v2229 = vsel %vm2225, 1, 0
        %v2230 = vsel %vm2226, 1, 0
        %v2231 = vcvt.s32.f32 %v2227
        %v2232 = vcvt.s32.f32 %v2228
        %v2233 = vcvt.s32.f32 %v2229
        %v2234 = vcvt.s32.f32 %v2230
        %v2235 = vsel %vm2203, inf, %v2187
        %v2236 = vsel %vm2204, inf, %v2188
        %v2237 = vsel %vm2205, inf, %v2189
        %v2238 = vsel %vm2206, inf, %v2190
        %v2239 = vsel %vm879, %v2235, inf
        %2240 = vmin.xlane.f32.xlu0 %v2239
        %v2241 = vpop.xlane.xlu0 %2240
        %v2242 = vsel %vm879, %v2236, inf
        %2243 = vmin.xlane.f32.xlu0 %v2242
        %v2244 = vpop.xlane.xlu0 %2243
        %v2245 = vsel %vm879, %v2237, inf
        %2246 = vmin.xlane.f32.xlu0 %v2245
        %v2247 = vpop.xlane.xlu0 %2246
        %v2248 = vsel %vm879, %v2238, inf
        %2249 = vmin.xlane.f32.xlu0 %v2248
        %v2250 = vpop.xlane.xlu0 %2249
        %vm2251 = vcmp.le.f32.partialorder %v2235, %v2241
        %vm2252 = vcmp.le.f32.partialorder %v2236, %v2244
        %vm2253 = vcmp.le.f32.partialorder %v2237, %v2247
        %vm2254 = vcmp.le.f32.partialorder %v2238, %v2250
        %v2255 = vsel %vm2251, %v496, 32.0
        %v2256 = vsel %vm2252, %v496, 32.0
        %v2257 = vsel %vm2253, %v496, 32.0
        %v2258 = vsel %vm2254, %v496, 32.0
        %v2259 = vsel %vm879, %v2255, inf
        %2260 = vmin.xlane.f32.xlu0 %v2259
        %v2261 = vpop.xlane.xlu0 %2260
        %v2262 = vsel %vm879, %v2256, inf
        %2263 = vmin.xlane.f32.xlu0 %v2262
        %v2264 = vpop.xlane.xlu0 %2263
        %v2265 = vsel %vm879, %v2257, inf
        %2266 = vmin.xlane.f32.xlu0 %v2265
        %v2267 = vpop.xlane.xlu0 %2266
        %v2268 = vsel %vm879, %v2258, inf
        %2269 = vmin.xlane.f32.xlu0 %v2268
        %v2270 = vpop.xlane.xlu0 %2269
        %vm2271 = vcmp.eq.f32.partialorder %v496, %v2261
        %vm2272 = vcmp.eq.f32.partialorder %v496, %v2264
        %vm2273 = vcmp.eq.f32.partialorder %v496, %v2267
        %vm2274 = vcmp.eq.f32.partialorder %v496, %v2270
        %v2275 = vsel %vm2271, 1, 0
        %v2276 = vsel %vm2272, 1, 0
        %v2277 = vsel %vm2273, 1, 0
        %v2278 = vsel %vm2274, 1, 0
        %v2279 = vcvt.s32.f32 %v2275
        %v2280 = vcvt.s32.f32 %v2276
        %v2281 = vcvt.s32.f32 %v2277
        %v2282 = vcvt.s32.f32 %v2278
        %v2283 = vsel %vm2251, inf, %v2235
        %v2284 = vsel %vm2252, inf, %v2236
        %v2285 = vsel %vm2253, inf, %v2237
        %v2286 = vsel %vm2254, inf, %v2238
        %v2287 = vsel %vm879, %v2283, inf
        %2288 = vmin.xlane.f32.xlu0 %v2287
        %v2289 = vpop.xlane.xlu0 %2288
        %v2290 = vsel %vm879, %v2284, inf
        %2291 = vmin.xlane.f32.xlu0 %v2290
        %v2292 = vpop.xlane.xlu0 %2291
        %v2293 = vsel %vm879, %v2285, inf
        %2294 = vmin.xlane.f32.xlu0 %v2293
        %v2295 = vpop.xlane.xlu0 %2294
        %v2296 = vsel %vm879, %v2286, inf
        %2297 = vmin.xlane.f32.xlu0 %v2296
        %v2298 = vpop.xlane.xlu0 %2297
        %vm2299 = vcmp.le.f32.partialorder %v2283, %v2289
        %vm2300 = vcmp.le.f32.partialorder %v2284, %v2292
        %vm2301 = vcmp.le.f32.partialorder %v2285, %v2295
        %vm2302 = vcmp.le.f32.partialorder %v2286, %v2298
        %v2303 = vsel %vm2299, %v496, 32.0
        %v2304 = vsel %vm2300, %v496, 32.0
        %v2305 = vsel %vm2301, %v496, 32.0
        %v2306 = vsel %vm2302, %v496, 32.0
        %v2307 = vsel %vm879, %v2303, inf
        %2308 = vmin.xlane.f32.xlu0 %v2307
        %v2309 = vpop.xlane.xlu0 %2308
        %v2310 = vsel %vm879, %v2304, inf
        %2311 = vmin.xlane.f32.xlu0 %v2310
        %v2312 = vpop.xlane.xlu0 %2311
        %v2313 = vsel %vm879, %v2305, inf
        %2314 = vmin.xlane.f32.xlu0 %v2313
        %v2315 = vpop.xlane.xlu0 %2314
        %v2316 = vsel %vm879, %v2306, inf
        %2317 = vmin.xlane.f32.xlu0 %v2316
        %v2318 = vpop.xlane.xlu0 %2317
        %vm2319 = vcmp.eq.f32.partialorder %v496, %v2309
        %vm2320 = vcmp.eq.f32.partialorder %v496, %v2312
        %vm2321 = vcmp.eq.f32.partialorder %v496, %v2315
        %vm2322 = vcmp.eq.f32.partialorder %v496, %v2318
        %v2323 = vsel %vm2319, 1, 0
        %v2324 = vsel %vm2320, 1, 0
        %v2325 = vsel %vm2321, 1, 0
        %v2326 = vsel %vm2322, 1, 0
        %v2327 = vcvt.s32.f32 %v2323
        %v2328 = vcvt.s32.f32 %v2324
        %v2329 = vcvt.s32.f32 %v2325
        %v2330 = vcvt.s32.f32 %v2326
        %v2331 = vsel %vm2299, inf, %v2283
        %v2332 = vsel %vm2300, inf, %v2284
        %v2333 = vsel %vm2301, inf, %v2285
        %v2334 = vsel %vm2302, inf, %v2286
        %v2335 = vsel %vm879, %v2331, inf
        %2336 = vmin.xlane.f32.xlu0 %v2335
        %v2337 = vpop.xlane.xlu0 %2336
        %v2338 = vsel %vm879, %v2332, inf
        %2339 = vmin.xlane.f32.xlu0 %v2338
        %v2340 = vpop.xlane.xlu0 %2339
        %v2341 = vsel %vm879, %v2333, inf
        %2342 = vmin.xlane.f32.xlu0 %v2341
        %v2343 = vpop.xlane.xlu0 %2342
        %v2344 = vsel %vm879, %v2334, inf
        %2345 = vmin.xlane.f32.xlu0 %v2344
        %v2346 = vpop.xlane.xlu0 %2345
        %vm2347 = vcmp.le.f32.partialorder %v2331, %v2337
        %vm2348 = vcmp.le.f32.partialorder %v2332, %v2340
        %vm2349 = vcmp.le.f32.partialorder %v2333, %v2343
        %vm2350 = vcmp.le.f32.partialorder %v2334, %v2346
        %v2351 = vsel %vm2347, %v496, 32.0
        %v2352 = vsel %vm2348, %v496, 32.0
        %v2353 = vsel %vm2349, %v496, 32.0
        %v2354 = vsel %vm2350, %v496, 32.0
        %v2355 = vsel %vm879, %v2351, inf
        %2356 = vmin.xlane.f32.xlu0 %v2355
        %v2357 = vpop.xlane.xlu0 %2356
        %v2358 = vsel %vm879, %v2352, inf
        %2359 = vmin.xlane.f32.xlu0 %v2358
        %v2360 = vpop.xlane.xlu0 %2359
        %v2361 = vsel %vm879, %v2353, inf
        %2362 = vmin.xlane.f32.xlu0 %v2361
        %v2363 = vpop.xlane.xlu0 %2362
        %v2364 = vsel %vm879, %v2354, inf
        %2365 = vmin.xlane.f32.xlu0 %v2364
        %v2366 = vpop.xlane.xlu0 %2365
        %vm2367 = vcmp.eq.f32.partialorder %v496, %v2357
        %vm2368 = vcmp.eq.f32.partialorder %v496, %v2360
        %vm2369 = vcmp.eq.f32.partialorder %v496, %v2363
        %vm2370 = vcmp.eq.f32.partialorder %v496, %v2366
        %v2371 = vsel %vm2367, 1, 0
        %v2372 = vsel %vm2368, 1, 0
        %v2373 = vsel %vm2369, 1, 0
        %v2374 = vsel %vm2370, 1, 0
        %v2375 = vcvt.s32.f32 %v2371
        %v2376 = vcvt.s32.f32 %v2372
        %v2377 = vcvt.s32.f32 %v2373
        %v2378 = vcvt.s32.f32 %v2374
        %v2380 = vsel %vm879, %v2039, 0
        %v2383 = vsel %vm879, %v2040, 0
        %v2386 = vsel %vm879, %v2041, 0
        %v2389 = vsel %vm879, %v2042, 0
        %v2392 = vsel %vm879, %v2087, 0
        %v2395 = vsel %vm879, %v2088, 0
        %v2398 = vsel %vm879, %v2089, 0
        %v2401 = vsel %vm879, %v2090, 0
        %v2404 = vsel %vm879, %v2135, 0
        %v2407 = vsel %vm879, %v2136, 0
        %v2410 = vsel %vm879, %v2137, 0
        %v2413 = vsel %vm879, %v2138, 0
        %v2416 = vsel %vm879, %v2183, 0
        %v2419 = vsel %vm879, %v2184, 0
        %v2422 = vsel %vm879, %v2185, 0
        %v2425 = vsel %vm879, %v2186, 0
        %v2428 = vsel %vm879, %v2231, 0
        %v2431 = vsel %vm879, %v2232, 0
        %v2434 = vsel %vm879, %v2233, 0
        %v2437 = vsel %vm879, %v2234, 0
        %v2440 = vsel %vm879, %v2279, 0
        %v2443 = vsel %vm879, %v2280, 0
        %v2446 = vsel %vm879, %v2281, 0
        %v2449 = vsel %vm879, %v2282, 0
        %v2452 = vsel %vm879, %v2327, 0
        %v2455 = vsel %vm879, %v2328, 0
        %v2458 = vsel %vm879, %v2329, 0
        %v2461 = vsel %vm879, %v2330, 0
        %v2464 = vsel %vm879, %v2375, 0
        %v2467 = vsel %vm879, %v2376, 0
        %v2470 = vsel %vm879, %v2377, 0
        %v2473 = vsel %vm879, %v2378, 0
        %2475 = vmatprep.subr.mxu0 0.0
        %2476 = vmatpush1.msra.mxu0 0.0
        %2477 = vmatprep.subr.mxu0 0.0
        %2478 = vmatpush1.msra.mxu0 0.0
        %2479 = vmatprep.subr.mxu0 0.0
        %2480 = vmatpush1.msra.mxu0 0.0
        %2481 = vmatprep.subr.mxu0 0.0
        %2482 = vmatpush1.msra.mxu0 0.0
        %2483 = vmatprep.subr.mxu0 0.0
        %2484 = vmatpush1.msra.mxu0 0.0
        %2485 = vmatprep.subr.mxu0 0.0
        %2486 = vmatpush1.msra.mxu0 0.0
        %2487 = vmatprep.subr.mxu0 0.0
        %2488 = vmatpush1.msra.mxu0 0.0
        %2489 = vmatprep.subr.mxu0 0.0
        %2490 = vmatpush1.msra.mxu0 0.0
        %2491 = vmatprep.subr.mxu0 0.0
        %2492 = vmatpush1.msra.mxu0 0.0
        %2493 = vmatprep.subr.mxu0 0.0
        %2494 = vmatpush1.msra.mxu0 0.0
        %2495 = vmatprep.subr.mxu0 0.0
        %2496 = vmatpush1.msra.mxu0 0.0
        %2497 = vmatprep.subr.mxu0 0.0
        %2498 = vmatpush1.msra.mxu0 0.0
        %2499 = vmatprep.subr.mxu0 0.0
        %2500 = vmatpush1.msra.mxu0 %v1996
        %2501 = vmatprep.subr.mxu0 0.0
        %2502 = vmatpush1.msra.mxu0 %v1991
        %2503 = vmatprep.subr.mxu0 0.0
        %2504 = vmatpush1.msra.mxu0 %v1986
        %2505 = vmatprep.subr.mxu0 0.0
        %2506 = vmatpush1.msra.mxu0 %v1981
        %2507 = vmatprep.subr.mxu0 0.0
        %2508 = vmatpush2.msra.mxu0 0.0
        %2509 = vmatprep.subr.mxu0 0.0
        %2510 = vmatpush2.msra.mxu0 0.0
        %2511 = vmatprep.subr.mxu0 0.0
        %2512 = vmatpush2.msra.mxu0 0.0
        %2513 = vmatprep.subr.mxu0 0.0
        %2514 = vmatpush2.msra.mxu0 0.0
        %2515 = vmatprep.subr.mxu0 0.0
        %2516 = vmatpush2.msra.mxu0 0.0
        %2517 = vmatprep.subr.mxu0 0.0
        %2518 = vmatpush2.msra.mxu0 0.0
        %2519 = vmatprep.subr.mxu0 0.0
        %2520 = vmatpush2.msra.mxu0 0.0
        %2521 = vmatprep.subr.mxu0 0.0
        %2522 = vmatpush2.msra.mxu0 0.0
        %2523 = vmatprep.subr.mxu0 0.0
        %2524 = vmatpush2.msra.mxu0 0.0
        %2525 = vmatprep.subr.mxu0 0.0
        %2526 = vmatpush2.msra.mxu0 0.0
        %2527 = vmatprep.subr.mxu0 0.0
        %2528 = vmatpush2.msra.mxu0 0.0
        %2529 = vmatprep.subr.mxu0 0.0
        %2530 = vmatpush2.msra.mxu0 0.0
        %2531 = vmatprep.subr.mxu0 0.0
        %2532 = vmatpush2.msra.mxu0 0.0
        %2533 = vmatprep.subr.mxu0 0.0
        %2534 = vmatpush2.msra.mxu0 0.0
        %2535 = vmatprep.subr.mxu0 0.0
        %2536 = vmatpush2.msra.mxu0 0.0
        %2537 = vmatprep.subr.mxu0 0.0
        %2538 = vmatpush2.msra.mxu0 0.0
        %2539 = vmatprep.mubr.f32.mxu0 0.0
        %2540 = vmatmul.mubr.f32.gmra.mxu0 %v2380
        %v2541 = vpop.f32.mrf.mxu0
        %v2542 = vadd.f32 0.0, %v2541
        %v2543 = vpop.f32.mrf.mxu0
        %2544 = vmatprep.mubr.f32.mxu0 0.0
        %2545 = vmatmul.mubr.f32.gmra.mxu0 %v2383
        %v2546 = vpop.f32.mrf.mxu0
        %v2547 = vadd.f32 0.0, %v2546
        %v2548 = vpop.f32.mrf.mxu0
        %2549 = vmatprep.mubr.f32.mxu0 0.0
        %2550 = vmatmul.mubr.f32.gmra.mxu0 %v2386
        %v2551 = vpop.f32.mrf.mxu0
        %v2552 = vadd.f32 0.0, %v2551
        %v2553 = vpop.f32.mrf.mxu0
        %2554 = vmatprep.mubr.f32.mxu0 0.0
        %2555 = vmatmul.mubr.f32.gmra.mxu0 %v2389
        %v2556 = vpop.f32.mrf.mxu0
        %v2557 = vadd.f32 0.0, %v2556
        %v2558 = vpop.f32.mrf.mxu0
        %2559 = vmatprep.mubr.f32.mxu0 0.0
        %2560 = vmatmul.mubr.f32.gmra.mxu0 %v2392
        %v2561 = vpop.f32.mrf.mxu0
        %v2562 = vadd.f32 0.0, %v2561
        %v2563 = vpop.f32.mrf.mxu0
        %2564 = vmatprep.mubr.f32.mxu0 0.0
        %2565 = vmatmul.mubr.f32.gmra.mxu0 %v2395
        %v2566 = vpop.f32.mrf.mxu0
        %v2567 = vadd.f32 0.0, %v2566
        %v2568 = vpop.f32.mrf.mxu0
        %2569 = vmatprep.mubr.f32.mxu0 0.0
        %2570 = vmatmul.mubr.f32.gmra.mxu0 %v2398
        %v2571 = vpop.f32.mrf.mxu0
        %v2572 = vadd.f32 0.0, %v2571
        %v2573 = vpop.f32.mrf.mxu0
        %2574 = vmatprep.mubr.f32.mxu0 0.0
        %2575 = vmatmul.mubr.f32.gmra.mxu0 %v2401
        %v2576 = vpop.f32.mrf.mxu0
        %v2577 = vadd.f32 0.0, %v2576
        %v2578 = vpop.f32.mrf.mxu0
        %2579 = vmatprep.mubr.f32.mxu0 0.0
        %2580 = vmatmul.mubr.f32.gmra.mxu0 %v2404
        %v2581 = vpop.f32.mrf.mxu0
        %v2582 = vadd.f32 0.0, %v2581
        %v2583 = vpop.f32.mrf.mxu0
        %2584 = vmatprep.mubr.f32.mxu0 0.0
        %2585 = vmatmul.mubr.f32.gmra.mxu0 %v2407
        %v2586 = vpop.f32.mrf.mxu0
        %v2587 = vadd.f32 0.0, %v2586
        %v2588 = vpop.f32.mrf.mxu0
        %2589 = vmatprep.mubr.f32.mxu0 0.0
        %2590 = vmatmul.mubr.f32.gmra.mxu0 %v2410
        %v2591 = vpop.f32.mrf.mxu0
        %v2592 = vadd.f32 0.0, %v2591
        %v2593 = vpop.f32.mrf.mxu0
        %2594 = vmatprep.mubr.f32.mxu0 0.0
        %2595 = vmatmul.mubr.f32.gmra.mxu0 %v2413
        %v2596 = vpop.f32.mrf.mxu0
        %v2597 = vadd.f32 0.0, %v2596
        %v2598 = vpop.f32.mrf.mxu0
        %2599 = vmatprep.mubr.f32.mxu0 0.0
        %2600 = vmatmul.mubr.f32.gmra.mxu0 %v2416
        %v2601 = vpop.f32.mrf.mxu0
        %v2602 = vadd.f32 0.0, %v2601
        %v2603 = vpop.f32.mrf.mxu0
        %2604 = vmatprep.mubr.f32.mxu0 0.0
        %2605 = vmatmul.mubr.f32.gmra.mxu0 %v2419
        %v2606 = vpop.f32.mrf.mxu0
        %v2607 = vadd.f32 0.0, %v2606
        %v2608 = vpop.f32.mrf.mxu0
        %2609 = vmatprep.mubr.f32.mxu0 0.0
        %2610 = vmatmul.mubr.f32.gmra.mxu0 %v2422
        %v2611 = vpop.f32.mrf.mxu0
        %v2612 = vadd.f32 0.0, %v2611
        %v2613 = vpop.f32.mrf.mxu0
        %2614 = vmatprep.mubr.f32.mxu0 0.0
        %2615 = vmatmul.mubr.f32.gmra.mxu0 %v2425
        %v2616 = vpop.f32.mrf.mxu0
        %v2617 = vadd.f32 0.0, %v2616
        %v2618 = vpop.f32.mrf.mxu0
        %2619 = vmatprep.mubr.f32.mxu0 0.0
        %2620 = vmatmul.mubr.f32.gmra.mxu0 %v2428
        %v2621 = vpop.f32.mrf.mxu0
        %v2622 = vadd.f32 0.0, %v2621
        %v2623 = vpop.f32.mrf.mxu0
        %2624 = vmatprep.mubr.f32.mxu0 0.0
        %2625 = vmatmul.mubr.f32.gmra.mxu0 %v2431
        %v2626 = vpop.f32.mrf.mxu0
        %v2627 = vadd.f32 0.0, %v2626
        %v2628 = vpop.f32.mrf.mxu0
        %2629 = vmatprep.mubr.f32.mxu0 0.0
        %2630 = vmatmul.mubr.f32.gmra.mxu0 %v2434
        %v2631 = vpop.f32.mrf.mxu0
        %v2632 = vadd.f32 0.0, %v2631
        %v2633 = vpop.f32.mrf.mxu0
        %2634 = vmatprep.mubr.f32.mxu0 0.0
        %2635 = vmatmul.mubr.f32.gmra.mxu0 %v2437
        %v2636 = vpop.f32.mrf.mxu0
        %v2637 = vadd.f32 0.0, %v2636
        %v2638 = vpop.f32.mrf.mxu0
        %2639 = vmatprep.mubr.f32.mxu0 0.0
        %2640 = vmatmul.mubr.f32.gmra.mxu0 %v2440
        %v2641 = vpop.f32.mrf.mxu0
        %v2642 = vadd.f32 0.0, %v2641
        %v2643 = vpop.f32.mrf.mxu0
        %2644 = vmatprep.mubr.f32.mxu0 0.0
        %2645 = vmatmul.mubr.f32.gmra.mxu0 %v2443
        %v2646 = vpop.f32.mrf.mxu0
        %v2647 = vadd.f32 0.0, %v2646
        %v2648 = vpop.f32.mrf.mxu0
        %2649 = vmatprep.mubr.f32.mxu0 0.0
        %2650 = vmatmul.mubr.f32.gmra.mxu0 %v2446
        %v2651 = vpop.f32.mrf.mxu0
        %v2652 = vadd.f32 0.0, %v2651
        %v2653 = vpop.f32.mrf.mxu0
        %2654 = vmatprep.mubr.f32.mxu0 0.0
        %2655 = vmatmul.mubr.f32.gmra.mxu0 %v2449
        %v2656 = vpop.f32.mrf.mxu0
        %v2657 = vadd.f32 0.0, %v2656
        %v2658 = vpop.f32.mrf.mxu0
        %2659 = vmatprep.mubr.f32.mxu0 0.0
        %2660 = vmatmul.mubr.f32.gmra.mxu0 %v2452
        %v2661 = vpop.f32.mrf.mxu0
        %v2662 = vadd.f32 0.0, %v2661
        %v2663 = vpop.f32.mrf.mxu0
        %2664 = vmatprep.mubr.f32.mxu0 0.0
        %2665 = vmatmul.mubr.f32.gmra.mxu0 %v2455
        %v2666 = vpop.f32.mrf.mxu0
        %v2667 = vadd.f32 0.0, %v2666
        %v2668 = vpop.f32.mrf.mxu0
        %2669 = vmatprep.mubr.f32.mxu0 0.0
        %2670 = vmatmul.mubr.f32.gmra.mxu0 %v2458
        %v2671 = vpop.f32.mrf.mxu0
        %v2672 = vadd.f32 0.0, %v2671
        %v2673 = vpop.f32.mrf.mxu0
        %2674 = vmatprep.mubr.f32.mxu0 0.0
        %2675 = vmatmul.mubr.f32.gmra.mxu0 %v2461
        %v2676 = vpop.f32.mrf.mxu0
        %v2677 = vadd.f32 0.0, %v2676
        %v2678 = vpop.f32.mrf.mxu0
        %2679 = vmatprep.mubr.f32.mxu0 0.0
        %2680 = vmatmul.mubr.f32.gmra.mxu0 %v2464
        %v2681 = vpop.f32.mrf.mxu0
        %v2682 = vadd.f32 0.0, %v2681
        %v2683 = vpop.f32.mrf.mxu0
        %2684 = vmatprep.mubr.f32.mxu0 0.0
        %2685 = vmatmul.mubr.f32.gmra.mxu0 %v2467
        %v2686 = vpop.f32.mrf.mxu0
        %v2687 = vadd.f32 0.0, %v2686
        %v2688 = vpop.f32.mrf.mxu0
        %2689 = vmatprep.mubr.f32.mxu0 0.0
        %2690 = vmatmul.mubr.f32.gmra.mxu0 %v2470
        %v2691 = vpop.f32.mrf.mxu0
        %v2692 = vadd.f32 0.0, %v2691
        %v2693 = vpop.f32.mrf.mxu0
        %2694 = vmatprep.mubr.f32.mxu0 0.0
        %2695 = vmatmul.mubr.f32.gmra.mxu0 %v2473
        %v2696 = vpop.f32.mrf.mxu0
        %v2697 = vadd.f32 0.0, %v2696
        %v2698 = vpop.f32.mrf.mxu0
        %2699 = vdwg.mxu0
        %v2700 = vmax.f32 %v2542, %v2562
        %v2701 = vmax.f32 %v2547, %v2567
        %v2702 = vmax.f32 %v2552, %v2572
        %v2703 = vmax.f32 %v2557, %v2577
        %v2704 = vmax.f32 %v2700, %v2582
        %v2705 = vmax.f32 %v2701, %v2587
        %v2706 = vmax.f32 %v2702, %v2592
        %v2707 = vmax.f32 %v2703, %v2597
        %v2708 = vmax.f32 %v2704, %v2602
        %v2709 = vmax.f32 %v2705, %v2607
        %v2710 = vmax.f32 %v2706, %v2612
        %v2711 = vmax.f32 %v2707, %v2617
        %v2712 = vmax.f32 %v2708, %v2622
        %v2713 = vmax.f32 %v2709, %v2627
        %v2714 = vmax.f32 %v2710, %v2632
        %v2715 = vmax.f32 %v2711, %v2637
        %v2716 = vmax.f32 %v2712, %v2642
        %v2717 = vmax.f32 %v2713, %v2647
        %v2718 = vmax.f32 %v2714, %v2652
        %v2719 = vmax.f32 %v2715, %v2657
        %v2720 = vmax.f32 %v2716, %v2662
        %v2721 = vmax.f32 %v2717, %v2667
        %v2722 = vmax.f32 %v2718, %v2672
        %v2723 = vmax.f32 %v2719, %v2677
        %v2724 = vmax.f32 %v2720, %v2682
        %v2725 = vmax.f32 %v2721, %v2687
        %v2726 = vmax.f32 %v2722, %v2692
        %v2727 = vmax.f32 %v2723, %v2697
        %v2728 = vadd.f32 %v1896, %v2724
        %v2729 = vadd.f32 %v1901, %v2725
        %v2730 = vadd.f32 %v1906, %v2726
        %v2731 = vadd.f32 %v1911, %v2727
        %v2732 = vmax.f32 %v2728, 0.0
        %v2733 = vmax.f32 %v2729, 0.0
        %v2734 = vmax.f32 %v2730, 0.0
        %v2735 = vmax.f32 %v2731, 0.0
        %v2736 = vld [vmem:[%s7] sm:$0xff]
        %v2737 = vld [vmem:[%s7 + $0x8] sm:$0xff]
        %v2738 = vld [vmem:[%s7 + $0x10] sm:$0xff]
        %v2739 = vld [vmem:[%s7 + $0x18] sm:$0xff]
        %v2740 = vld [vmem:[%s8] sm:$0xff]
        %v2741 = vld [vmem:[%s8 + $0x8] sm:$0xff]
        %v2742 = vld [vmem:[%s8 + $0x10] sm:$0xff]
        %v2743 = vld [vmem:[%s8 + $0x18] sm:$0xff]
        %v2744 = vld [vmem:[%s9] sm:$0x1]
        %v2746 = vsel %vm879, %v2732, 0
        %v2749 = vsel %vm879, %v2733, 0
        %v2752 = vsel %vm879, %v2734, 0
        %v2755 = vsel %vm879, %v2735, 0
        %2757 = vmatprep.subr.mxu0 0.0
        %2758 = vmatpush1.xpose.msra.mxu0 0.0
        %2759 = vmatprep.subr.mxu0 0.0
        %2760 = vmatpush1.xpose.msra.mxu0 0.0
        %2761 = vmatprep.subr.mxu0 0.0
        %2762 = vmatpush1.xpose.msra.mxu0 0.0
        %2763 = vmatprep.subr.mxu0 0.0
        %2764 = vmatpush1.xpose.msra.mxu0 0.0
        %2765 = vmatprep.subr.mxu0 0.0
        %2766 = vmatpush1.xpose.msra.mxu0 0.0
        %2767 = vmatprep.subr.mxu0 0.0
        %2768 = vmatpush1.xpose.msra.mxu0 0.0
        %2769 = vmatprep.subr.mxu0 0.0
        %2770 = vmatpush1.xpose.msra.mxu0 0.0
        %2771 = vmatprep.subr.mxu0 0.0
        %2772 = vmatpush1.xpose.msra.mxu0 0.0
        %2773 = vmatprep.subr.mxu0 0.0
        %2774 = vmatpush1.xpose.msra.mxu0 0.0
        %2775 = vmatprep.subr.mxu0 0.0
        %2776 = vmatpush1.xpose.msra.mxu0 0.0
        %2777 = vmatprep.subr.mxu0 0.0
        %2778 = vmatpush1.xpose.msra.mxu0 0.0
        %2779 = vmatprep.subr.mxu0 0.0
        %2780 = vmatpush1.xpose.msra.mxu0 0.0
        %2781 = vmatprep.subr.mxu0 0.0
        %2782 = vmatpush1.xpose.msra.mxu0 %v2755
        %2783 = vmatprep.subr.mxu0 0.0
        %2784 = vmatpush1.xpose.msra.mxu0 %v2752
        %2785 = vmatprep.subr.mxu0 0.0
        %2786 = vmatpush1.xpose.msra.mxu0 %v2749
        %2787 = vmatprep.subr.mxu0 0.0
        %2788 = vmatpush1.xpose.msra.mxu0 %v2746
        %2789 = vmatprep.subr.mxu0 0.0
        %2790 = vmatpush2.xpose.msra.mxu0 0.0
        %2791 = vmatprep.subr.mxu0 0.0
        %2792 = vmatpush2.xpose.msra.mxu0 0.0
        %2793 = vmatprep.subr.mxu0 0.0
        %2794 = vmatpush2.xpose.msra.mxu0 0.0
        %2795 = vmatprep.subr.mxu0 0.0
        %2796 = vmatpush2.xpose.msra.mxu0 0.0
        %2797 = vmatprep.subr.mxu0 0.0
        %2798 = vmatpush2.xpose.msra.mxu0 0.0
        %2799 = vmatprep.subr.mxu0 0.0
        %2800 = vmatpush2.xpose.msra.mxu0 0.0
        %2801 = vmatprep.subr.mxu0 0.0
        %2802 = vmatpush2.xpose.msra.mxu0 0.0
        %2803 = vmatprep.subr.mxu0 0.0
        %2804 = vmatpush2.xpose.msra.mxu0 0.0
        %2805 = vmatprep.subr.mxu0 0.0
        %2806 = vmatpush2.xpose.msra.mxu0 0.0
        %2807 = vmatprep.subr.mxu0 0.0
        %2808 = vmatpush2.xpose.msra.mxu0 0.0
        %2809 = vmatprep.subr.mxu0 0.0
        %2810 = vmatpush2.xpose.msra.mxu0 0.0
        %2811 = vmatprep.subr.mxu0 0.0
        %2812 = vmatpush2.xpose.msra.mxu0 0.0
        %2813 = vmatprep.subr.mxu0 0.0
        %2814 = vmatpush2.xpose.msra.mxu0 0.0
        %2815 = vmatprep.subr.mxu0 0.0
        %2816 = vmatpush2.xpose.msra.mxu0 0.0
        %2817 = vmatprep.subr.mxu0 0.0
        %2818 = vmatpush2.xpose.msra.mxu0 0.0
        %2819 = vmatprep.subr.mxu0 0.0
        %2820 = vmatpush2.xpose.msra.mxu0 0.0
        %2821 = vmatprep.mubr.f32.mxu0 0.0
        %2822 = vmatmul.mubr.f32.gmra.mxu0 %v2746
        %v2823 = vpop.f32.mrf.mxu0
        %v2824 = vadd.f32 0.0, %v2823
        %v2825 = vpop.f32.mrf.mxu0
        %2826 = vmatprep.mubr.f32.mxu0 0.0
        %2827 = vmatmul.mubr.f32.gmra.mxu0 %v2749
        %v2828 = vpop.f32.mrf.mxu0
        %v2829 = vadd.f32 0.0, %v2828
        %v2830 = vpop.f32.mrf.mxu0
        %2831 = vmatprep.mubr.f32.mxu0 0.0
        %2832 = vmatmul.mubr.f32.gmra.mxu0 %v2752
        %v2833 = vpop.f32.mrf.mxu0
        %v2834 = vadd.f32 0.0, %v2833
        %v2835 = vpop.f32.mrf.mxu0
        %2836 = vmatprep.mubr.f32.mxu0 0.0
        %2837 = vmatmul.mubr.f32.gmra.mxu0 %v2755
        %v2838 = vpop.f32.mrf.mxu0
        %v2839 = vadd.f32 0.0, %v2838
        %v2840 = vpop.f32.mrf.mxu0
        %2841 = vdwg.mxu0
        %v2842 = vmul.f32 %v2732, %v2732
        %v2843 = vmul.f32 %v2733, %v2733
        %v2844 = vmul.f32 %v2734, %v2734
        %v2845 = vmul.f32 %v2735, %v2735
        %v2847 = vsel %vm879, %v2842, 0
        %v2850 = vsel %vm879, %v2843, 0
        %v2853 = vsel %vm879, %v2844, 0
        %v2856 = vsel %vm879, %v2845, 0
        %2858 = vmatprep.subr.mxu0 0.0
        %2859 = vmatpush1.xpose.msra.mxu0 0.0
        %2860 = vmatprep.subr.mxu0 0.0
        %2861 = vmatpush1.xpose.msra.mxu0 0.0
        %2862 = vmatprep.subr.mxu0 0.0
        %2863 = vmatpush1.xpose.msra.mxu0 0.0
        %2864 = vmatprep.subr.mxu0 0.0
        %2865 = vmatpush1.xpose.msra.mxu0 0.0
        %2866 = vmatprep.subr.mxu0 0.0
        %2867 = vmatpush1.xpose.msra.mxu0 0.0
        %2868 = vmatprep.subr.mxu0 0.0
        %2869 = vmatpush1.xpose.msra.mxu0 0.0
        %2870 = vmatprep.subr.mxu0 0.0
        %2871 = vmatpush1.xpose.msra.mxu0 0.0
        %2872 = vmatprep.subr.mxu0 0.0
        %2873 = vmatpush1.xpose.msra.mxu0 0.0
        %2874 = vmatprep.subr.mxu0 0.0
        %2875 = vmatpush1.xpose.msra.mxu0 0.0
        %2876 = vmatprep.subr.mxu0 0.0
        %2877 = vmatpush1.xpose.msra.mxu0 0.0
        %2878 = vmatprep.subr.mxu0 0.0
        %2879 = vmatpush1.xpose.msra.mxu0 0.0
        %2880 = vmatprep.subr.mxu0 0.0
        %2881 = vmatpush1.xpose.msra.mxu0 0.0
        %2882 = vmatprep.subr.mxu0 0.0
        %2883 = vmatpush1.xpose.msra.mxu0 %v2856
        %2884 = vmatprep.subr.mxu0 0.0
        %2885 = vmatpush1.xpose.msra.mxu0 %v2853
        %2886 = vmatprep.subr.mxu0 0.0
        %2887 = vmatpush1.xpose.msra.mxu0 %v2850
        %2888 = vmatprep.subr.mxu0 0.0
        %2889 = vmatpush1.xpose.msra.mxu0 %v2847
        %2890 = vmatprep.subr.mxu0 0.0
        %2891 = vmatpush2.xpose.msra.mxu0 0.0
        %2892 = vmatprep.subr.mxu0 0.0
        %2893 = vmatpush2.xpose.msra.mxu0 0.0
        %2894 = vmatprep.subr.mxu0 0.0
        %2895 = vmatpush2.xpose.msra.mxu0 0.0
        %2896 = vmatprep.subr.mxu0 0.0
        %2897 = vmatpush2.xpose.msra.mxu0 0.0
        %2898 = vmatprep.subr.mxu0 0.0
        %2899 = vmatpush2.xpose.msra.mxu0 0.0
        %2900 = vmatprep.subr.mxu0 0.0
        %2901 = vmatpush2.xpose.msra.mxu0 0.0
        %2902 = vmatprep.subr.mxu0 0.0
        %2903 = vmatpush2.xpose.msra.mxu0 0.0
        %2904 = vmatprep.subr.mxu0 0.0
        %2905 = vmatpush2.xpose.msra.mxu0 0.0
        %2906 = vmatprep.subr.mxu0 0.0
        %2907 = vmatpush2.xpose.msra.mxu0 0.0
        %2908 = vmatprep.subr.mxu0 0.0
        %2909 = vmatpush2.xpose.msra.mxu0 0.0
        %2910 = vmatprep.subr.mxu0 0.0
        %2911 = vmatpush2.xpose.msra.mxu0 0.0
        %2912 = vmatprep.subr.mxu0 0.0
        %2913 = vmatpush2.xpose.msra.mxu0 0.0
        %2914 = vmatprep.subr.mxu0 0.0
        %2915 = vmatpush2.xpose.msra.mxu0 0.0
        %2916 = vmatprep.subr.mxu0 0.0
        %2917 = vmatpush2.xpose.msra.mxu0 0.0
        %2918 = vmatprep.subr.mxu0 0.0
        %2919 = vmatpush2.xpose.msra.mxu0 0.0
        %2920 = vmatprep.subr.mxu0 0.0
        %2921 = vmatpush2.xpose.msra.mxu0 0.0
        %2922 = vmatprep.mubr.f32.mxu0 0.0
        %2923 = vmatmul.mubr.f32.gmra.mxu0 %v1727
        %v2924 = vpop.f32.mrf.mxu0
        %v2925 = vadd.f32 0.0, %v2924
        %v2926 = vpop.f32.mrf.mxu0
        %2927 = vdwg.mxu0
        %v2928 = vmul.f32 %v2824, 2.0
        %v2929 = vmul.f32 %v2829, 2.0
        %v2930 = vmul.f32 %v2834, 2.0
        %v2931 = vmul.f32 %v2839, 2.0
        %v2932 = vlaneseq
        %v2933 = vshrl.u32 %v2932, 7
        %v2934 = vsub.s32 0, %v2933
        %v2935 = vrot.slane %v2925, %v2934
        %v2936 = vsub.f32 %v2935, %v2928
        %v2937 = vsub.f32 %v2935, %v2929
        %v2938 = vsub.f32 %v2935, %v2930
        %v2939 = vsub.f32 %v2935, %v2931
        %v2941 = vlaneseq
        %v2942 = vshrl.u32 %v2941, 7
        %v2943 = vsub.s32 0, %v2942
        %v2944 = vrot.slane %v2744, %v2943
        %2946 = vmatprep.subr.mxu0 0.0
        %2947 = vmatpush1.msra.mxu0 0.0
        %2948 = vmatprep.subr.mxu0 0.0
        %2949 = vmatpush1.msra.mxu0 0.0
        %2950 = vmatprep.subr.mxu0 0.0
        %2951 = vmatpush1.msra.mxu0 0.0
        %2952 = vmatprep.subr.mxu0 0.0
        %2953 = vmatpush1.msra.mxu0 0.0
        %2954 = vmatprep.subr.mxu0 0.0
        %2955 = vmatpush1.msra.mxu0 0.0
        %2956 = vmatprep.subr.mxu0 0.0
        %2957 = vmatpush1.msra.mxu0 0.0
        %2958 = vmatprep.subr.mxu0 0.0
        %2959 = vmatpush1.msra.mxu0 0.0
        %2960 = vmatprep.subr.mxu0 0.0
        %2961 = vmatpush1.msra.mxu0 0.0
        %2962 = vmatprep.subr.mxu0 0.0
        %2963 = vmatpush1.msra.mxu0 0.0
        %2964 = vmatprep.subr.mxu0 0.0
        %2965 = vmatpush1.msra.mxu0 0.0
        %2966 = vmatprep.subr.mxu0 0.0
        %2967 = vmatpush1.msra.mxu0 0.0
        %2968 = vmatprep.subr.mxu0 0.0
        %2969 = vmatpush1.msra.mxu0 0.0
        %2970 = vmatprep.subr.mxu0 0.0
        %2971 = vmatpush1.msra.mxu0 %v2739
        %2972 = vmatprep.subr.mxu0 0.0
        %2973 = vmatpush1.msra.mxu0 %v2738
        %2974 = vmatprep.subr.mxu0 0.0
        %2975 = vmatpush1.msra.mxu0 %v2737
        %2976 = vmatprep.subr.mxu0 0.0
        %2977 = vmatpush1.msra.mxu0 %v2736
        %2978 = vmatprep.subr.mxu0 0.0
        %2979 = vmatpush2.msra.mxu0 0.0
        %2980 = vmatprep.subr.mxu0 0.0
        %2981 = vmatpush2.msra.mxu0 0.0
        %2982 = vmatprep.subr.mxu0 0.0
        %2983 = vmatpush2.msra.mxu0 0.0
        %2984 = vmatprep.subr.mxu0 0.0
        %2985 = vmatpush2.msra.mxu0 0.0
        %2986 = vmatprep.subr.mxu0 0.0
        %2987 = vmatpush2.msra.mxu0 0.0
        %2988 = vmatprep.subr.mxu0 0.0
        %2989 = vmatpush2.msra.mxu0 0.0
        %2990 = vmatprep.subr.mxu0 0.0
        %2991 = vmatpush2.msra.mxu0 0.0
        %2992 = vmatprep.subr.mxu0 0.0
        %2993 = vmatpush2.msra.mxu0 0.0
        %2994 = vmatprep.subr.mxu0 0.0
        %2995 = vmatpush2.msra.mxu0 0.0
        %2996 = vmatprep.subr.mxu0 0.0
        %2997 = vmatpush2.msra.mxu0 0.0
        %2998 = vmatprep.subr.mxu0 0.0
        %2999 = vmatpush2.msra.mxu0 0.0
        %3000 = vmatprep.subr.mxu0 0.0
        %3001 = vmatpush2.msra.mxu0 0.0
        %3002 = vmatprep.subr.mxu0 0.0
        %3003 = vmatpush2.msra.mxu0 0.0
        %3004 = vmatprep.subr.mxu0 0.0
        %3005 = vmatpush2.msra.mxu0 0.0
        %3006 = vmatprep.subr.mxu0 0.0
        %3007 = vmatpush2.msra.mxu0 0.0
        %3008 = vmatprep.subr.mxu0 0.0
        %3009 = vmatpush2.msra.mxu0 0.0
        %3010 = vmatprep.mubr.f32.mxu0 0.0
        %3011 = vmatmul.mubr.f32.gmra.mxu0 %v2746
        %v3012 = vpop.f32.mrf.mxu0
        %v3013 = vadd.f32 %v2944, %v3012
        %v3014 = vpop.f32.mrf.mxu0
        %3015 = vmatprep.mubr.f32.mxu0 0.0
        %3016 = vmatmul.mubr.f32.gmra.mxu0 %v2749
        %v3017 = vpop.f32.mrf.mxu0
        %v3018 = vadd.f32 %v2944, %v3017
        %v3019 = vpop.f32.mrf.mxu0
        %3020 = vmatprep.mubr.f32.mxu0 0.0
        %3021 = vmatmul.mubr.f32.gmra.mxu0 %v2752
        %v3022 = vpop.f32.mrf.mxu0
        %v3023 = vadd.f32 %v2944, %v3022
        %v3024 = vpop.f32.mrf.mxu0
        %3025 = vmatprep.mubr.f32.mxu0 0.0
        %3026 = vmatmul.mubr.f32.gmra.mxu0 %v2755
        %v3027 = vpop.f32.mrf.mxu0
        %v3028 = vadd.f32 %v2944, %v3027
        %v3029 = vpop.f32.mrf.mxu0
        %3030 = vdwg.mxu0
        %3031 = vmatprep.subr.mxu0 0.0
        %3032 = vmatpush1.msra.mxu0 0.0
        %3033 = vmatprep.subr.mxu0 0.0
        %3034 = vmatpush1.msra.mxu0 0.0
        %3035 = vmatprep.subr.mxu0 0.0
        %3036 = vmatpush1.msra.mxu0 0.0
        %3037 = vmatprep.subr.mxu0 0.0
        %3038 = vmatpush1.msra.mxu0 0.0
        %3039 = vmatprep.subr.mxu0 0.0
        %3040 = vmatpush1.msra.mxu0 0.0
        %3041 = vmatprep.subr.mxu0 0.0
        %3042 = vmatpush1.msra.mxu0 0.0
        %3043 = vmatprep.subr.mxu0 0.0
        %3044 = vmatpush1.msra.mxu0 0.0
        %3045 = vmatprep.subr.mxu0 0.0
        %3046 = vmatpush1.msra.mxu0 0.0
        %3047 = vmatprep.subr.mxu0 0.0
        %3048 = vmatpush1.msra.mxu0 0.0
        %3049 = vmatprep.subr.mxu0 0.0
        %3050 = vmatpush1.msra.mxu0 0.0
        %3051 = vmatprep.subr.mxu0 0.0
        %3052 = vmatpush1.msra.mxu0 0.0
        %3053 = vmatprep.subr.mxu0 0.0
        %3054 = vmatpush1.msra.mxu0 0.0
        %3055 = vmatprep.subr.mxu0 0.0
        %3056 = vmatpush1.msra.mxu0 %v2743
        %3057 = vmatprep.subr.mxu0 0.0
        %3058 = vmatpush1.msra.mxu0 %v2742
        %3059 = vmatprep.subr.mxu0 0.0
        %3060 = vmatpush1.msra.mxu0 %v2741
        %3061 = vmatprep.subr.mxu0 0.0
        %3062 = vmatpush1.msra.mxu0 %v2740
        %3063 = vmatprep.subr.mxu0 0.0
        %3064 = vmatpush2.msra.mxu0 0.0
        %3065 = vmatprep.subr.mxu0 0.0
        %3066 = vmatpush2.msra.mxu0 0.0
        %3067 = vmatprep.subr.mxu0 0.0
        %3068 = vmatpush2.msra.mxu0 0.0
        %3069 = vmatprep.subr.mxu0 0.0
        %3070 = vmatpush2.msra.mxu0 0.0
        %3071 = vmatprep.subr.mxu0 0.0
        %3072 = vmatpush2.msra.mxu0 0.0
        %3073 = vmatprep.subr.mxu0 0.0
        %3074 = vmatpush2.msra.mxu0 0.0
        %3075 = vmatprep.subr.mxu0 0.0
        %3076 = vmatpush2.msra.mxu0 0.0
        %3077 = vmatprep.subr.mxu0 0.0
        %3078 = vmatpush2.msra.mxu0 0.0
        %3079 = vmatprep.subr.mxu0 0.0
        %3080 = vmatpush2.msra.mxu0 0.0
        %3081 = vmatprep.subr.mxu0 0.0
        %3082 = vmatpush2.msra.mxu0 0.0
        %3083 = vmatprep.subr.mxu0 0.0
        %3084 = vmatpush2.msra.mxu0 0.0
        %3085 = vmatprep.subr.mxu0 0.0
        %3086 = vmatpush2.msra.mxu0 0.0
        %3087 = vmatprep.subr.mxu0 0.0
        %3088 = vmatpush2.msra.mxu0 0.0
        %3089 = vmatprep.subr.mxu0 0.0
        %3090 = vmatpush2.msra.mxu0 0.0
        %3091 = vmatprep.subr.mxu0 0.0
        %3092 = vmatpush2.msra.mxu0 0.0
        %3093 = vmatprep.subr.mxu0 0.0
        %3094 = vmatpush2.msra.mxu0 0.0
        %3095 = vmatprep.mubr.f32.mxu0 0.0
        %3096 = vmatmul.mubr.f32.gmra.mxu0 %v2746
        %v3097 = vpop.f32.mrf.mxu0
        %v3098 = vadd.f32 0.0, %v3097
        %v3099 = vpop.f32.mrf.mxu0
        %3100 = vmatprep.mubr.f32.mxu0 0.0
        %3101 = vmatmul.mubr.f32.gmra.mxu0 %v2749
        %v3102 = vpop.f32.mrf.mxu0
        %v3103 = vadd.f32 0.0, %v3102
        %v3104 = vpop.f32.mrf.mxu0
        %3105 = vmatprep.mubr.f32.mxu0 0.0
        %3106 = vmatmul.mubr.f32.gmra.mxu0 %v2752
        %v3107 = vpop.f32.mrf.mxu0
        %v3108 = vadd.f32 0.0, %v3107
        %v3109 = vpop.f32.mrf.mxu0
        %3110 = vmatprep.mubr.f32.mxu0 0.0
        %3111 = vmatmul.mubr.f32.gmra.mxu0 %v2755
        %v3112 = vpop.f32.mrf.mxu0
        %v3113 = vadd.f32 0.0, %v3112
        %v3114 = vpop.f32.mrf.mxu0
        %3115 = vdwg.mxu0
        %v3116 = vsel %vm879, %v2936, inf
        %3117 = vmin.xlane.f32.xlu0 %v3116
        %v3118 = vpop.xlane.xlu0 %3117
        %v3119 = vsel %vm879, %v2937, inf
        %3120 = vmin.xlane.f32.xlu0 %v3119
        %v3121 = vpop.xlane.xlu0 %3120
        %v3122 = vsel %vm879, %v2938, inf
        %3123 = vmin.xlane.f32.xlu0 %v3122
        %v3124 = vpop.xlane.xlu0 %3123
        %v3125 = vsel %vm879, %v2939, inf
        %3126 = vmin.xlane.f32.xlu0 %v3125
        %v3127 = vpop.xlane.xlu0 %3126
        %vm3128 = vcmp.le.f32.partialorder %v2936, %v3118
        %vm3129 = vcmp.le.f32.partialorder %v2937, %v3121
        %vm3130 = vcmp.le.f32.partialorder %v2938, %v3124
        %vm3131 = vcmp.le.f32.partialorder %v2939, %v3127
        %v3132 = vsel %vm3128, %v496, 32.0
        %v3133 = vsel %vm3129, %v496, 32.0
        %v3134 = vsel %vm3130, %v496, 32.0
        %v3135 = vsel %vm3131, %v496, 32.0
        %v3136 = vsel %vm879, %v3132, inf
        %3137 = vmin.xlane.f32.xlu0 %v3136
        %v3138 = vpop.xlane.xlu0 %3137
        %v3139 = vsel %vm879, %v3133, inf
        %3140 = vmin.xlane.f32.xlu0 %v3139
        %v3141 = vpop.xlane.xlu0 %3140
        %v3142 = vsel %vm879, %v3134, inf
        %3143 = vmin.xlane.f32.xlu0 %v3142
        %v3144 = vpop.xlane.xlu0 %3143
        %v3145 = vsel %vm879, %v3135, inf
        %3146 = vmin.xlane.f32.xlu0 %v3145
        %v3147 = vpop.xlane.xlu0 %3146
        %vm3148 = vcmp.eq.f32.partialorder %v496, %v3138
        %vm3149 = vcmp.eq.f32.partialorder %v496, %v3141
        %vm3150 = vcmp.eq.f32.partialorder %v496, %v3144
        %vm3151 = vcmp.eq.f32.partialorder %v496, %v3147
        %v3152 = vsel %vm3148, 1, 0
        %v3153 = vsel %vm3149, 1, 0
        %v3154 = vsel %vm3150, 1, 0
        %v3155 = vsel %vm3151, 1, 0
        %v3156 = vcvt.s32.f32 %v3152
        %v3157 = vcvt.s32.f32 %v3153
        %v3158 = vcvt.s32.f32 %v3154
        %v3159 = vcvt.s32.f32 %v3155
        %v3160 = vsel %vm3128, inf, %v2936
        %v3161 = vsel %vm3129, inf, %v2937
        %v3162 = vsel %vm3130, inf, %v2938
        %v3163 = vsel %vm3131, inf, %v2939
        %v3164 = vsel %vm879, %v3160, inf
        %3165 = vmin.xlane.f32.xlu0 %v3164
        %v3166 = vpop.xlane.xlu0 %3165
        %v3167 = vsel %vm879, %v3161, inf
        %3168 = vmin.xlane.f32.xlu0 %v3167
        %v3169 = vpop.xlane.xlu0 %3168
        %v3170 = vsel %vm879, %v3162, inf
        %3171 = vmin.xlane.f32.xlu0 %v3170
        %v3172 = vpop.xlane.xlu0 %3171
        %v3173 = vsel %vm879, %v3163, inf
        %3174 = vmin.xlane.f32.xlu0 %v3173
        %v3175 = vpop.xlane.xlu0 %3174
        %vm3176 = vcmp.le.f32.partialorder %v3160, %v3166
        %vm3177 = vcmp.le.f32.partialorder %v3161, %v3169
        %vm3178 = vcmp.le.f32.partialorder %v3162, %v3172
        %vm3179 = vcmp.le.f32.partialorder %v3163, %v3175
        %v3180 = vsel %vm3176, %v496, 32.0
        %v3181 = vsel %vm3177, %v496, 32.0
        %v3182 = vsel %vm3178, %v496, 32.0
        %v3183 = vsel %vm3179, %v496, 32.0
        %v3184 = vsel %vm879, %v3180, inf
        %3185 = vmin.xlane.f32.xlu0 %v3184
        %v3186 = vpop.xlane.xlu0 %3185
        %v3187 = vsel %vm879, %v3181, inf
        %3188 = vmin.xlane.f32.xlu0 %v3187
        %v3189 = vpop.xlane.xlu0 %3188
        %v3190 = vsel %vm879, %v3182, inf
        %3191 = vmin.xlane.f32.xlu0 %v3190
        %v3192 = vpop.xlane.xlu0 %3191
        %v3193 = vsel %vm879, %v3183, inf
        %3194 = vmin.xlane.f32.xlu0 %v3193
        %v3195 = vpop.xlane.xlu0 %3194
        %vm3196 = vcmp.eq.f32.partialorder %v496, %v3186
        %vm3197 = vcmp.eq.f32.partialorder %v496, %v3189
        %vm3198 = vcmp.eq.f32.partialorder %v496, %v3192
        %vm3199 = vcmp.eq.f32.partialorder %v496, %v3195
        %v3200 = vsel %vm3196, 1, 0
        %v3201 = vsel %vm3197, 1, 0
        %v3202 = vsel %vm3198, 1, 0
        %v3203 = vsel %vm3199, 1, 0
        %v3204 = vcvt.s32.f32 %v3200
        %v3205 = vcvt.s32.f32 %v3201
        %v3206 = vcvt.s32.f32 %v3202
        %v3207 = vcvt.s32.f32 %v3203
        %v3208 = vsel %vm3176, inf, %v3160
        %v3209 = vsel %vm3177, inf, %v3161
        %v3210 = vsel %vm3178, inf, %v3162
        %v3211 = vsel %vm3179, inf, %v3163
        %v3212 = vsel %vm879, %v3208, inf
        %3213 = vmin.xlane.f32.xlu0 %v3212
        %v3214 = vpop.xlane.xlu0 %3213
        %v3215 = vsel %vm879, %v3209, inf
        %3216 = vmin.xlane.f32.xlu0 %v3215
        %v3217 = vpop.xlane.xlu0 %3216
        %v3218 = vsel %vm879, %v3210, inf
        %3219 = vmin.xlane.f32.xlu0 %v3218
        %v3220 = vpop.xlane.xlu0 %3219
        %v3221 = vsel %vm879, %v3211, inf
        %3222 = vmin.xlane.f32.xlu0 %v3221
        %v3223 = vpop.xlane.xlu0 %3222
        %vm3224 = vcmp.le.f32.partialorder %v3208, %v3214
        %vm3225 = vcmp.le.f32.partialorder %v3209, %v3217
        %vm3226 = vcmp.le.f32.partialorder %v3210, %v3220
        %vm3227 = vcmp.le.f32.partialorder %v3211, %v3223
        %v3228 = vsel %vm3224, %v496, 32.0
        %v3229 = vsel %vm3225, %v496, 32.0
        %v3230 = vsel %vm3226, %v496, 32.0
        %v3231 = vsel %vm3227, %v496, 32.0
        %v3232 = vsel %vm879, %v3228, inf
        %3233 = vmin.xlane.f32.xlu0 %v3232
        %v3234 = vpop.xlane.xlu0 %3233
        %v3235 = vsel %vm879, %v3229, inf
        %3236 = vmin.xlane.f32.xlu0 %v3235
        %v3237 = vpop.xlane.xlu0 %3236
        %v3238 = vsel %vm879, %v3230, inf
        %3239 = vmin.xlane.f32.xlu0 %v3238
        %v3240 = vpop.xlane.xlu0 %3239
        %v3241 = vsel %vm879, %v3231, inf
        %3242 = vmin.xlane.f32.xlu0 %v3241
        %v3243 = vpop.xlane.xlu0 %3242
        %vm3244 = vcmp.eq.f32.partialorder %v496, %v3234
        %vm3245 = vcmp.eq.f32.partialorder %v496, %v3237
        %vm3246 = vcmp.eq.f32.partialorder %v496, %v3240
        %vm3247 = vcmp.eq.f32.partialorder %v496, %v3243
        %v3248 = vsel %vm3244, 1, 0
        %v3249 = vsel %vm3245, 1, 0
        %v3250 = vsel %vm3246, 1, 0
        %v3251 = vsel %vm3247, 1, 0
        %v3252 = vcvt.s32.f32 %v3248
        %v3253 = vcvt.s32.f32 %v3249
        %v3254 = vcvt.s32.f32 %v3250
        %v3255 = vcvt.s32.f32 %v3251
        %v3256 = vsel %vm3224, inf, %v3208
        %v3257 = vsel %vm3225, inf, %v3209
        %v3258 = vsel %vm3226, inf, %v3210
        %v3259 = vsel %vm3227, inf, %v3211
        %v3260 = vsel %vm879, %v3256, inf
        %3261 = vmin.xlane.f32.xlu0 %v3260
        %v3262 = vpop.xlane.xlu0 %3261
        %v3263 = vsel %vm879, %v3257, inf
        %3264 = vmin.xlane.f32.xlu0 %v3263
        %v3265 = vpop.xlane.xlu0 %3264
        %v3266 = vsel %vm879, %v3258, inf
        %3267 = vmin.xlane.f32.xlu0 %v3266
        %v3268 = vpop.xlane.xlu0 %3267
        %v3269 = vsel %vm879, %v3259, inf
        %3270 = vmin.xlane.f32.xlu0 %v3269
        %v3271 = vpop.xlane.xlu0 %3270
        %vm3272 = vcmp.le.f32.partialorder %v3256, %v3262
        %vm3273 = vcmp.le.f32.partialorder %v3257, %v3265
        %vm3274 = vcmp.le.f32.partialorder %v3258, %v3268
        %vm3275 = vcmp.le.f32.partialorder %v3259, %v3271
        %v3276 = vsel %vm3272, %v496, 32.0
        %v3277 = vsel %vm3273, %v496, 32.0
        %v3278 = vsel %vm3274, %v496, 32.0
        %v3279 = vsel %vm3275, %v496, 32.0
        %v3280 = vsel %vm879, %v3276, inf
        %3281 = vmin.xlane.f32.xlu0 %v3280
        %v3282 = vpop.xlane.xlu0 %3281
        %v3283 = vsel %vm879, %v3277, inf
        %3284 = vmin.xlane.f32.xlu0 %v3283
        %v3285 = vpop.xlane.xlu0 %3284
        %v3286 = vsel %vm879, %v3278, inf
        %3287 = vmin.xlane.f32.xlu0 %v3286
        %v3288 = vpop.xlane.xlu0 %3287
        %v3289 = vsel %vm879, %v3279, inf
        %3290 = vmin.xlane.f32.xlu0 %v3289
        %v3291 = vpop.xlane.xlu0 %3290
        %vm3292 = vcmp.eq.f32.partialorder %v496, %v3282
        %vm3293 = vcmp.eq.f32.partialorder %v496, %v3285
        %vm3294 = vcmp.eq.f32.partialorder %v496, %v3288
        %vm3295 = vcmp.eq.f32.partialorder %v496, %v3291
        %v3296 = vsel %vm3292, 1, 0
        %v3297 = vsel %vm3293, 1, 0
        %v3298 = vsel %vm3294, 1, 0
        %v3299 = vsel %vm3295, 1, 0
        %v3300 = vcvt.s32.f32 %v3296
        %v3301 = vcvt.s32.f32 %v3297
        %v3302 = vcvt.s32.f32 %v3298
        %v3303 = vcvt.s32.f32 %v3299
        %v3304 = vsel %vm3272, inf, %v3256
        %v3305 = vsel %vm3273, inf, %v3257
        %v3306 = vsel %vm3274, inf, %v3258
        %v3307 = vsel %vm3275, inf, %v3259
        %v3308 = vsel %vm879, %v3304, inf
        %3309 = vmin.xlane.f32.xlu0 %v3308
        %v3310 = vpop.xlane.xlu0 %3309
        %v3311 = vsel %vm879, %v3305, inf
        %3312 = vmin.xlane.f32.xlu0 %v3311
        %v3313 = vpop.xlane.xlu0 %3312
        %v3314 = vsel %vm879, %v3306, inf
        %3315 = vmin.xlane.f32.xlu0 %v3314
        %v3316 = vpop.xlane.xlu0 %3315
        %v3317 = vsel %vm879, %v3307, inf
        %3318 = vmin.xlane.f32.xlu0 %v3317
        %v3319 = vpop.xlane.xlu0 %3318
        %vm3320 = vcmp.le.f32.partialorder %v3304, %v3310
        %vm3321 = vcmp.le.f32.partialorder %v3305, %v3313
        %vm3322 = vcmp.le.f32.partialorder %v3306, %v3316
        %vm3323 = vcmp.le.f32.partialorder %v3307, %v3319
        %v3324 = vsel %vm3320, %v496, 32.0
        %v3325 = vsel %vm3321, %v496, 32.0
        %v3326 = vsel %vm3322, %v496, 32.0
        %v3327 = vsel %vm3323, %v496, 32.0
        %v3328 = vsel %vm879, %v3324, inf
        %3329 = vmin.xlane.f32.xlu0 %v3328
        %v3330 = vpop.xlane.xlu0 %3329
        %v3331 = vsel %vm879, %v3325, inf
        %3332 = vmin.xlane.f32.xlu0 %v3331
        %v3333 = vpop.xlane.xlu0 %3332
        %v3334 = vsel %vm879, %v3326, inf
        %3335 = vmin.xlane.f32.xlu0 %v3334
        %v3336 = vpop.xlane.xlu0 %3335
        %v3337 = vsel %vm879, %v3327, inf
        %3338 = vmin.xlane.f32.xlu0 %v3337
        %v3339 = vpop.xlane.xlu0 %3338
        %vm3340 = vcmp.eq.f32.partialorder %v496, %v3330
        %vm3341 = vcmp.eq.f32.partialorder %v496, %v3333
        %vm3342 = vcmp.eq.f32.partialorder %v496, %v3336
        %vm3343 = vcmp.eq.f32.partialorder %v496, %v3339
        %v3344 = vsel %vm3340, 1, 0
        %v3345 = vsel %vm3341, 1, 0
        %v3346 = vsel %vm3342, 1, 0
        %v3347 = vsel %vm3343, 1, 0
        %v3348 = vcvt.s32.f32 %v3344
        %v3349 = vcvt.s32.f32 %v3345
        %v3350 = vcvt.s32.f32 %v3346
        %v3351 = vcvt.s32.f32 %v3347
        %v3352 = vsel %vm3320, inf, %v3304
        %v3353 = vsel %vm3321, inf, %v3305
        %v3354 = vsel %vm3322, inf, %v3306
        %v3355 = vsel %vm3323, inf, %v3307
        %v3356 = vsel %vm879, %v3352, inf
        %3357 = vmin.xlane.f32.xlu0 %v3356
        %v3358 = vpop.xlane.xlu0 %3357
        %v3359 = vsel %vm879, %v3353, inf
        %3360 = vmin.xlane.f32.xlu0 %v3359
        %v3361 = vpop.xlane.xlu0 %3360
        %v3362 = vsel %vm879, %v3354, inf
        %3363 = vmin.xlane.f32.xlu0 %v3362
        %v3364 = vpop.xlane.xlu0 %3363
        %v3365 = vsel %vm879, %v3355, inf
        %3366 = vmin.xlane.f32.xlu0 %v3365
        %v3367 = vpop.xlane.xlu0 %3366
        %vm3368 = vcmp.le.f32.partialorder %v3352, %v3358
        %vm3369 = vcmp.le.f32.partialorder %v3353, %v3361
        %vm3370 = vcmp.le.f32.partialorder %v3354, %v3364
        %vm3371 = vcmp.le.f32.partialorder %v3355, %v3367
        %v3372 = vsel %vm3368, %v496, 32.0
        %v3373 = vsel %vm3369, %v496, 32.0
        %v3374 = vsel %vm3370, %v496, 32.0
        %v3375 = vsel %vm3371, %v496, 32.0
        %v3376 = vsel %vm879, %v3372, inf
        %3377 = vmin.xlane.f32.xlu0 %v3376
        %v3378 = vpop.xlane.xlu0 %3377
        %v3379 = vsel %vm879, %v3373, inf
        %3380 = vmin.xlane.f32.xlu0 %v3379
        %v3381 = vpop.xlane.xlu0 %3380
        %v3382 = vsel %vm879, %v3374, inf
        %3383 = vmin.xlane.f32.xlu0 %v3382
        %v3384 = vpop.xlane.xlu0 %3383
        %v3385 = vsel %vm879, %v3375, inf
        %3386 = vmin.xlane.f32.xlu0 %v3385
        %v3387 = vpop.xlane.xlu0 %3386
        %vm3388 = vcmp.eq.f32.partialorder %v496, %v3378
        %vm3389 = vcmp.eq.f32.partialorder %v496, %v3381
        %vm3390 = vcmp.eq.f32.partialorder %v496, %v3384
        %vm3391 = vcmp.eq.f32.partialorder %v496, %v3387
        %v3392 = vsel %vm3388, 1, 0
        %v3393 = vsel %vm3389, 1, 0
        %v3394 = vsel %vm3390, 1, 0
        %v3395 = vsel %vm3391, 1, 0
        %v3396 = vcvt.s32.f32 %v3392
        %v3397 = vcvt.s32.f32 %v3393
        %v3398 = vcvt.s32.f32 %v3394
        %v3399 = vcvt.s32.f32 %v3395
        %v3400 = vsel %vm3368, inf, %v3352
        %v3401 = vsel %vm3369, inf, %v3353
        %v3402 = vsel %vm3370, inf, %v3354
        %v3403 = vsel %vm3371, inf, %v3355
        %v3404 = vsel %vm879, %v3400, inf
        %3405 = vmin.xlane.f32.xlu0 %v3404
        %v3406 = vpop.xlane.xlu0 %3405
        %v3407 = vsel %vm879, %v3401, inf
        %3408 = vmin.xlane.f32.xlu0 %v3407
        %v3409 = vpop.xlane.xlu0 %3408
        %v3410 = vsel %vm879, %v3402, inf
        %3411 = vmin.xlane.f32.xlu0 %v3410
        %v3412 = vpop.xlane.xlu0 %3411
        %v3413 = vsel %vm879, %v3403, inf
        %3414 = vmin.xlane.f32.xlu0 %v3413
        %v3415 = vpop.xlane.xlu0 %3414
        %vm3416 = vcmp.le.f32.partialorder %v3400, %v3406
        %vm3417 = vcmp.le.f32.partialorder %v3401, %v3409
        %vm3418 = vcmp.le.f32.partialorder %v3402, %v3412
        %vm3419 = vcmp.le.f32.partialorder %v3403, %v3415
        %v3420 = vsel %vm3416, %v496, 32.0
        %v3421 = vsel %vm3417, %v496, 32.0
        %v3422 = vsel %vm3418, %v496, 32.0
        %v3423 = vsel %vm3419, %v496, 32.0
        %v3424 = vsel %vm879, %v3420, inf
        %3425 = vmin.xlane.f32.xlu0 %v3424
        %v3426 = vpop.xlane.xlu0 %3425
        %v3427 = vsel %vm879, %v3421, inf
        %3428 = vmin.xlane.f32.xlu0 %v3427
        %v3429 = vpop.xlane.xlu0 %3428
        %v3430 = vsel %vm879, %v3422, inf
        %3431 = vmin.xlane.f32.xlu0 %v3430
        %v3432 = vpop.xlane.xlu0 %3431
        %v3433 = vsel %vm879, %v3423, inf
        %3434 = vmin.xlane.f32.xlu0 %v3433
        %v3435 = vpop.xlane.xlu0 %3434
        %vm3436 = vcmp.eq.f32.partialorder %v496, %v3426
        %vm3437 = vcmp.eq.f32.partialorder %v496, %v3429
        %vm3438 = vcmp.eq.f32.partialorder %v496, %v3432
        %vm3439 = vcmp.eq.f32.partialorder %v496, %v3435
        %v3440 = vsel %vm3436, 1, 0
        %v3441 = vsel %vm3437, 1, 0
        %v3442 = vsel %vm3438, 1, 0
        %v3443 = vsel %vm3439, 1, 0
        %v3444 = vcvt.s32.f32 %v3440
        %v3445 = vcvt.s32.f32 %v3441
        %v3446 = vcvt.s32.f32 %v3442
        %v3447 = vcvt.s32.f32 %v3443
        %v3448 = vsel %vm3416, inf, %v3400
        %v3449 = vsel %vm3417, inf, %v3401
        %v3450 = vsel %vm3418, inf, %v3402
        %v3451 = vsel %vm3419, inf, %v3403
        %v3452 = vsel %vm879, %v3448, inf
        %3453 = vmin.xlane.f32.xlu0 %v3452
        %v3454 = vpop.xlane.xlu0 %3453
        %v3455 = vsel %vm879, %v3449, inf
        %3456 = vmin.xlane.f32.xlu0 %v3455
        %v3457 = vpop.xlane.xlu0 %3456
        %v3458 = vsel %vm879, %v3450, inf
        %3459 = vmin.xlane.f32.xlu0 %v3458
        %v3460 = vpop.xlane.xlu0 %3459
        %v3461 = vsel %vm879, %v3451, inf
        %3462 = vmin.xlane.f32.xlu0 %v3461
        %v3463 = vpop.xlane.xlu0 %3462
        %vm3464 = vcmp.le.f32.partialorder %v3448, %v3454
        %vm3465 = vcmp.le.f32.partialorder %v3449, %v3457
        %vm3466 = vcmp.le.f32.partialorder %v3450, %v3460
        %vm3467 = vcmp.le.f32.partialorder %v3451, %v3463
        %v3468 = vsel %vm3464, %v496, 32.0
        %v3469 = vsel %vm3465, %v496, 32.0
        %v3470 = vsel %vm3466, %v496, 32.0
        %v3471 = vsel %vm3467, %v496, 32.0
        %v3472 = vsel %vm879, %v3468, inf
        %3473 = vmin.xlane.f32.xlu0 %v3472
        %v3474 = vpop.xlane.xlu0 %3473
        %v3475 = vsel %vm879, %v3469, inf
        %3476 = vmin.xlane.f32.xlu0 %v3475
        %v3477 = vpop.xlane.xlu0 %3476
        %v3478 = vsel %vm879, %v3470, inf
        %3479 = vmin.xlane.f32.xlu0 %v3478
        %v3480 = vpop.xlane.xlu0 %3479
        %v3481 = vsel %vm879, %v3471, inf
        %3482 = vmin.xlane.f32.xlu0 %v3481
        %v3483 = vpop.xlane.xlu0 %3482
        %vm3484 = vcmp.eq.f32.partialorder %v496, %v3474
        %vm3485 = vcmp.eq.f32.partialorder %v496, %v3477
        %vm3486 = vcmp.eq.f32.partialorder %v496, %v3480
        %vm3487 = vcmp.eq.f32.partialorder %v496, %v3483
        %v3488 = vsel %vm3484, 1, 0
        %v3489 = vsel %vm3485, 1, 0
        %v3490 = vsel %vm3486, 1, 0
        %v3491 = vsel %vm3487, 1, 0
        %v3492 = vcvt.s32.f32 %v3488
        %v3493 = vcvt.s32.f32 %v3489
        %v3494 = vcvt.s32.f32 %v3490
        %v3495 = vcvt.s32.f32 %v3491
        %v3497 = vsel %vm879, %v3156, 0
        %v3500 = vsel %vm879, %v3157, 0
        %v3503 = vsel %vm879, %v3158, 0
        %v3506 = vsel %vm879, %v3159, 0
        %v3509 = vsel %vm879, %v3204, 0
        %v3512 = vsel %vm879, %v3205, 0
        %v3515 = vsel %vm879, %v3206, 0
        %v3518 = vsel %vm879, %v3207, 0
        %v3521 = vsel %vm879, %v3252, 0
        %v3524 = vsel %vm879, %v3253, 0
        %v3527 = vsel %vm879, %v3254, 0
        %v3530 = vsel %vm879, %v3255, 0
        %v3533 = vsel %vm879, %v3300, 0
        %v3536 = vsel %vm879, %v3301, 0
        %v3539 = vsel %vm879, %v3302, 0
        %v3542 = vsel %vm879, %v3303, 0
        %v3545 = vsel %vm879, %v3348, 0
        %v3548 = vsel %vm879, %v3349, 0
        %v3551 = vsel %vm879, %v3350, 0
        %v3554 = vsel %vm879, %v3351, 0
        %v3557 = vsel %vm879, %v3396, 0
        %v3560 = vsel %vm879, %v3397, 0
        %v3563 = vsel %vm879, %v3398, 0
        %v3566 = vsel %vm879, %v3399, 0
        %v3569 = vsel %vm879, %v3444, 0
        %v3572 = vsel %vm879, %v3445, 0
        %v3575 = vsel %vm879, %v3446, 0
        %v3578 = vsel %vm879, %v3447, 0
        %v3581 = vsel %vm879, %v3492, 0
        %v3584 = vsel %vm879, %v3493, 0
        %v3587 = vsel %vm879, %v3494, 0
        %v3590 = vsel %vm879, %v3495, 0
        %3592 = vmatprep.subr.mxu0 0.0
        %3593 = vmatpush1.msra.mxu0 0.0
        %3594 = vmatprep.subr.mxu0 0.0
        %3595 = vmatpush1.msra.mxu0 0.0
        %3596 = vmatprep.subr.mxu0 0.0
        %3597 = vmatpush1.msra.mxu0 0.0
        %3598 = vmatprep.subr.mxu0 0.0
        %3599 = vmatpush1.msra.mxu0 0.0
        %3600 = vmatprep.subr.mxu0 0.0
        %3601 = vmatpush1.msra.mxu0 0.0
        %3602 = vmatprep.subr.mxu0 0.0
        %3603 = vmatpush1.msra.mxu0 0.0
        %3604 = vmatprep.subr.mxu0 0.0
        %3605 = vmatpush1.msra.mxu0 0.0
        %3606 = vmatprep.subr.mxu0 0.0
        %3607 = vmatpush1.msra.mxu0 0.0
        %3608 = vmatprep.subr.mxu0 0.0
        %3609 = vmatpush1.msra.mxu0 0.0
        %3610 = vmatprep.subr.mxu0 0.0
        %3611 = vmatpush1.msra.mxu0 0.0
        %3612 = vmatprep.subr.mxu0 0.0
        %3613 = vmatpush1.msra.mxu0 0.0
        %3614 = vmatprep.subr.mxu0 0.0
        %3615 = vmatpush1.msra.mxu0 0.0
        %3616 = vmatprep.subr.mxu0 0.0
        %3617 = vmatpush1.msra.mxu0 %v3113
        %3618 = vmatprep.subr.mxu0 0.0
        %3619 = vmatpush1.msra.mxu0 %v3108
        %3620 = vmatprep.subr.mxu0 0.0
        %3621 = vmatpush1.msra.mxu0 %v3103
        %3622 = vmatprep.subr.mxu0 0.0
        %3623 = vmatpush1.msra.mxu0 %v3098
        %3624 = vmatprep.subr.mxu0 0.0
        %3625 = vmatpush2.msra.mxu0 0.0
        %3626 = vmatprep.subr.mxu0 0.0
        %3627 = vmatpush2.msra.mxu0 0.0
        %3628 = vmatprep.subr.mxu0 0.0
        %3629 = vmatpush2.msra.mxu0 0.0
        %3630 = vmatprep.subr.mxu0 0.0
        %3631 = vmatpush2.msra.mxu0 0.0
        %3632 = vmatprep.subr.mxu0 0.0
        %3633 = vmatpush2.msra.mxu0 0.0
        %3634 = vmatprep.subr.mxu0 0.0
        %3635 = vmatpush2.msra.mxu0 0.0
        %3636 = vmatprep.subr.mxu0 0.0
        %3637 = vmatpush2.msra.mxu0 0.0
        %3638 = vmatprep.subr.mxu0 0.0
        %3639 = vmatpush2.msra.mxu0 0.0
        %3640 = vmatprep.subr.mxu0 0.0
        %3641 = vmatpush2.msra.mxu0 0.0
        %3642 = vmatprep.subr.mxu0 0.0
        %3643 = vmatpush2.msra.mxu0 0.0
        %3644 = vmatprep.subr.mxu0 0.0
        %3645 = vmatpush2.msra.mxu0 0.0
        %3646 = vmatprep.subr.mxu0 0.0
        %3647 = vmatpush2.msra.mxu0 0.0
        %3648 = vmatprep.subr.mxu0 0.0
        %3649 = vmatpush2.msra.mxu0 0.0
        %3650 = vmatprep.subr.mxu0 0.0
        %3651 = vmatpush2.msra.mxu0 0.0
        %3652 = vmatprep.subr.mxu0 0.0
        %3653 = vmatpush2.msra.mxu0 0.0
        %3654 = vmatprep.subr.mxu0 0.0
        %3655 = vmatpush2.msra.mxu0 0.0
        %3656 = vmatprep.mubr.f32.mxu0 0.0
        %3657 = vmatmul.mubr.f32.gmra.mxu0 %v3497
        %v3658 = vpop.f32.mrf.mxu0
        %v3659 = vadd.f32 0.0, %v3658
        %v3660 = vpop.f32.mrf.mxu0
        %3661 = vmatprep.mubr.f32.mxu0 0.0
        %3662 = vmatmul.mubr.f32.gmra.mxu0 %v3500
        %v3663 = vpop.f32.mrf.mxu0
        %v3664 = vadd.f32 0.0, %v3663
        %v3665 = vpop.f32.mrf.mxu0
        %3666 = vmatprep.mubr.f32.mxu0 0.0
        %3667 = vmatmul.mubr.f32.gmra.mxu0 %v3503
        %v3668 = vpop.f32.mrf.mxu0
        %v3669 = vadd.f32 0.0, %v3668
        %v3670 = vpop.f32.mrf.mxu0
        %3671 = vmatprep.mubr.f32.mxu0 0.0
        %3672 = vmatmul.mubr.f32.gmra.mxu0 %v3506
        %v3673 = vpop.f32.mrf.mxu0
        %v3674 = vadd.f32 0.0, %v3673
        %v3675 = vpop.f32.mrf.mxu0
        %3676 = vmatprep.mubr.f32.mxu0 0.0
        %3677 = vmatmul.mubr.f32.gmra.mxu0 %v3509
        %v3678 = vpop.f32.mrf.mxu0
        %v3679 = vadd.f32 0.0, %v3678
        %v3680 = vpop.f32.mrf.mxu0
        %3681 = vmatprep.mubr.f32.mxu0 0.0
        %3682 = vmatmul.mubr.f32.gmra.mxu0 %v3512
        %v3683 = vpop.f32.mrf.mxu0
        %v3684 = vadd.f32 0.0, %v3683
        %v3685 = vpop.f32.mrf.mxu0
        %3686 = vmatprep.mubr.f32.mxu0 0.0
        %3687 = vmatmul.mubr.f32.gmra.mxu0 %v3515
        %v3688 = vpop.f32.mrf.mxu0
        %v3689 = vadd.f32 0.0, %v3688
        %v3690 = vpop.f32.mrf.mxu0
        %3691 = vmatprep.mubr.f32.mxu0 0.0
        %3692 = vmatmul.mubr.f32.gmra.mxu0 %v3518
        %v3693 = vpop.f32.mrf.mxu0
        %v3694 = vadd.f32 0.0, %v3693
        %v3695 = vpop.f32.mrf.mxu0
        %3696 = vmatprep.mubr.f32.mxu0 0.0
        %3697 = vmatmul.mubr.f32.gmra.mxu0 %v3521
        %v3698 = vpop.f32.mrf.mxu0
        %v3699 = vadd.f32 0.0, %v3698
        %v3700 = vpop.f32.mrf.mxu0
        %3701 = vmatprep.mubr.f32.mxu0 0.0
        %3702 = vmatmul.mubr.f32.gmra.mxu0 %v3524
        %v3703 = vpop.f32.mrf.mxu0
        %v3704 = vadd.f32 0.0, %v3703
        %v3705 = vpop.f32.mrf.mxu0
        %3706 = vmatprep.mubr.f32.mxu0 0.0
        %3707 = vmatmul.mubr.f32.gmra.mxu0 %v3527
        %v3708 = vpop.f32.mrf.mxu0
        %v3709 = vadd.f32 0.0, %v3708
        %v3710 = vpop.f32.mrf.mxu0
        %3711 = vmatprep.mubr.f32.mxu0 0.0
        %3712 = vmatmul.mubr.f32.gmra.mxu0 %v3530
        %v3713 = vpop.f32.mrf.mxu0
        %v3714 = vadd.f32 0.0, %v3713
        %v3715 = vpop.f32.mrf.mxu0
        %3716 = vmatprep.mubr.f32.mxu0 0.0
        %3717 = vmatmul.mubr.f32.gmra.mxu0 %v3533
        %v3718 = vpop.f32.mrf.mxu0
        %v3719 = vadd.f32 0.0, %v3718
        %v3720 = vpop.f32.mrf.mxu0
        %3721 = vmatprep.mubr.f32.mxu0 0.0
        %3722 = vmatmul.mubr.f32.gmra.mxu0 %v3536
        %v3723 = vpop.f32.mrf.mxu0
        %v3724 = vadd.f32 0.0, %v3723
        %v3725 = vpop.f32.mrf.mxu0
        %3726 = vmatprep.mubr.f32.mxu0 0.0
        %3727 = vmatmul.mubr.f32.gmra.mxu0 %v3539
        %v3728 = vpop.f32.mrf.mxu0
        %v3729 = vadd.f32 0.0, %v3728
        %v3730 = vpop.f32.mrf.mxu0
        %3731 = vmatprep.mubr.f32.mxu0 0.0
        %3732 = vmatmul.mubr.f32.gmra.mxu0 %v3542
        %v3733 = vpop.f32.mrf.mxu0
        %v3734 = vadd.f32 0.0, %v3733
        %v3735 = vpop.f32.mrf.mxu0
        %3736 = vmatprep.mubr.f32.mxu0 0.0
        %3737 = vmatmul.mubr.f32.gmra.mxu0 %v3545
        %v3738 = vpop.f32.mrf.mxu0
        %v3739 = vadd.f32 0.0, %v3738
        %v3740 = vpop.f32.mrf.mxu0
        %3741 = vmatprep.mubr.f32.mxu0 0.0
        %3742 = vmatmul.mubr.f32.gmra.mxu0 %v3548
        %v3743 = vpop.f32.mrf.mxu0
        %v3744 = vadd.f32 0.0, %v3743
        %v3745 = vpop.f32.mrf.mxu0
        %3746 = vmatprep.mubr.f32.mxu0 0.0
        %3747 = vmatmul.mubr.f32.gmra.mxu0 %v3551
        %v3748 = vpop.f32.mrf.mxu0
        %v3749 = vadd.f32 0.0, %v3748
        %v3750 = vpop.f32.mrf.mxu0
        %3751 = vmatprep.mubr.f32.mxu0 0.0
        %3752 = vmatmul.mubr.f32.gmra.mxu0 %v3554
        %v3753 = vpop.f32.mrf.mxu0
        %v3754 = vadd.f32 0.0, %v3753
        %v3755 = vpop.f32.mrf.mxu0
        %3756 = vmatprep.mubr.f32.mxu0 0.0
        %3757 = vmatmul.mubr.f32.gmra.mxu0 %v3557
        %v3758 = vpop.f32.mrf.mxu0
        %v3759 = vadd.f32 0.0, %v3758
        %v3760 = vpop.f32.mrf.mxu0
        %3761 = vmatprep.mubr.f32.mxu0 0.0
        %3762 = vmatmul.mubr.f32.gmra.mxu0 %v3560
        %v3763 = vpop.f32.mrf.mxu0
        %v3764 = vadd.f32 0.0, %v3763
        %v3765 = vpop.f32.mrf.mxu0
        %3766 = vmatprep.mubr.f32.mxu0 0.0
        %3767 = vmatmul.mubr.f32.gmra.mxu0 %v3563
        %v3768 = vpop.f32.mrf.mxu0
        %v3769 = vadd.f32 0.0, %v3768
        %v3770 = vpop.f32.mrf.mxu0
        %3771 = vmatprep.mubr.f32.mxu0 0.0
        %3772 = vmatmul.mubr.f32.gmra.mxu0 %v3566
        %v3773 = vpop.f32.mrf.mxu0
        %v3774 = vadd.f32 0.0, %v3773
        %v3775 = vpop.f32.mrf.mxu0
        %3776 = vmatprep.mubr.f32.mxu0 0.0
        %3777 = vmatmul.mubr.f32.gmra.mxu0 %v3569
        %v3778 = vpop.f32.mrf.mxu0
        %v3779 = vadd.f32 0.0, %v3778
        %v3780 = vpop.f32.mrf.mxu0
        %3781 = vmatprep.mubr.f32.mxu0 0.0
        %3782 = vmatmul.mubr.f32.gmra.mxu0 %v3572
        %v3783 = vpop.f32.mrf.mxu0
        %v3784 = vadd.f32 0.0, %v3783
        %v3785 = vpop.f32.mrf.mxu0
        %3786 = vmatprep.mubr.f32.mxu0 0.0
        %3787 = vmatmul.mubr.f32.gmra.mxu0 %v3575
        %v3788 = vpop.f32.mrf.mxu0
        %v3789 = vadd.f32 0.0, %v3788
        %v3790 = vpop.f32.mrf.mxu0
        %3791 = vmatprep.mubr.f32.mxu0 0.0
        %3792 = vmatmul.mubr.f32.gmra.mxu0 %v3578
        %v3793 = vpop.f32.mrf.mxu0
        %v3794 = vadd.f32 0.0, %v3793
        %v3795 = vpop.f32.mrf.mxu0
        %3796 = vmatprep.mubr.f32.mxu0 0.0
        %3797 = vmatmul.mubr.f32.gmra.mxu0 %v3581
        %v3798 = vpop.f32.mrf.mxu0
        %v3799 = vadd.f32 0.0, %v3798
        %v3800 = vpop.f32.mrf.mxu0
        %3801 = vmatprep.mubr.f32.mxu0 0.0
        %3802 = vmatmul.mubr.f32.gmra.mxu0 %v3584
        %v3803 = vpop.f32.mrf.mxu0
        %v3804 = vadd.f32 0.0, %v3803
        %v3805 = vpop.f32.mrf.mxu0
        %3806 = vmatprep.mubr.f32.mxu0 0.0
        %3807 = vmatmul.mubr.f32.gmra.mxu0 %v3587
        %v3808 = vpop.f32.mrf.mxu0
        %v3809 = vadd.f32 0.0, %v3808
        %v3810 = vpop.f32.mrf.mxu0
        %3811 = vmatprep.mubr.f32.mxu0 0.0
        %3812 = vmatmul.mubr.f32.gmra.mxu0 %v3590
        %v3813 = vpop.f32.mrf.mxu0
        %v3814 = vadd.f32 0.0, %v3813
        %v3815 = vpop.f32.mrf.mxu0
        %3816 = vdwg.mxu0
        %v3817 = vmax.f32 %v3659, %v3679
        %v3818 = vmax.f32 %v3664, %v3684
        %v3819 = vmax.f32 %v3669, %v3689
        %v3820 = vmax.f32 %v3674, %v3694
        %v3821 = vmax.f32 %v3817, %v3699
        %v3822 = vmax.f32 %v3818, %v3704
        %v3823 = vmax.f32 %v3819, %v3709
        %v3824 = vmax.f32 %v3820, %v3714
        %v3825 = vmax.f32 %v3821, %v3719
        %v3826 = vmax.f32 %v3822, %v3724
        %v3827 = vmax.f32 %v3823, %v3729
        %v3828 = vmax.f32 %v3824, %v3734
        %v3829 = vmax.f32 %v3825, %v3739
        %v3830 = vmax.f32 %v3826, %v3744
        %v3831 = vmax.f32 %v3827, %v3749
        %v3832 = vmax.f32 %v3828, %v3754
        %v3833 = vmax.f32 %v3829, %v3759
        %v3834 = vmax.f32 %v3830, %v3764
        %v3835 = vmax.f32 %v3831, %v3769
        %v3836 = vmax.f32 %v3832, %v3774
        %v3837 = vmax.f32 %v3833, %v3779
        %v3838 = vmax.f32 %v3834, %v3784
        %v3839 = vmax.f32 %v3835, %v3789
        %v3840 = vmax.f32 %v3836, %v3794
        %v3841 = vmax.f32 %v3837, %v3799
        %v3842 = vmax.f32 %v3838, %v3804
        %v3843 = vmax.f32 %v3839, %v3809
        %v3844 = vmax.f32 %v3840, %v3814
        %v3845 = vadd.f32 %v3013, %v3841
        %v3846 = vadd.f32 %v3018, %v3842
        %v3847 = vadd.f32 %v3023, %v3843
        %v3848 = vadd.f32 %v3028, %v3844
        %v3849 = vmax.f32 %v3845, 0.0
        %v3850 = vmax.f32 %v3846, 0.0
        %v3851 = vmax.f32 %v3847, 0.0
        %v3852 = vmax.f32 %v3848, 0.0
        %3853 = vmatprep.subr.mxu0 0.0
        %3854 = vmatpush1.msra.mxu0 0.0
        %3855 = vmatprep.subr.mxu0 0.0
        %3856 = vmatpush1.msra.mxu0 0.0
        %3857 = vmatprep.subr.mxu0 0.0
        %3858 = vmatpush1.msra.mxu0 0.0
        %3859 = vmatprep.subr.mxu0 0.0
        %3860 = vmatpush1.msra.mxu0 0.0
        %3861 = vmatprep.subr.mxu0 0.0
        %3862 = vmatpush1.msra.mxu0 0.0
        %3863 = vmatprep.subr.mxu0 0.0
        %3864 = vmatpush1.msra.mxu0 0.0
        %3865 = vmatprep.subr.mxu0 0.0
        %3866 = vmatpush1.msra.mxu0 0.0
        %3867 = vmatprep.subr.mxu0 0.0
        %3868 = vmatpush1.msra.mxu0 0.0
        %3869 = vmatprep.subr.mxu0 0.0
        %3870 = vmatpush1.msra.mxu0 0.0
        %3871 = vmatprep.subr.mxu0 0.0
        %3872 = vmatpush1.msra.mxu0 0.0
        %3873 = vmatprep.subr.mxu0 0.0
        %3874 = vmatpush1.msra.mxu0 0.0
        %3875 = vmatprep.subr.mxu0 0.0
        %3876 = vmatpush1.msra.mxu0 0.0
        %3877 = vmatprep.subr.mxu0 0.0
        %3878 = vmatpush1.msra.mxu0 %v3852
        %3879 = vmatprep.subr.mxu0 0.0
        %3880 = vmatpush1.msra.mxu0 %v3851
        %3881 = vmatprep.subr.mxu0 0.0
        %3882 = vmatpush1.msra.mxu0 %v3850
        %3883 = vmatprep.subr.mxu0 0.0
        %3884 = vmatpush1.msra.mxu0 %v3849
        %3885 = vmatprep.subr.mxu0 0.0
        %3886 = vmatpush2.msra.mxu0 0.0
        %3887 = vmatprep.subr.mxu0 0.0
        %3888 = vmatpush2.msra.mxu0 0.0
        %3889 = vmatprep.subr.mxu0 0.0
        %3890 = vmatpush2.msra.mxu0 0.0
        %3891 = vmatprep.subr.mxu0 0.0
        %3892 = vmatpush2.msra.mxu0 0.0
        %3893 = vmatprep.subr.mxu0 0.0
        %3894 = vmatpush2.msra.mxu0 0.0
        %3895 = vmatprep.subr.mxu0 0.0
        %3896 = vmatpush2.msra.mxu0 0.0
        %3897 = vmatprep.subr.mxu0 0.0
        %3898 = vmatpush2.msra.mxu0 0.0
        %3899 = vmatprep.subr.mxu0 0.0
        %3900 = vmatpush2.msra.mxu0 0.0
        %3901 = vmatprep.subr.mxu0 0.0
        %3902 = vmatpush2.msra.mxu0 0.0
        %3903 = vmatprep.subr.mxu0 0.0
        %3904 = vmatpush2.msra.mxu0 0.0
        %3905 = vmatprep.subr.mxu0 0.0
        %3906 = vmatpush2.msra.mxu0 0.0
        %3907 = vmatprep.subr.mxu0 0.0
        %3908 = vmatpush2.msra.mxu0 0.0
        %3909 = vmatprep.subr.mxu0 0.0
        %3910 = vmatpush2.msra.mxu0 0.0
        %3911 = vmatprep.subr.mxu0 0.0
        %3912 = vmatpush2.msra.mxu0 0.0
        %3913 = vmatprep.subr.mxu0 0.0
        %3914 = vmatpush2.msra.mxu0 0.0
        %3915 = vmatprep.subr.mxu0 0.0
        %3916 = vmatpush2.msra.mxu0 0.0
        %3917 = vmatprep.mubr.f32.mxu0 0.0
        %3918 = vmatmul.mubr.f32.gmra.mxu0 %v1727
        %v3919 = vpop.f32.mrf.mxu0
        %v3920 = vadd.f32 0.0, %v3919
        %v3921 = vpop.f32.mrf.mxu0
        %3922 = vdwg.mxu0
        %v3923 = vmul.f32 %v3920, 0.03125
        %v3924 = vld [vmem:[%s10] sm:$0xff]
        %v3925 = vld [vmem:[%s10 + $0x8] sm:$0xff]
        %v3926 = vld [vmem:[%s10 + $0x10] sm:$0xff]
        %v3927 = vld [vmem:[%s10 + $0x18] sm:$0xff]
        %v3928 = vld [vmem:[%s11] sm:$0x1]
        %v3930 = vsel %vm879, %v3923, 0
        %3932 = vmatprep.subr.mxu0 0.0
        %3933 = vmatpush1.msra.mxu0 0.0
        %3934 = vmatprep.subr.mxu0 0.0
        %3935 = vmatpush1.msra.mxu0 0.0
        %3936 = vmatprep.subr.mxu0 0.0
        %3937 = vmatpush1.msra.mxu0 0.0
        %3938 = vmatprep.subr.mxu0 0.0
        %3939 = vmatpush1.msra.mxu0 0.0
        %3940 = vmatprep.subr.mxu0 0.0
        %3941 = vmatpush1.msra.mxu0 0.0
        %3942 = vmatprep.subr.mxu0 0.0
        %3943 = vmatpush1.msra.mxu0 0.0
        %3944 = vmatprep.subr.mxu0 0.0
        %3945 = vmatpush1.msra.mxu0 0.0
        %3946 = vmatprep.subr.mxu0 0.0
        %3947 = vmatpush1.msra.mxu0 0.0
        %3948 = vmatprep.subr.mxu0 0.0
        %3949 = vmatpush1.msra.mxu0 0.0
        %3950 = vmatprep.subr.mxu0 0.0
        %3951 = vmatpush1.msra.mxu0 0.0
        %3952 = vmatprep.subr.mxu0 0.0
        %3953 = vmatpush1.msra.mxu0 0.0
        %3954 = vmatprep.subr.mxu0 0.0
        %3955 = vmatpush1.msra.mxu0 0.0
        %3956 = vmatprep.subr.mxu0 0.0
        %3957 = vmatpush1.msra.mxu0 %v3927
        %3958 = vmatprep.subr.mxu0 0.0
        %3959 = vmatpush1.msra.mxu0 %v3926
        %3960 = vmatprep.subr.mxu0 0.0
        %3961 = vmatpush1.msra.mxu0 %v3925
        %3962 = vmatprep.subr.mxu0 0.0
        %3963 = vmatpush1.msra.mxu0 %v3924
        %3964 = vmatprep.subr.mxu0 0.0
        %3965 = vmatpush2.msra.mxu0 0.0
        %3966 = vmatprep.subr.mxu0 0.0
        %3967 = vmatpush2.msra.mxu0 0.0
        %3968 = vmatprep.subr.mxu0 0.0
        %3969 = vmatpush2.msra.mxu0 0.0
        %3970 = vmatprep.subr.mxu0 0.0
        %3971 = vmatpush2.msra.mxu0 0.0
        %3972 = vmatprep.subr.mxu0 0.0
        %3973 = vmatpush2.msra.mxu0 0.0
        %3974 = vmatprep.subr.mxu0 0.0
        %3975 = vmatpush2.msra.mxu0 0.0
        %3976 = vmatprep.subr.mxu0 0.0
        %3977 = vmatpush2.msra.mxu0 0.0
        %3978 = vmatprep.subr.mxu0 0.0
        %3979 = vmatpush2.msra.mxu0 0.0
        %3980 = vmatprep.subr.mxu0 0.0
        %3981 = vmatpush2.msra.mxu0 0.0
        %3982 = vmatprep.subr.mxu0 0.0
        %3983 = vmatpush2.msra.mxu0 0.0
        %3984 = vmatprep.subr.mxu0 0.0
        %3985 = vmatpush2.msra.mxu0 0.0
        %3986 = vmatprep.subr.mxu0 0.0
        %3987 = vmatpush2.msra.mxu0 0.0
        %3988 = vmatprep.subr.mxu0 0.0
        %3989 = vmatpush2.msra.mxu0 0.0
        %3990 = vmatprep.subr.mxu0 0.0
        %3991 = vmatpush2.msra.mxu0 0.0
        %3992 = vmatprep.subr.mxu0 0.0
        %3993 = vmatpush2.msra.mxu0 0.0
        %3994 = vmatprep.subr.mxu0 0.0
        %3995 = vmatpush2.msra.mxu0 0.0
        %3996 = vmatprep.mubr.f32.mxu0 0.0
        %3997 = vmatmul.mubr.f32.gmra.mxu0 %v3930
        %v3998 = vpop.f32.mrf.mxu0
        %v3999 = vadd.f32 %v3928, %v3998
        %v4000 = vpop.f32.mrf.mxu0
        %4001 = vdwg.mxu0
        %v4002 = vmax.f32 %v3999, 0.0
        %v4003 = vld [vmem:[%s12] sm:$0xff]
        %v4004 = vld [vmem:[%s12 + $0x8] sm:$0xff]
        %v4005 = vld [vmem:[%s12 + $0x10] sm:$0xff]
        %v4006 = vld [vmem:[%s12 + $0x18] sm:$0xff]
        %v4007 = vld [vmem:[%s13] sm:$0x1]
        %v4009 = vsel %vm879, %v4002, 0
        %4011 = vmatprep.subr.mxu0 0.0
        %4012 = vmatpush1.msra.mxu0 0.0
        %4013 = vmatprep.subr.mxu0 0.0
        %4014 = vmatpush1.msra.mxu0 0.0
        %4015 = vmatprep.subr.mxu0 0.0
        %4016 = vmatpush1.msra.mxu0 0.0
        %4017 = vmatprep.subr.mxu0 0.0
        %4018 = vmatpush1.msra.mxu0 0.0
        %4019 = vmatprep.subr.mxu0 0.0
        %4020 = vmatpush1.msra.mxu0 0.0
        %4021 = vmatprep.subr.mxu0 0.0
        %4022 = vmatpush1.msra.mxu0 0.0
        %4023 = vmatprep.subr.mxu0 0.0
        %4024 = vmatpush1.msra.mxu0 0.0
        %4025 = vmatprep.subr.mxu0 0.0
        %4026 = vmatpush1.msra.mxu0 0.0
        %4027 = vmatprep.subr.mxu0 0.0
        %4028 = vmatpush1.msra.mxu0 0.0
        %4029 = vmatprep.subr.mxu0 0.0
        %4030 = vmatpush1.msra.mxu0 0.0
        %4031 = vmatprep.subr.mxu0 0.0
        %4032 = vmatpush1.msra.mxu0 0.0
        %4033 = vmatprep.subr.mxu0 0.0
        %4034 = vmatpush1.msra.mxu0 0.0
        %4035 = vmatprep.subr.mxu0 0.0
        %4036 = vmatpush1.msra.mxu0 %v4006
        %4037 = vmatprep.subr.mxu0 0.0
        %4038 = vmatpush1.msra.mxu0 %v4005
        %4039 = vmatprep.subr.mxu0 0.0
        %4040 = vmatpush1.msra.mxu0 %v4004
        %4041 = vmatprep.subr.mxu0 0.0
        %4042 = vmatpush1.msra.mxu0 %v4003
        %4043 = vmatprep.subr.mxu0 0.0
        %4044 = vmatpush2.msra.mxu0 0.0
        %4045 = vmatprep.subr.mxu0 0.0
        %4046 = vmatpush2.msra.mxu0 0.0
        %4047 = vmatprep.subr.mxu0 0.0
        %4048 = vmatpush2.msra.mxu0 0.0
        %4049 = vmatprep.subr.mxu0 0.0
        %4050 = vmatpush2.msra.mxu0 0.0
        %4051 = vmatprep.subr.mxu0 0.0
        %4052 = vmatpush2.msra.mxu0 0.0
        %4053 = vmatprep.subr.mxu0 0.0
        %4054 = vmatpush2.msra.mxu0 0.0
        %4055 = vmatprep.subr.mxu0 0.0
        %4056 = vmatpush2.msra.mxu0 0.0
        %4057 = vmatprep.subr.mxu0 0.0
        %4058 = vmatpush2.msra.mxu0 0.0
        %4059 = vmatprep.subr.mxu0 0.0
        %4060 = vmatpush2.msra.mxu0 0.0
        %4061 = vmatprep.subr.mxu0 0.0
        %4062 = vmatpush2.msra.mxu0 0.0
        %4063 = vmatprep.subr.mxu0 0.0
        %4064 = vmatpush2.msra.mxu0 0.0
        %4065 = vmatprep.subr.mxu0 0.0
        %4066 = vmatpush2.msra.mxu0 0.0
        %4067 = vmatprep.subr.mxu0 0.0
        %4068 = vmatpush2.msra.mxu0 0.0
        %4069 = vmatprep.subr.mxu0 0.0
        %4070 = vmatpush2.msra.mxu0 0.0
        %4071 = vmatprep.subr.mxu0 0.0
        %4072 = vmatpush2.msra.mxu0 0.0
        %4073 = vmatprep.subr.mxu0 0.0
        %4074 = vmatpush2.msra.mxu0 0.0
        %4075 = vmatprep.mubr.f32.mxu0 0.0
        %4076 = vmatmul.mubr.f32.gmra.mxu0 %v4009
        %v4077 = vpop.f32.mrf.mxu0
        %v4078 = vadd.f32 %v4007, %v4077
        %v4079 = vpop.f32.mrf.mxu0
        %4080 = vdwg.mxu0
        %v4081 = vlaneseq
        %v4082 = vshrl.u32 %v4081, 7
        %v4083 = vsub.s32 0, %v4082
        %v4084 = vrot.slane %v4078, %v4083
        %4085 = vst [vmem:[%s493] sm:$0xff] %v4084
        %p4086 = scmp.lt.s32.totalorder %s27, 1
        %s4087 = scalar_select %p4086, %s27, 1
        %s4088 = smul.addr %s4087, 8
        %s4089 = scalar_lea.vmem %s14, %s4088
        // Predicated region
        $region85: #{dgcnn_forward.1} parent=75 // pred_check
          %p4090 = pneg %p344
        $region86: #{dgcnn_forward.1} parent=75 // pred_check_branch
          %4092 = sbr.rel (%p4090) target = $region88
        $region87: #{dgcnn_forward.1} parent=75 // pred_region
          _
        $region88: #{dgcnn_forward.1} parent=75 // pred_fallthru
          _
      $region76: #{dgcnn_forward.1} parent=5 // pred_fallthru
        _
      %p4093 = scmp.le.s32.totalorder 2, %s22
      // Predicated region
      $region89: #{dgcnn_forward.1} parent=5 // pred_check
        %p4094 = pneg %p4093
      $region90: #{dgcnn_forward.1} parent=5 // pred_check_branch
        %4096 = sbr.rel (%p4094) target = $region92
      $region91: #{dgcnn_forward.1} parent=5 // pred_region
        %s4097 = ssub.s32 %s22, 2
        // Predicated region
        $region93: #{dgcnn_forward.1} parent=91 // pred_check
          %p4098 = pneg %p350
        $region94: #{dgcnn_forward.1} parent=91 // pred_check_branch
          %4100 = sbr.rel (%p4098) target = $region96
        $region95: #{dgcnn_forward.1} parent=91 // pred_region
          %p4101 = scmp.lt.s32.totalorder %s28, 1
          %s4102 = scalar_select %p4101, %s28, 1
          %s4103 = smul.addr %s4102, 8
          %s4104 = scalar_lea.vmem %s14, %s4103
        $region96: #{dgcnn_forward.1} parent=91 // pred_fallthru
          _
      $region92: #{dgcnn_forward.1} parent=5 // pred_fallthru
        _
    $region6: #{dgcnn_forward.1} parent=1 // loop_footer
      %s26 = sadd.s32 1, %s22
    $region7: #{dgcnn_forward.1} parent=1 // loop_footer_branch
      %21 = sbr.rel target = $region3
    $region8: #{dgcnn_forward.1} parent=1 // loop_exit
      _
    %4105 = vsyncpa [#allocation3], 1
    %s4106 = scalar_lea.sflag [#allocation3], 1
    %4107 = vsyncpa %s4106, 1
    %4108 = vsyncpa [#allocation5], 1

</llo_original>
